<compile_context>
chip_gen: v6e
topology: v6e:2x2x1
jax: 0.10.0
libtpu: 0.0.40
codegen_flags: <defaults>
</compile_context>

<pallas_src>
import functools

import jax
import jax.numpy as jnp
from jax import lax
from jax.experimental import pallas as pl
from jax.experimental.pallas import tpu as pltpu

N_PAD = 8          # padded particle count (sublane friendly)
F_PAD = 8          # padded per-particle state feature count
F_OUT = 9          # 7 state fields + Hamiltonian + GPE
F_STAGE = 8        # staged features per step (mass row is hoisted)
DT = 0.02          # timestep of the original worlds.World(..., timestep=0.02)
MAX_CHUNK = 512    # steps per grid iteration (VMEM staging ~2 MiB, safe on v5e/v6e/v7x)
UNROLL = 8         # inner step-loop unroll factor


def _round_up(x, m):
    return ((x + m - 1) // m) * m


def _gravity_chunk_kernel(g_ref, state_hbm, hist_ref,
                          state_vmem, hstage, init_sem,
                          *, chunk, dt, n_real):
    """One chunk of `chunk` timesteps; particle state persists in state_vmem.

    state_vmem layout: (F_PAD, N_PAD) rows = [x, y, vx, vy, ax, ay, m, pad],
    particles on lanes.  hstage layout: (F_STAGE, chunk, N_PAD), time on
    sublanes; transposed into the lane-dense hist block at the end of the
    chunk.  hist block layout: (F_OUT, N_PAD, chunk), time on lanes.
    """
    # --- one-time init: DMA the (8,8) initial state HBM -> VMEM ------------
    @pl.when(pl.program_id(0) == 0)
    def _():
        cp = pltpu.make_async_copy(state_hbm, state_vmem, init_sem.at[0])
        cp.start()
        cp.wait()

    G = g_ref[0]                                     # scalar (SMEM, prefetched)

    # --- per-chunk hoisted invariants (G folded in) -------------------------
    m_row = state_vmem[6:7, :]                       # (1, N_PAD) masses (0 for pads)
    m_col = jnp.transpose(m_row)                     # (N_PAD, 1)
    Gm_col = G * m_col                               # G * m_j  (source j on sublanes)
    mmG = (-0.5 * G) * (m_col * m_row)               # -0.5 * G * m_i * m_j

    row_j = lax.broadcasted_iota(jnp.int32, (N_PAD, N_PAD), 0)   # source j
    col_i = lax.broadcasted_iota(jnp.int32, (N_PAD, N_PAD), 1)   # target i
    valid = jnp.logical_and(
        row_j != col_i,
        jnp.logical_and(row_j < n_real, col_i < n_real))
    mask_f = valid.astype(jnp.float32)               # zeroes diag + pad rows/cols
    bias = 1.0 - mask_f                              # keeps rsqrt finite on masked pairs

    # Mass history row is loop-invariant: write it once per chunk.
    hist_ref[6, :, :] = jnp.broadcast_to(m_col, (N_PAD, chunk))

    px0 = state_vmem[0:1, :]
    py0 = state_vmem[1:2, :]
    vx0 = state_vmem[2:3, :]
    vy0 = state_vmem[3:4, :]

    def body(t, carry):
        px, py, vx, vy = carry                       # each (1, N_PAD)
        dX = jnp.transpose(px) - px                  # [j, i] = x_j - x_i
        dY = jnp.transpose(py) - py
        r2 = dX * dX + dY * dY
        inv_r = mask_f * lax.rsqrt(r2 + bias)        # masked pairs -> exactly 0
        inv_r3 = inv_r * inv_r * inv_r
        w = Gm_col * inv_r3                          # G * m_j / r^3
        ax = jnp.sum(w * dX, axis=0, keepdims=True)  # (1, N_PAD)
        ay = jnp.sum(w * dY, axis=0, keepdims=True)
        gpe = jnp.sum(mmG * inv_r, keepdims=True)                     # (1, 1)
        ke = 0.5 * jnp.sum(m_row * (vx * vx + vy * vy), keepdims=True)
        ham = ke + gpe

        # Stage pre-update state + current-step indicators; time on sublanes.
        hstage[0, pl.ds(t, 1), :] = px
        hstage[1, pl.ds(t, 1), :] = py
        hstage[2, pl.ds(t, 1), :] = vx
        hstage[3, pl.ds(t, 1), :] = vy
        hstage[4, pl.ds(t, 1), :] = ax
        hstage[5, pl.ds(t, 1), :] = ay
        hstage[6, pl.ds(t, 1), :] = jnp.broadcast_to(ham, (1, N_PAD))
        hstage[7, pl.ds(t, 1), :] = jnp.broadcast_to(gpe, (1, N_PAD))

        # TODO(synk): exact integrator of the external `worlds` library is
        # unknown; using semi-implicit (symplectic) Euler with dt=0.02.
        vx_n = vx + ax * dt
        vy_n = vy + ay * dt
        px_n = px + vx_n * dt
        py_n = py + vy_n * dt
        return px_n, py_n, vx_n, vy_n

    px_f, py_f, vx_f, vy_f = lax.fori_loop(
        0, chunk, body, (px0, py0, vx0, vy0), unroll=UNROLL)

    # hand the particle state to the next chunk
    state_vmem[0:1, :] = px_f
    state_vmem[1:2, :] = py_f
    state_vmem[2:3, :] = vx_f
    state_vmem[3:4, :] = vy_f

    # Transpose staged history (time-on-sublanes) into the lane-dense output
    # block (time-on-lanes), 128 timesteps per transpose to bound vreg pressure.
    tt = 128 if chunk % 128 == 0 else chunk
    for src, dst in ((0, 0), (1, 1), (2, 2), (3, 3), (4, 4), (5, 5), (6, 7), (7, 8)):
        for t0 in range(0, chunk, tt):
            hist_ref[dst, :, t0:t0 + tt] = jnp.transpose(
                hstage[src, t0:t0 + tt, :])


def run_sim_pallas(X, steps, G, *, max_chunk=MAX_CHUNK):
    """X: (N, >=7) f32.  Returns history (9, N, steps) f32 (feature-first)."""
    X = jnp.asarray(X, jnp.float32)
    n = X.shape[0]
    if n > N_PAD:
        raise ValueError(f"kernel supports at most {N_PAD} particles, got {n}")
    steps = int(steps)

    # Chunk selection: single near-exact chunk if steps fit, otherwise balanced
    # chunks that are multiples of 128 (lane alignment of the time-last block).
    if steps <= max_chunk:
        chunk = _round_up(steps, UNROLL)
        num_chunks = 1
    else:
        num_chunks = -(-steps // max_chunk)
        chunk = _round_up(-(-steps // num_chunks), 128)
        num_chunks = -(-steps // chunk)
    steps_padded = num_chunks * chunk

    # Initial state transposed to (F_PAD, N_PAD) = feature rows, particle lanes.
    state0 = jnp.zeros((F_PAD, N_PAD), jnp.float32).at[:7, :n].set(
        jnp.transpose(X[:, :7]))
    g_arr = jnp.reshape(jnp.asarray(G, jnp.float32), (1,))

    grid_spec = pltpu.PrefetchScalarGridSpec(
        num_scalar_prefetch=1,                       # G -> SMEM
        grid=(num_chunks,),
        in_specs=[pl.BlockSpec(memory_space=pl.ANY)],            # init state in HBM
        out_specs=pl.BlockSpec((F_OUT, N_PAD, chunk), lambda i, g: (0, 0, i)),
        scratch_shapes=[
            pltpu.VMEM((F_PAD, N_PAD), jnp.float32),             # persistent state
            pltpu.VMEM((F_STAGE, chunk, N_PAD), jnp.float32),    # per-chunk staging
            pltpu.SemaphoreType.DMA((1,)),                       # init-state copy sem
        ],
    )

    hist = pl.pallas_call(
        functools.partial(_gravity_chunk_kernel, chunk=chunk, dt=DT, n_real=n),
        out_shape=jax.ShapeDtypeStruct((F_OUT, N_PAD, steps_padded), jnp.float32),
        grid_spec=grid_spec,
        compiler_params=pltpu.CompilerParams(
            dimension_semantics=("arbitrary",)),     # state carried across chunks
    )(g_arr, state0)

    # Feature-first already; just slice off pad particles and pad timesteps.
    return hist[:, :n, :steps]


class GravityNet:
    """JAX/Pallas mirror of the PyTorch GravityNet (forward pass only)."""

    def __init__(self, G_guess):
        self.G = jnp.float32(G_guess)   # learnable scalar parameter
        self.delta = 0.01
        # TODO(synk): compute_grad() (finite-difference L1 gradient of G) is not
        # part of forward(); not implemented as a kernel.

    def run_sim(self, X, steps, G):
        return run_sim_pallas(X, steps, G)

    def forward(self, X, steps):
        self.last_X = X
        self.last_steps = steps
        return self.run_sim(X, steps, self.G)

    __call__ = forward


def run_sim_ref(X, steps, G):
    """Pure-JAX reference of the same simulation, for correctness checking."""
    X = jnp.asarray(X, jnp.float32)
    m = X[:, 6]
    eye = jnp.eye(X.shape[0], dtype=bool)

    def step(carry, _):
        px, py, vx, vy = carry
        dx = px[None, :] - px[:, None]
        dy = py[None, :] - py[:, None]
        r2 = dx * dx + dy * dy
        valid = jnp.logical_and(~eye, r2 > 0.0)
        inv_r = jnp.where(valid, lax.rsqrt(jnp.where(valid, r2, 1.0)), 0.0)
        inv_r3 = inv_r ** 3
        ax = G * jnp.sum(m[None, :] * dx * inv_r3, axis=1)
        ay = G * jnp.sum(m[None, :] * dy * inv_r3, axis=1)
        gpe = -0.5 * G * jnp.sum(m[:, None] * m[None, :] * inv_r)
        ke = 0.5 * jnp.sum(m * (vx * vx + vy * vy))
        ham = ke + gpe
        ones = jnp.ones_like(m)
        row = jnp.stack([px, py, vx, vy, ax, ay, m, ham * ones, gpe * ones], axis=0)
        vxn = vx + ax * DT
        vyn = vy + ay * DT
        pxn = px + vxn * DT
        pyn = py + vyn * DT
        return (pxn, pyn, vxn, vyn), row

    init = (X[:, 0], X[:, 1], X[:, 2], X[:, 3])
    _, rows = lax.scan(step, init, None, length=int(steps))
    return jnp.moveaxis(rows, 0, -1)   # (steps, 9, N) -> (9, N, steps)


if __name__ == "__main__":
    key = jax.random.PRNGKey(0)
    k1, k2, k3 = jax.random.split(key, 3)
    N, steps = 4, 8
    # X: (N, 7) = [x, y, vx, vy, ax, ay, m]
    pos_xy = jax.random.uniform(k1, (N, 2), jnp.float32, -1.0, 1.0)
    vel = jax.random.uniform(k2, (N, 2), jnp.float32, -0.1, 0.1)
    mass = jax.random.uniform(k3, (N, 1), jnp.float32, 0.5, 1.5)
    X = jnp.concatenate([pos_xy, vel, jnp.zeros((N, 2), jnp.float32), mass], axis=1)

    net = GravityNet(G_guess=1.0)
    hist = jax.block_until_ready(net(X, steps))
    assert hist.shape == (F_OUT, N, steps), hist.shape
    ref = run_sim_ref(X, steps, jnp.float32(1.0))
    assert bool(jnp.allclose(hist, ref, atol=2e-3, rtol=2e-3)), (
        float(jnp.max(jnp.abs(hist - ref))))

    # Exercise the multi-chunk path (state carried across grid iterations,
    # steps not a multiple of the chunk size, pad particles and pad timesteps).
    # Well-separated, gentle configuration so f32 round-off differences do not
    # get chaotically amplified over 200 steps.
    X2 = jnp.array([[ 3.0,  3.0, 0.0, 0.0, 0.0, 0.0, 1.0],
                    [-3.0,  3.0, 0.0, 0.0, 0.0, 0.0, 1.0],
                    [-3.0, -3.0, 0.0, 0.0, 0.0, 0.0, 1.0],
                    [ 3.0, -3.0, 0.0, 0.0, 0.0, 0.0, 1.0]], jnp.float32)
    steps2 = 200
    hist2 = jax.block_until_ready(
        run_sim_pallas(X2, steps2, jnp.float32(0.2), max_chunk=128))
    ref2 = run_sim_ref(X2, steps2, jnp.float32(0.2))
    assert hist2.shape == (F_OUT, 4, steps2), hist2.shape
    assert bool(jnp.allclose(hist2, ref2, atol=2e-3, rtol=2e-3)), (
        float(jnp.max(jnp.abs(hist2 - ref2))))

    print("KERNEL_OK")
</pallas_src>

<mosaic_0001>
module attributes {stable_mosaic.version = 11 : i64} {
  func.func @_gravity_chunk_kernel(%arg0: i32, %arg1: memref<1xf32, #tpu.memory_space<smem>>, %arg2: memref<8x8xf32, #tpu.memory_space<any>>, %arg3: memref<9x8x8xf32, #tpu.memory_space<vmem>>, %arg4: memref<8x8xf32, #tpu.memory_space<vmem>>, %arg5: memref<8x8x8xf32, #tpu.memory_space<vmem>>, %arg6: memref<1x!tpu.dma_semaphore, #tpu.memory_space<semaphore_mem>>) attributes {dimension_semantics = [#tpu.dimension_semantics<arbitrary>], iteration_bounds = array<i64: 1>, scalar_prefetch = 1 : i64, scratch_operands = 3 : i64, tpu.core_type = #tpu.core_type<tc>, window_params = [{}, {transform_indices = @transform_1, window_bounds = array<i64: 9, 8, 8>}]} {
    %c0_i32 = arith.constant 0 : i32
    %0 = arith.cmpi eq, %arg0, %c0_i32 : i32
    %1 = arith.extui %0 : i1 to i32
    %c0_i32_0 = arith.constant 0 : i32
    %2 = arith.cmpi ne, %1, %c0_i32_0 : i32
    scf.if %2 {
      %c0_i32_266 = arith.constant 0 : i32
      %808 = tpu.memref_slice %arg6[%c0_i32_266] : memref<1x!tpu.dma_semaphore, #tpu.memory_space<semaphore_mem>> -> memref<1x!tpu.dma_semaphore, #tpu.memory_space<semaphore_mem>>
      %809 = tpu.memref_squeeze %808 : memref<1x!tpu.dma_semaphore, #tpu.memory_space<semaphore_mem>> -> memref<!tpu.dma_semaphore, #tpu.memory_space<semaphore_mem>>
      tpu.enqueue_dma source(%arg2 : memref<8x8xf32, #tpu.memory_space<any>>) target(%arg4 : memref<8x8xf32, #tpu.memory_space<vmem>>) target_semaphore(%809 : memref<!tpu.dma_semaphore, #tpu.memory_space<semaphore_mem>>)
      %c0_i32_267 = arith.constant 0 : i32
      %810 = tpu.memref_slice %arg6[%c0_i32_267] : memref<1x!tpu.dma_semaphore, #tpu.memory_space<semaphore_mem>> -> memref<1x!tpu.dma_semaphore, #tpu.memory_space<semaphore_mem>>
      %811 = tpu.memref_squeeze %810 : memref<1x!tpu.dma_semaphore, #tpu.memory_space<semaphore_mem>> -> memref<!tpu.dma_semaphore, #tpu.memory_space<semaphore_mem>>
      tpu.wait_dma2 semaphore(%811 : memref<!tpu.dma_semaphore, #tpu.memory_space<semaphore_mem>>) src(%arg2 : memref<8x8xf32, #tpu.memory_space<any>>) dst(%arg4 : memref<8x8xf32, #tpu.memory_space<vmem>>)
    } else {
    }
    %c0 = arith.constant 0 : index
    %3 = memref.load %arg1[%c0] : memref<1xf32, #tpu.memory_space<smem>>
    %c6 = arith.constant 6 : index
    %c0_1 = arith.constant 0 : index
    %4 = vector.load %arg4[%c6, %c0_1] : memref<8x8xf32, #tpu.memory_space<vmem>>, vector<1x8xf32>
    %5 = tpu.transpose %4, [1, 0] : vector<1x8xf32> -> vector<8x1xf32>
    %6 = vector.broadcast %3 : f32 to vector<8x1xf32>
    %7 = arith.mulf %6, %5 : vector<8x1xf32>
    %cst = arith.constant -5.000000e-01 : f32
    %8 = arith.mulf %cst, %3 : f32
    %9 = vector.broadcast %5 : vector<8x1xf32> to vector<8x8xf32>
    %10 = vector.broadcast %4 : vector<1x8xf32> to vector<8x8xf32>
    %11 = arith.mulf %9, %10 : vector<8x8xf32>
    %12 = vector.broadcast %8 : f32 to vector<8x8xf32>
    %13 = arith.mulf %12, %11 : vector<8x8xf32>
    %14 = tpu.iota {dimensions = array<i32: 0>} : vector<8x8xi32>
    %15 = tpu.iota {dimensions = array<i32: 1>} : vector<8x8xi32>
    %16 = arith.cmpi ne, %14, %15 : vector<8x8xi32>
    %c4_i32 = arith.constant 4 : i32
    %17 = vector.broadcast %c4_i32 : i32 to vector<8x8xi32>
    %18 = arith.cmpi slt, %14, %17 : vector<8x8xi32>
    %c4_i32_2 = arith.constant 4 : i32
    %19 = vector.broadcast %c4_i32_2 : i32 to vector<8x8xi32>
    %20 = arith.cmpi slt, %15, %19 : vector<8x8xi32>
    %21 = arith.andi %18, %20 : vector<8x8xi1>
    %22 = arith.andi %16, %21 : vector<8x8xi1>
    %23 = arith.extui %22 : vector<8x8xi1> to vector<8x8xi32>
    %24 = arith.sitofp %23 : vector<8x8xi32> to vector<8x8xf32>
    %cst_3 = arith.constant 1.000000e+00 : f32
    %25 = vector.broadcast %cst_3 : f32 to vector<8x8xf32>
    %26 = arith.subf %25, %24 : vector<8x8xf32>
    %27 = vector.shape_cast %5 : vector<8x1xf32> to vector<8x1xf32>
    %28 = vector.broadcast %27 : vector<8x1xf32> to vector<8x8xf32>
    %c6_4 = arith.constant 6 : index
    %c0_5 = arith.constant 0 : index
    %c0_6 = arith.constant 0 : index
    %29 = vector.load %arg3[%c6_4, %c0_5, %c0_6] : memref<9x8x8xf32, #tpu.memory_space<vmem>>, vector<1x8x8xf32>
    %30 = vector.shape_cast %29 : vector<1x8x8xf32> to vector<8x8xf32>
    %31 = vector.shape_cast %28 : vector<8x8xf32> to vector<1x8x8xf32>
    tpu.vector_store %arg3[%c6_4, %c0_5, %c0_6], %31 {strides = array<i32>} : memref<9x8x8xf32, #tpu.memory_space<vmem>>, vector<1x8x8xf32>,
    %c0_7 = arith.constant 0 : index
    %c0_8 = arith.constant 0 : index
    %32 = vector.load %arg4[%c0_7, %c0_8] : memref<8x8xf32, #tpu.memory_space<vmem>>, vector<1x8xf32>
    %c1 = arith.constant 1 : index
    %c0_9 = arith.constant 0 : index
    %33 = vector.load %arg4[%c1, %c0_9] : memref<8x8xf32, #tpu.memory_space<vmem>>, vector<1x8xf32>
    %c2 = arith.constant 2 : index
    %c0_10 = arith.constant 0 : index
    %34 = vector.load %arg4[%c2, %c0_10] : memref<8x8xf32, #tpu.memory_space<vmem>>, vector<1x8xf32>
    %c3 = arith.constant 3 : index
    %c0_11 = arith.constant 0 : index
    %35 = vector.load %arg4[%c3, %c0_11] : memref<8x8xf32, #tpu.memory_space<vmem>>, vector<1x8xf32>
    %c0_i32_12 = arith.constant 0 : i32
    %36 = tpu.transpose %32, [1, 0] : vector<1x8xf32> -> vector<8x1xf32>
    %37 = vector.broadcast %36 : vector<8x1xf32> to vector<8x8xf32>
    %38 = vector.broadcast %32 : vector<1x8xf32> to vector<8x8xf32>
    %39 = arith.subf %37, %38 : vector<8x8xf32>
    %40 = tpu.transpose %33, [1, 0] : vector<1x8xf32> -> vector<8x1xf32>
    %41 = vector.broadcast %40 : vector<8x1xf32> to vector<8x8xf32>
    %42 = vector.broadcast %33 : vector<1x8xf32> to vector<8x8xf32>
    %43 = arith.subf %41, %42 : vector<8x8xf32>
    %44 = arith.mulf %39, %39 : vector<8x8xf32>
    %45 = arith.mulf %43, %43 : vector<8x8xf32>
    %46 = arith.addf %44, %45 : vector<8x8xf32>
    %47 = arith.addf %46, %26 : vector<8x8xf32>
    %48 = math.rsqrt %47 : vector<8x8xf32>
    %49 = arith.mulf %24, %48 : vector<8x8xf32>
    %50 = arith.mulf %49, %49 : vector<8x8xf32>
    %51 = arith.mulf %50, %49 : vector<8x8xf32>
    %52 = vector.broadcast %7 : vector<8x1xf32> to vector<8x8xf32>
    %53 = arith.mulf %52, %51 : vector<8x8xf32>
    %54 = arith.mulf %53, %39 : vector<8x8xf32>
    %cst_13 = arith.constant dense<0.000000e+00> : vector<8xf32>
    %55 = vector.multi_reduction <add>, %54, %cst_13 [0] : vector<8x8xf32> to vector<8xf32>
    %56 = vector.shape_cast %55 : vector<8xf32> to vector<1x8xf32>
    %57 = arith.mulf %53, %43 : vector<8x8xf32>
    %cst_14 = arith.constant dense<0.000000e+00> : vector<8xf32>
    %58 = vector.multi_reduction <add>, %57, %cst_14 [0] : vector<8x8xf32> to vector<8xf32>
    %59 = vector.shape_cast %58 : vector<8xf32> to vector<1x8xf32>
    %60 = arith.mulf %13, %49 : vector<8x8xf32>
    %61 = vector.shape_cast %60 : vector<8x8xf32> to vector<1x8x8xf32>
    %cst_15 = arith.constant dense<0.000000e+00> : vector<1xf32>
    %62 = vector.multi_reduction <add>, %61, %cst_15 [1, 2] : vector<1x8x8xf32> to vector<1xf32>
    %63 = vector.shape_cast %62 : vector<1xf32> to vector<1x1x1xf32>
    %64 = vector.extract %63[0, 0, 0] : f32 from vector<1x1x1xf32>
    %65 = vector.broadcast %64 : f32 to vector<1x1xf32>
    %66 = arith.mulf %34, %34 : vector<1x8xf32>
    %67 = arith.mulf %35, %35 : vector<1x8xf32>
    %68 = arith.addf %66, %67 : vector<1x8xf32>
    %69 = arith.mulf %4, %68 : vector<1x8xf32>
    %70 = vector.shape_cast %69 : vector<1x8xf32> to vector<1x1x8xf32>
    %cst_16 = arith.constant dense<0.000000e+00> : vector<1xf32>
    %71 = vector.multi_reduction <add>, %70, %cst_16 [1, 2] : vector<1x1x8xf32> to vector<1xf32>
    %72 = vector.shape_cast %71 : vector<1xf32> to vector<1x1x1xf32>
    %73 = vector.extract %72[0, 0, 0] : f32 from vector<1x1x1xf32>
    %74 = vector.broadcast %73 : f32 to vector<1x1xf32>
    %cst_17 = arith.constant 5.000000e-01 : f32
    %75 = vector.broadcast %cst_17 : f32 to vector<1x1xf32>
    %76 = arith.mulf %75, %74 : vector<1x1xf32>
    %77 = arith.addf %76, %65 : vector<1x1xf32>
    %c0_18 = arith.constant 0 : index
    %78 = arith.index_cast %c0_i32_12 : i32 to index
    %c0_19 = arith.constant 0 : index
    %79 = vector.load %arg5[%c0_18, %78, %c0_19] : memref<8x8x8xf32, #tpu.memory_space<vmem>>, vector<1x1x8xf32>
    %80 = vector.shape_cast %79 : vector<1x1x8xf32> to vector<1x8xf32>
    %81 = vector.shape_cast %32 : vector<1x8xf32> to vector<1x1x8xf32>
    tpu.vector_store %arg5[%c0_18, %78, %c0_19], %81 {strides = array<i32>} : memref<8x8x8xf32, #tpu.memory_space<vmem>>, vector<1x1x8xf32>,
    %c1_20 = arith.constant 1 : index
    %82 = arith.index_cast %c0_i32_12 : i32 to index
    %c0_21 = arith.constant 0 : index
    %83 = vector.load %arg5[%c1_20, %82, %c0_21] : memref<8x8x8xf32, #tpu.memory_space<vmem>>, vector<1x1x8xf32>
    %84 = vector.shape_cast %83 : vector<1x1x8xf32> to vector<1x8xf32>
    %85 = vector.shape_cast %33 : vector<1x8xf32> to vector<1x1x8xf32>
    tpu.vector_store %arg5[%c1_20, %82, %c0_21], %85 {strides = array<i32>} : memref<8x8x8xf32, #tpu.memory_space<vmem>>, vector<1x1x8xf32>,
    %c2_22 = arith.constant 2 : index
    %86 = arith.index_cast %c0_i32_12 : i32 to index
    %c0_23 = arith.constant 0 : index
    %87 = vector.load %arg5[%c2_22, %86, %c0_23] : memref<8x8x8xf32, #tpu.memory_space<vmem>>, vector<1x1x8xf32>
    %88 = vector.shape_cast %87 : vector<1x1x8xf32> to vector<1x8xf32>
    %89 = vector.shape_cast %34 : vector<1x8xf32> to vector<1x1x8xf32>
    tpu.vector_store %arg5[%c2_22, %86, %c0_23], %89 {strides = array<i32>} : memref<8x8x8xf32, #tpu.memory_space<vmem>>, vector<1x1x8xf32>,
    %c3_24 = arith.constant 3 : index
    %90 = arith.index_cast %c0_i32_12 : i32 to index
    %c0_25 = arith.constant 0 : index
    %91 = vector.load %arg5[%c3_24, %90, %c0_25] : memref<8x8x8xf32, #tpu.memory_space<vmem>>, vector<1x1x8xf32>
    %92 = vector.shape_cast %91 : vector<1x1x8xf32> to vector<1x8xf32>
    %93 = vector.shape_cast %35 : vector<1x8xf32> to vector<1x1x8xf32>
    tpu.vector_store %arg5[%c3_24, %90, %c0_25], %93 {strides = array<i32>} : memref<8x8x8xf32, #tpu.memory_space<vmem>>, vector<1x1x8xf32>,
    %c4 = arith.constant 4 : index
    %94 = arith.index_cast %c0_i32_12 : i32 to index
    %c0_26 = arith.constant 0 : index
    %95 = vector.load %arg5[%c4, %94, %c0_26] : memref<8x8x8xf32, #tpu.memory_space<vmem>>, vector<1x1x8xf32>
    %96 = vector.shape_cast %95 : vector<1x1x8xf32> to vector<1x8xf32>
    %97 = vector.shape_cast %56 : vector<1x8xf32> to vector<1x1x8xf32>
    tpu.vector_store %arg5[%c4, %94, %c0_26], %97 {strides = array<i32>} : memref<8x8x8xf32, #tpu.memory_space<vmem>>, vector<1x1x8xf32>,
    %c5 = arith.constant 5 : index
    %98 = arith.index_cast %c0_i32_12 : i32 to index
    %c0_27 = arith.constant 0 : index
    %99 = vector.load %arg5[%c5, %98, %c0_27] : memref<8x8x8xf32, #tpu.memory_space<vmem>>, vector<1x1x8xf32>
    %100 = vector.shape_cast %99 : vector<1x1x8xf32> to vector<1x8xf32>
    %101 = vector.shape_cast %59 : vector<1x8xf32> to vector<1x1x8xf32>
    tpu.vector_store %arg5[%c5, %98, %c0_27], %101 {strides = array<i32>} : memref<8x8x8xf32, #tpu.memory_space<vmem>>, vector<1x1x8xf32>,
    %102 = vector.shape_cast %77 : vector<1x1xf32> to vector<1x1xf32>
    %103 = vector.broadcast %102 : vector<1x1xf32> to vector<1x8xf32>
    %c6_28 = arith.constant 6 : index
    %104 = arith.index_cast %c0_i32_12 : i32 to index
    %c0_29 = arith.constant 0 : index
    %105 = vector.load %arg5[%c6_28, %104, %c0_29] : memref<8x8x8xf32, #tpu.memory_space<vmem>>, vector<1x1x8xf32>
    %106 = vector.shape_cast %105 : vector<1x1x8xf32> to vector<1x8xf32>
    %107 = vector.shape_cast %103 : vector<1x8xf32> to vector<1x1x8xf32>
    tpu.vector_store %arg5[%c6_28, %104, %c0_29], %107 {strides = array<i32>} : memref<8x8x8xf32, #tpu.memory_space<vmem>>, vector<1x1x8xf32>,
    %108 = vector.shape_cast %65 : vector<1x1xf32> to vector<1x1xf32>
    %109 = vector.broadcast %108 : vector<1x1xf32> to vector<1x8xf32>
    %c7 = arith.constant 7 : index
    %110 = arith.index_cast %c0_i32_12 : i32 to index
    %c0_30 = arith.constant 0 : index
    %111 = vector.load %arg5[%c7, %110, %c0_30] : memref<8x8x8xf32, #tpu.memory_space<vmem>>, vector<1x1x8xf32>
    %112 = vector.shape_cast %111 : vector<1x1x8xf32> to vector<1x8xf32>
    %113 = vector.shape_cast %109 : vector<1x8xf32> to vector<1x1x8xf32>
    tpu.vector_store %arg5[%c7, %110, %c0_30], %113 {strides = array<i32>} : memref<8x8x8xf32, #tpu.memory_space<vmem>>, vector<1x1x8xf32>,
    %cst_31 = arith.constant 2.000000e-02 : f32
    %114 = vector.broadcast %cst_31 : f32 to vector<1x8xf32>
    %115 = arith.mulf %56, %114 : vector<1x8xf32>
    %116 = arith.addf %34, %115 : vector<1x8xf32>
    %cst_32 = arith.constant 2.000000e-02 : f32
    %117 = vector.broadcast %cst_32 : f32 to vector<1x8xf32>
    %118 = arith.mulf %59, %117 : vector<1x8xf32>
    %119 = arith.addf %35, %118 : vector<1x8xf32>
    %cst_33 = arith.constant 2.000000e-02 : f32
    %120 = vector.broadcast %cst_33 : f32 to vector<1x8xf32>
    %121 = arith.mulf %116, %120 : vector<1x8xf32>
    %122 = arith.addf %32, %121 : vector<1x8xf32>
    %cst_34 = arith.constant 2.000000e-02 : f32
    %123 = vector.broadcast %cst_34 : f32 to vector<1x8xf32>
    %124 = arith.mulf %119, %123 : vector<1x8xf32>
    %125 = arith.addf %33, %124 : vector<1x8xf32>
    %c1_i32 = arith.constant 1 : i32
    %126 = tpu.transpose %122, [1, 0] : vector<1x8xf32> -> vector<8x1xf32>
    %127 = vector.broadcast %126 : vector<8x1xf32> to vector<8x8xf32>
    %128 = vector.broadcast %122 : vector<1x8xf32> to vector<8x8xf32>
    %129 = arith.subf %127, %128 : vector<8x8xf32>
    %130 = tpu.transpose %125, [1, 0] : vector<1x8xf32> -> vector<8x1xf32>
    %131 = vector.broadcast %130 : vector<8x1xf32> to vector<8x8xf32>
    %132 = vector.broadcast %125 : vector<1x8xf32> to vector<8x8xf32>
    %133 = arith.subf %131, %132 : vector<8x8xf32>
    %134 = arith.mulf %129, %129 : vector<8x8xf32>
    %135 = arith.mulf %133, %133 : vector<8x8xf32>
    %136 = arith.addf %134, %135 : vector<8x8xf32>
    %137 = arith.addf %136, %26 : vector<8x8xf32>
    %138 = math.rsqrt %137 : vector<8x8xf32>
    %139 = arith.mulf %24, %138 : vector<8x8xf32>
    %140 = arith.mulf %139, %139 : vector<8x8xf32>
    %141 = arith.mulf %140, %139 : vector<8x8xf32>
    %142 = vector.broadcast %7 : vector<8x1xf32> to vector<8x8xf32>
    %143 = arith.mulf %142, %141 : vector<8x8xf32>
    %144 = arith.mulf %143, %129 : vector<8x8xf32>
    %cst_35 = arith.constant dense<0.000000e+00> : vector<8xf32>
    %145 = vector.multi_reduction <add>, %144, %cst_35 [0] : vector<8x8xf32> to vector<8xf32>
    %146 = vector.shape_cast %145 : vector<8xf32> to vector<1x8xf32>
    %147 = arith.mulf %143, %133 : vector<8x8xf32>
    %cst_36 = arith.constant dense<0.000000e+00> : vector<8xf32>
    %148 = vector.multi_reduction <add>, %147, %cst_36 [0] : vector<8x8xf32> to vector<8xf32>
    %149 = vector.shape_cast %148 : vector<8xf32> to vector<1x8xf32>
    %150 = arith.mulf %13, %139 : vector<8x8xf32>
    %151 = vector.shape_cast %150 : vector<8x8xf32> to vector<1x8x8xf32>
    %cst_37 = arith.constant dense<0.000000e+00> : vector<1xf32>
    %152 = vector.multi_reduction <add>, %151, %cst_37 [1, 2] : vector<1x8x8xf32> to vector<1xf32>
    %153 = vector.shape_cast %152 : vector<1xf32> to vector<1x1x1xf32>
    %154 = vector.extract %153[0, 0, 0] : f32 from vector<1x1x1xf32>
    %155 = vector.broadcast %154 : f32 to vector<1x1xf32>
    %156 = arith.mulf %116, %116 : vector<1x8xf32>
    %157 = arith.mulf %119, %119 : vector<1x8xf32>
    %158 = arith.addf %156, %157 : vector<1x8xf32>
    %159 = arith.mulf %4, %158 : vector<1x8xf32>
    %160 = vector.shape_cast %159 : vector<1x8xf32> to vector<1x1x8xf32>
    %cst_38 = arith.constant dense<0.000000e+00> : vector<1xf32>
    %161 = vector.multi_reduction <add>, %160, %cst_38 [1, 2] : vector<1x1x8xf32> to vector<1xf32>
    %162 = vector.shape_cast %161 : vector<1xf32> to vector<1x1x1xf32>
    %163 = vector.extract %162[0, 0, 0] : f32 from vector<1x1x1xf32>
    %164 = vector.broadcast %163 : f32 to vector<1x1xf32>
    %cst_39 = arith.constant 5.000000e-01 : f32
    %165 = vector.broadcast %cst_39 : f32 to vector<1x1xf32>
    %166 = arith.mulf %165, %164 : vector<1x1xf32>
    %167 = arith.addf %166, %155 : vector<1x1xf32>
    %c0_40 = arith.constant 0 : index
    %168 = arith.index_cast %c1_i32 : i32 to index
    %c0_41 = arith.constant 0 : index
    %169 = vector.load %arg5[%c0_40, %168, %c0_41] : memref<8x8x8xf32, #tpu.memory_space<vmem>>, vector<1x1x8xf32>
    %170 = vector.shape_cast %169 : vector<1x1x8xf32> to vector<1x8xf32>
    %171 = vector.shape_cast %122 : vector<1x8xf32> to vector<1x1x8xf32>
    tpu.vector_store %arg5[%c0_40, %168, %c0_41], %171 {strides = array<i32>} : memref<8x8x8xf32, #tpu.memory_space<vmem>>, vector<1x1x8xf32>,
    %c1_42 = arith.constant 1 : index
    %172 = arith.index_cast %c1_i32 : i32 to index
    %c0_43 = arith.constant 0 : index
    %173 = vector.load %arg5[%c1_42, %172, %c0_43] : memref<8x8x8xf32, #tpu.memory_space<vmem>>, vector<1x1x8xf32>
    %174 = vector.shape_cast %173 : vector<1x1x8xf32> to vector<1x8xf32>
    %175 = vector.shape_cast %125 : vector<1x8xf32> to vector<1x1x8xf32>
    tpu.vector_store %arg5[%c1_42, %172, %c0_43], %175 {strides = array<i32>} : memref<8x8x8xf32, #tpu.memory_space<vmem>>, vector<1x1x8xf32>,
    %c2_44 = arith.constant 2 : index
    %176 = arith.index_cast %c1_i32 : i32 to index
    %c0_45 = arith.constant 0 : index
    %177 = vector.load %arg5[%c2_44, %176, %c0_45] : memref<8x8x8xf32, #tpu.memory_space<vmem>>, vector<1x1x8xf32>
    %178 = vector.shape_cast %177 : vector<1x1x8xf32> to vector<1x8xf32>
    %179 = vector.shape_cast %116 : vector<1x8xf32> to vector<1x1x8xf32>
    tpu.vector_store %arg5[%c2_44, %176, %c0_45], %179 {strides = array<i32>} : memref<8x8x8xf32, #tpu.memory_space<vmem>>, vector<1x1x8xf32>,
    %c3_46 = arith.constant 3 : index
    %180 = arith.index_cast %c1_i32 : i32 to index
    %c0_47 = arith.constant 0 : index
    %181 = vector.load %arg5[%c3_46, %180, %c0_47] : memref<8x8x8xf32, #tpu.memory_space<vmem>>, vector<1x1x8xf32>
    %182 = vector.shape_cast %181 : vector<1x1x8xf32> to vector<1x8xf32>
    %183 = vector.shape_cast %119 : vector<1x8xf32> to vector<1x1x8xf32>
    tpu.vector_store %arg5[%c3_46, %180, %c0_47], %183 {strides = array<i32>} : memref<8x8x8xf32, #tpu.memory_space<vmem>>, vector<1x1x8xf32>,
    %c4_48 = arith.constant 4 : index
    %184 = arith.index_cast %c1_i32 : i32 to index
    %c0_49 = arith.constant 0 : index
    %185 = vector.load %arg5[%c4_48, %184, %c0_49] : memref<8x8x8xf32, #tpu.memory_space<vmem>>, vector<1x1x8xf32>
    %186 = vector.shape_cast %185 : vector<1x1x8xf32> to vector<1x8xf32>
    %187 = vector.shape_cast %146 : vector<1x8xf32> to vector<1x1x8xf32>
    tpu.vector_store %arg5[%c4_48, %184, %c0_49], %187 {strides = array<i32>} : memref<8x8x8xf32, #tpu.memory_space<vmem>>, vector<1x1x8xf32>,
    %c5_50 = arith.constant 5 : index
    %188 = arith.index_cast %c1_i32 : i32 to index
    %c0_51 = arith.constant 0 : index
    %189 = vector.load %arg5[%c5_50, %188, %c0_51] : memref<8x8x8xf32, #tpu.memory_space<vmem>>, vector<1x1x8xf32>
    %190 = vector.shape_cast %189 : vector<1x1x8xf32> to vector<1x8xf32>
    %191 = vector.shape_cast %149 : vector<1x8xf32> to vector<1x1x8xf32>
    tpu.vector_store %arg5[%c5_50, %188, %c0_51], %191 {strides = array<i32>} : memref<8x8x8xf32, #tpu.memory_space<vmem>>, vector<1x1x8xf32>,
    %192 = vector.shape_cast %167 : vector<1x1xf32> to vector<1x1xf32>
    %193 = vector.broadcast %192 : vector<1x1xf32> to vector<1x8xf32>
    %c6_52 = arith.constant 6 : index
    %194 = arith.index_cast %c1_i32 : i32 to index
    %c0_53 = arith.constant 0 : index
    %195 = vector.load %arg5[%c6_52, %194, %c0_53] : memref<8x8x8xf32, #tpu.memory_space<vmem>>, vector<1x1x8xf32>
    %196 = vector.shape_cast %195 : vector<1x1x8xf32> to vector<1x8xf32>
    %197 = vector.shape_cast %193 : vector<1x8xf32> to vector<1x1x8xf32>
    tpu.vector_store %arg5[%c6_52, %194, %c0_53], %197 {strides = array<i32>} : memref<8x8x8xf32, #tpu.memory_space<vmem>>, vector<1x1x8xf32>,
    %198 = vector.shape_cast %155 : vector<1x1xf32> to vector<1x1xf32>
    %199 = vector.broadcast %198 : vector<1x1xf32> to vector<1x8xf32>
    %c7_54 = arith.constant 7 : index
    %200 = arith.index_cast %c1_i32 : i32 to index
    %c0_55 = arith.constant 0 : index
    %201 = vector.load %arg5[%c7_54, %200, %c0_55] : memref<8x8x8xf32, #tpu.memory_space<vmem>>, vector<1x1x8xf32>
    %202 = vector.shape_cast %201 : vector<1x1x8xf32> to vector<1x8xf32>
    %203 = vector.shape_cast %199 : vector<1x8xf32> to vector<1x1x8xf32>
    tpu.vector_store %arg5[%c7_54, %200, %c0_55], %203 {strides = array<i32>} : memref<8x8x8xf32, #tpu.memory_space<vmem>>, vector<1x1x8xf32>,
    %cst_56 = arith.constant 2.000000e-02 : f32
    %204 = vector.broadcast %cst_56 : f32 to vector<1x8xf32>
    %205 = arith.mulf %146, %204 : vector<1x8xf32>
    %206 = arith.addf %116, %205 : vector<1x8xf32>
    %cst_57 = arith.constant 2.000000e-02 : f32
    %207 = vector.broadcast %cst_57 : f32 to vector<1x8xf32>
    %208 = arith.mulf %149, %207 : vector<1x8xf32>
    %209 = arith.addf %119, %208 : vector<1x8xf32>
    %cst_58 = arith.constant 2.000000e-02 : f32
    %210 = vector.broadcast %cst_58 : f32 to vector<1x8xf32>
    %211 = arith.mulf %206, %210 : vector<1x8xf32>
    %212 = arith.addf %122, %211 : vector<1x8xf32>
    %cst_59 = arith.constant 2.000000e-02 : f32
    %213 = vector.broadcast %cst_59 : f32 to vector<1x8xf32>
    %214 = arith.mulf %209, %213 : vector<1x8xf32>
    %215 = arith.addf %125, %214 : vector<1x8xf32>
    %c2_i32 = arith.constant 2 : i32
    %216 = tpu.transpose %212, [1, 0] : vector<1x8xf32> -> vector<8x1xf32>
    %217 = vector.broadcast %216 : vector<8x1xf32> to vector<8x8xf32>
    %218 = vector.broadcast %212 : vector<1x8xf32> to vector<8x8xf32>
    %219 = arith.subf %217, %218 : vector<8x8xf32>
    %220 = tpu.transpose %215, [1, 0] : vector<1x8xf32> -> vector<8x1xf32>
    %221 = vector.broadcast %220 : vector<8x1xf32> to vector<8x8xf32>
    %222 = vector.broadcast %215 : vector<1x8xf32> to vector<8x8xf32>
    %223 = arith.subf %221, %222 : vector<8x8xf32>
    %224 = arith.mulf %219, %219 : vector<8x8xf32>
    %225 = arith.mulf %223, %223 : vector<8x8xf32>
    %226 = arith.addf %224, %225 : vector<8x8xf32>
    %227 = arith.addf %226, %26 : vector<8x8xf32>
    %228 = math.rsqrt %227 : vector<8x8xf32>
    %229 = arith.mulf %24, %228 : vector<8x8xf32>
    %230 = arith.mulf %229, %229 : vector<8x8xf32>
    %231 = arith.mulf %230, %229 : vector<8x8xf32>
    %232 = vector.broadcast %7 : vector<8x1xf32> to vector<8x8xf32>
    %233 = arith.mulf %232, %231 : vector<8x8xf32>
    %234 = arith.mulf %233, %219 : vector<8x8xf32>
    %cst_60 = arith.constant dense<0.000000e+00> : vector<8xf32>
    %235 = vector.multi_reduction <add>, %234, %cst_60 [0] : vector<8x8xf32> to vector<8xf32>
    %236 = vector.shape_cast %235 : vector<8xf32> to vector<1x8xf32>
    %237 = arith.mulf %233, %223 : vector<8x8xf32>
    %cst_61 = arith.constant dense<0.000000e+00> : vector<8xf32>
    %238 = vector.multi_reduction <add>, %237, %cst_61 [0] : vector<8x8xf32> to vector<8xf32>
    %239 = vector.shape_cast %238 : vector<8xf32> to vector<1x8xf32>
    %240 = arith.mulf %13, %229 : vector<8x8xf32>
    %241 = vector.shape_cast %240 : vector<8x8xf32> to vector<1x8x8xf32>
    %cst_62 = arith.constant dense<0.000000e+00> : vector<1xf32>
    %242 = vector.multi_reduction <add>, %241, %cst_62 [1, 2] : vector<1x8x8xf32> to vector<1xf32>
    %243 = vector.shape_cast %242 : vector<1xf32> to vector<1x1x1xf32>
    %244 = vector.extract %243[0, 0, 0] : f32 from vector<1x1x1xf32>
    %245 = vector.broadcast %244 : f32 to vector<1x1xf32>
    %246 = arith.mulf %206, %206 : vector<1x8xf32>
    %247 = arith.mulf %209, %209 : vector<1x8xf32>
    %248 = arith.addf %246, %247 : vector<1x8xf32>
    %249 = arith.mulf %4, %248 : vector<1x8xf32>
    %250 = vector.shape_cast %249 : vector<1x8xf32> to vector<1x1x8xf32>
    %cst_63 = arith.constant dense<0.000000e+00> : vector<1xf32>
    %251 = vector.multi_reduction <add>, %250, %cst_63 [1, 2] : vector<1x1x8xf32> to vector<1xf32>
    %252 = vector.shape_cast %251 : vector<1xf32> to vector<1x1x1xf32>
    %253 = vector.extract %252[0, 0, 0] : f32 from vector<1x1x1xf32>
    %254 = vector.broadcast %253 : f32 to vector<1x1xf32>
    %cst_64 = arith.constant 5.000000e-01 : f32
    %255 = vector.broadcast %cst_64 : f32 to vector<1x1xf32>
    %256 = arith.mulf %255, %254 : vector<1x1xf32>
    %257 = arith.addf %256, %245 : vector<1x1xf32>
    %c0_65 = arith.constant 0 : index
    %258 = arith.index_cast %c2_i32 : i32 to index
    %c0_66 = arith.constant 0 : index
    %259 = vector.load %arg5[%c0_65, %258, %c0_66] : memref<8x8x8xf32, #tpu.memory_space<vmem>>, vector<1x1x8xf32>
    %260 = vector.shape_cast %259 : vector<1x1x8xf32> to vector<1x8xf32>
    %261 = vector.shape_cast %212 : vector<1x8xf32> to vector<1x1x8xf32>
    tpu.vector_store %arg5[%c0_65, %258, %c0_66], %261 {strides = array<i32>} : memref<8x8x8xf32, #tpu.memory_space<vmem>>, vector<1x1x8xf32>,
    %c1_67 = arith.constant 1 : index
    %262 = arith.index_cast %c2_i32 : i32 to index
    %c0_68 = arith.constant 0 : index
    %263 = vector.load %arg5[%c1_67, %262, %c0_68] : memref<8x8x8xf32, #tpu.memory_space<vmem>>, vector<1x1x8xf32>
    %264 = vector.shape_cast %263 : vector<1x1x8xf32> to vector<1x8xf32>
    %265 = vector.shape_cast %215 : vector<1x8xf32> to vector<1x1x8xf32>
    tpu.vector_store %arg5[%c1_67, %262, %c0_68], %265 {strides = array<i32>} : memref<8x8x8xf32, #tpu.memory_space<vmem>>, vector<1x1x8xf32>,
    %c2_69 = arith.constant 2 : index
    %266 = arith.index_cast %c2_i32 : i32 to index
    %c0_70 = arith.constant 0 : index
    %267 = vector.load %arg5[%c2_69, %266, %c0_70] : memref<8x8x8xf32, #tpu.memory_space<vmem>>, vector<1x1x8xf32>
    %268 = vector.shape_cast %267 : vector<1x1x8xf32> to vector<1x8xf32>
    %269 = vector.shape_cast %206 : vector<1x8xf32> to vector<1x1x8xf32>
    tpu.vector_store %arg5[%c2_69, %266, %c0_70], %269 {strides = array<i32>} : memref<8x8x8xf32, #tpu.memory_space<vmem>>, vector<1x1x8xf32>,
    %c3_71 = arith.constant 3 : index
    %270 = arith.index_cast %c2_i32 : i32 to index
    %c0_72 = arith.constant 0 : index
    %271 = vector.load %arg5[%c3_71, %270, %c0_72] : memref<8x8x8xf32, #tpu.memory_space<vmem>>, vector<1x1x8xf32>
    %272 = vector.shape_cast %271 : vector<1x1x8xf32> to vector<1x8xf32>
    %273 = vector.shape_cast %209 : vector<1x8xf32> to vector<1x1x8xf32>
    tpu.vector_store %arg5[%c3_71, %270, %c0_72], %273 {strides = array<i32>} : memref<8x8x8xf32, #tpu.memory_space<vmem>>, vector<1x1x8xf32>,
    %c4_73 = arith.constant 4 : index
    %274 = arith.index_cast %c2_i32 : i32 to index
    %c0_74 = arith.constant 0 : index
    %275 = vector.load %arg5[%c4_73, %274, %c0_74] : memref<8x8x8xf32, #tpu.memory_space<vmem>>, vector<1x1x8xf32>
    %276 = vector.shape_cast %275 : vector<1x1x8xf32> to vector<1x8xf32>
    %277 = vector.shape_cast %236 : vector<1x8xf32> to vector<1x1x8xf32>
    tpu.vector_store %arg5[%c4_73, %274, %c0_74], %277 {strides = array<i32>} : memref<8x8x8xf32, #tpu.memory_space<vmem>>, vector<1x1x8xf32>,
    %c5_75 = arith.constant 5 : index
    %278 = arith.index_cast %c2_i32 : i32 to index
    %c0_76 = arith.constant 0 : index
    %279 = vector.load %arg5[%c5_75, %278, %c0_76] : memref<8x8x8xf32, #tpu.memory_space<vmem>>, vector<1x1x8xf32>
    %280 = vector.shape_cast %279 : vector<1x1x8xf32> to vector<1x8xf32>
    %281 = vector.shape_cast %239 : vector<1x8xf32> to vector<1x1x8xf32>
    tpu.vector_store %arg5[%c5_75, %278, %c0_76], %281 {strides = array<i32>} : memref<8x8x8xf32, #tpu.memory_space<vmem>>, vector<1x1x8xf32>,
    %282 = vector.shape_cast %257 : vector<1x1xf32> to vector<1x1xf32>
    %283 = vector.broadcast %282 : vector<1x1xf32> to vector<1x8xf32>
    %c6_77 = arith.constant 6 : index
    %284 = arith.index_cast %c2_i32 : i32 to index
    %c0_78 = arith.constant 0 : index
    %285 = vector.load %arg5[%c6_77, %284, %c0_78] : memref<8x8x8xf32, #tpu.memory_space<vmem>>, vector<1x1x8xf32>
    %286 = vector.shape_cast %285 : vector<1x1x8xf32> to vector<1x8xf32>
    %287 = vector.shape_cast %283 : vector<1x8xf32> to vector<1x1x8xf32>
    tpu.vector_store %arg5[%c6_77, %284, %c0_78], %287 {strides = array<i32>} : memref<8x8x8xf32, #tpu.memory_space<vmem>>, vector<1x1x8xf32>,
    %288 = vector.shape_cast %245 : vector<1x1xf32> to vector<1x1xf32>
    %289 = vector.broadcast %288 : vector<1x1xf32> to vector<1x8xf32>
    %c7_79 = arith.constant 7 : index
    %290 = arith.index_cast %c2_i32 : i32 to index
    %c0_80 = arith.constant 0 : index
    %291 = vector.load %arg5[%c7_79, %290, %c0_80] : memref<8x8x8xf32, #tpu.memory_space<vmem>>, vector<1x1x8xf32>
    %292 = vector.shape_cast %291 : vector<1x1x8xf32> to vector<1x8xf32>
    %293 = vector.shape_cast %289 : vector<1x8xf32> to vector<1x1x8xf32>
    tpu.vector_store %arg5[%c7_79, %290, %c0_80], %293 {strides = array<i32>} : memref<8x8x8xf32, #tpu.memory_space<vmem>>, vector<1x1x8xf32>,
    %cst_81 = arith.constant 2.000000e-02 : f32
    %294 = vector.broadcast %cst_81 : f32 to vector<1x8xf32>
    %295 = arith.mulf %236, %294 : vector<1x8xf32>
    %296 = arith.addf %206, %295 : vector<1x8xf32>
    %cst_82 = arith.constant 2.000000e-02 : f32
    %297 = vector.broadcast %cst_82 : f32 to vector<1x8xf32>
    %298 = arith.mulf %239, %297 : vector<1x8xf32>
    %299 = arith.addf %209, %298 : vector<1x8xf32>
    %cst_83 = arith.constant 2.000000e-02 : f32
    %300 = vector.broadcast %cst_83 : f32 to vector<1x8xf32>
    %301 = arith.mulf %296, %300 : vector<1x8xf32>
    %302 = arith.addf %212, %301 : vector<1x8xf32>
    %cst_84 = arith.constant 2.000000e-02 : f32
    %303 = vector.broadcast %cst_84 : f32 to vector<1x8xf32>
    %304 = arith.mulf %299, %303 : vector<1x8xf32>
    %305 = arith.addf %215, %304 : vector<1x8xf32>
    %c3_i32 = arith.constant 3 : i32
    %306 = tpu.transpose %302, [1, 0] : vector<1x8xf32> -> vector<8x1xf32>
    %307 = vector.broadcast %306 : vector<8x1xf32> to vector<8x8xf32>
    %308 = vector.broadcast %302 : vector<1x8xf32> to vector<8x8xf32>
    %309 = arith.subf %307, %308 : vector<8x8xf32>
    %310 = tpu.transpose %305, [1, 0] : vector<1x8xf32> -> vector<8x1xf32>
    %311 = vector.broadcast %310 : vector<8x1xf32> to vector<8x8xf32>
    %312 = vector.broadcast %305 : vector<1x8xf32> to vector<8x8xf32>
    %313 = arith.subf %311, %312 : vector<8x8xf32>
    %314 = arith.mulf %309, %309 : vector<8x8xf32>
    %315 = arith.mulf %313, %313 : vector<8x8xf32>
    %316 = arith.addf %314, %315 : vector<8x8xf32>
    %317 = arith.addf %316, %26 : vector<8x8xf32>
    %318 = math.rsqrt %317 : vector<8x8xf32>
    %319 = arith.mulf %24, %318 : vector<8x8xf32>
    %320 = arith.mulf %319, %319 : vector<8x8xf32>
    %321 = arith.mulf %320, %319 : vector<8x8xf32>
    %322 = vector.broadcast %7 : vector<8x1xf32> to vector<8x8xf32>
    %323 = arith.mulf %322, %321 : vector<8x8xf32>
    %324 = arith.mulf %323, %309 : vector<8x8xf32>
    %cst_85 = arith.constant dense<0.000000e+00> : vector<8xf32>
    %325 = vector.multi_reduction <add>, %324, %cst_85 [0] : vector<8x8xf32> to vector<8xf32>
    %326 = vector.shape_cast %325 : vector<8xf32> to vector<1x8xf32>
    %327 = arith.mulf %323, %313 : vector<8x8xf32>
    %cst_86 = arith.constant dense<0.000000e+00> : vector<8xf32>
    %328 = vector.multi_reduction <add>, %327, %cst_86 [0] : vector<8x8xf32> to vector<8xf32>
    %329 = vector.shape_cast %328 : vector<8xf32> to vector<1x8xf32>
    %330 = arith.mulf %13, %319 : vector<8x8xf32>
    %331 = vector.shape_cast %330 : vector<8x8xf32> to vector<1x8x8xf32>
    %cst_87 = arith.constant dense<0.000000e+00> : vector<1xf32>
    %332 = vector.multi_reduction <add>, %331, %cst_87 [1, 2] : vector<1x8x8xf32> to vector<1xf32>
    %333 = vector.shape_cast %332 : vector<1xf32> to vector<1x1x1xf32>
    %334 = vector.extract %333[0, 0, 0] : f32 from vector<1x1x1xf32>
    %335 = vector.broadcast %334 : f32 to vector<1x1xf32>
    %336 = arith.mulf %296, %296 : vector<1x8xf32>
    %337 = arith.mulf %299, %299 : vector<1x8xf32>
    %338 = arith.addf %336, %337 : vector<1x8xf32>
    %339 = arith.mulf %4, %338 : vector<1x8xf32>
    %340 = vector.shape_cast %339 : vector<1x8xf32> to vector<1x1x8xf32>
    %cst_88 = arith.constant dense<0.000000e+00> : vector<1xf32>
    %341 = vector.multi_reduction <add>, %340, %cst_88 [1, 2] : vector<1x1x8xf32> to vector<1xf32>
    %342 = vector.shape_cast %341 : vector<1xf32> to vector<1x1x1xf32>
    %343 = vector.extract %342[0, 0, 0] : f32 from vector<1x1x1xf32>
    %344 = vector.broadcast %343 : f32 to vector<1x1xf32>
    %cst_89 = arith.constant 5.000000e-01 : f32
    %345 = vector.broadcast %cst_89 : f32 to vector<1x1xf32>
    %346 = arith.mulf %345, %344 : vector<1x1xf32>
    %347 = arith.addf %346, %335 : vector<1x1xf32>
    %c0_90 = arith.constant 0 : index
    %348 = arith.index_cast %c3_i32 : i32 to index
    %c0_91 = arith.constant 0 : index
    %349 = vector.load %arg5[%c0_90, %348, %c0_91] : memref<8x8x8xf32, #tpu.memory_space<vmem>>, vector<1x1x8xf32>
    %350 = vector.shape_cast %349 : vector<1x1x8xf32> to vector<1x8xf32>
    %351 = vector.shape_cast %302 : vector<1x8xf32> to vector<1x1x8xf32>
    tpu.vector_store %arg5[%c0_90, %348, %c0_91], %351 {strides = array<i32>} : memref<8x8x8xf32, #tpu.memory_space<vmem>>, vector<1x1x8xf32>,
    %c1_92 = arith.constant 1 : index
    %352 = arith.index_cast %c3_i32 : i32 to index
    %c0_93 = arith.constant 0 : index
    %353 = vector.load %arg5[%c1_92, %352, %c0_93] : memref<8x8x8xf32, #tpu.memory_space<vmem>>, vector<1x1x8xf32>
    %354 = vector.shape_cast %353 : vector<1x1x8xf32> to vector<1x8xf32>
    %355 = vector.shape_cast %305 : vector<1x8xf32> to vector<1x1x8xf32>
    tpu.vector_store %arg5[%c1_92, %352, %c0_93], %355 {strides = array<i32>} : memref<8x8x8xf32, #tpu.memory_space<vmem>>, vector<1x1x8xf32>,
    %c2_94 = arith.constant 2 : index
    %356 = arith.index_cast %c3_i32 : i32 to index
    %c0_95 = arith.constant 0 : index
    %357 = vector.load %arg5[%c2_94, %356, %c0_95] : memref<8x8x8xf32, #tpu.memory_space<vmem>>, vector<1x1x8xf32>
    %358 = vector.shape_cast %357 : vector<1x1x8xf32> to vector<1x8xf32>
    %359 = vector.shape_cast %296 : vector<1x8xf32> to vector<1x1x8xf32>
    tpu.vector_store %arg5[%c2_94, %356, %c0_95], %359 {strides = array<i32>} : memref<8x8x8xf32, #tpu.memory_space<vmem>>, vector<1x1x8xf32>,
    %c3_96 = arith.constant 3 : index
    %360 = arith.index_cast %c3_i32 : i32 to index
    %c0_97 = arith.constant 0 : index
    %361 = vector.load %arg5[%c3_96, %360, %c0_97] : memref<8x8x8xf32, #tpu.memory_space<vmem>>, vector<1x1x8xf32>
    %362 = vector.shape_cast %361 : vector<1x1x8xf32> to vector<1x8xf32>
    %363 = vector.shape_cast %299 : vector<1x8xf32> to vector<1x1x8xf32>
    tpu.vector_store %arg5[%c3_96, %360, %c0_97], %363 {strides = array<i32>} : memref<8x8x8xf32, #tpu.memory_space<vmem>>, vector<1x1x8xf32>,
    %c4_98 = arith.constant 4 : index
    %364 = arith.index_cast %c3_i32 : i32 to index
    %c0_99 = arith.constant 0 : index
    %365 = vector.load %arg5[%c4_98, %364, %c0_99] : memref<8x8x8xf32, #tpu.memory_space<vmem>>, vector<1x1x8xf32>
    %366 = vector.shape_cast %365 : vector<1x1x8xf32> to vector<1x8xf32>
    %367 = vector.shape_cast %326 : vector<1x8xf32> to vector<1x1x8xf32>
    tpu.vector_store %arg5[%c4_98, %364, %c0_99], %367 {strides = array<i32>} : memref<8x8x8xf32, #tpu.memory_space<vmem>>, vector<1x1x8xf32>,
    %c5_100 = arith.constant 5 : index
    %368 = arith.index_cast %c3_i32 : i32 to index
    %c0_101 = arith.constant 0 : index
    %369 = vector.load %arg5[%c5_100, %368, %c0_101] : memref<8x8x8xf32, #tpu.memory_space<vmem>>, vector<1x1x8xf32>
    %370 = vector.shape_cast %369 : vector<1x1x8xf32> to vector<1x8xf32>
    %371 = vector.shape_cast %329 : vector<1x8xf32> to vector<1x1x8xf32>
    tpu.vector_store %arg5[%c5_100, %368, %c0_101], %371 {strides = array<i32>} : memref<8x8x8xf32, #tpu.memory_space<vmem>>, vector<1x1x8xf32>,
    %372 = vector.shape_cast %347 : vector<1x1xf32> to vector<1x1xf32>
    %373 = vector.broadcast %372 : vector<1x1xf32> to vector<1x8xf32>
    %c6_102 = arith.constant 6 : index
    %374 = arith.index_cast %c3_i32 : i32 to index
    %c0_103 = arith.constant 0 : index
    %375 = vector.load %arg5[%c6_102, %374, %c0_103] : memref<8x8x8xf32, #tpu.memory_space<vmem>>, vector<1x1x8xf32>
    %376 = vector.shape_cast %375 : vector<1x1x8xf32> to vector<1x8xf32>
    %377 = vector.shape_cast %373 : vector<1x8xf32> to vector<1x1x8xf32>
    tpu.vector_store %arg5[%c6_102, %374, %c0_103], %377 {strides = array<i32>} : memref<8x8x8xf32, #tpu.memory_space<vmem>>, vector<1x1x8xf32>,
    %378 = vector.shape_cast %335 : vector<1x1xf32> to vector<1x1xf32>
    %379 = vector.broadcast %378 : vector<1x1xf32> to vector<1x8xf32>
    %c7_104 = arith.constant 7 : index
    %380 = arith.index_cast %c3_i32 : i32 to index
    %c0_105 = arith.constant 0 : index
    %381 = vector.load %arg5[%c7_104, %380, %c0_105] : memref<8x8x8xf32, #tpu.memory_space<vmem>>, vector<1x1x8xf32>
    %382 = vector.shape_cast %381 : vector<1x1x8xf32> to vector<1x8xf32>
    %383 = vector.shape_cast %379 : vector<1x8xf32> to vector<1x1x8xf32>
    tpu.vector_store %arg5[%c7_104, %380, %c0_105], %383 {strides = array<i32>} : memref<8x8x8xf32, #tpu.memory_space<vmem>>, vector<1x1x8xf32>,
    %cst_106 = arith.constant 2.000000e-02 : f32
    %384 = vector.broadcast %cst_106 : f32 to vector<1x8xf32>
    %385 = arith.mulf %326, %384 : vector<1x8xf32>
    %386 = arith.addf %296, %385 : vector<1x8xf32>
    %cst_107 = arith.constant 2.000000e-02 : f32
    %387 = vector.broadcast %cst_107 : f32 to vector<1x8xf32>
    %388 = arith.mulf %329, %387 : vector<1x8xf32>
    %389 = arith.addf %299, %388 : vector<1x8xf32>
    %cst_108 = arith.constant 2.000000e-02 : f32
    %390 = vector.broadcast %cst_108 : f32 to vector<1x8xf32>
    %391 = arith.mulf %386, %390 : vector<1x8xf32>
    %392 = arith.addf %302, %391 : vector<1x8xf32>
    %cst_109 = arith.constant 2.000000e-02 : f32
    %393 = vector.broadcast %cst_109 : f32 to vector<1x8xf32>
    %394 = arith.mulf %389, %393 : vector<1x8xf32>
    %395 = arith.addf %305, %394 : vector<1x8xf32>
    %c4_i32_110 = arith.constant 4 : i32
    %396 = tpu.transpose %392, [1, 0] : vector<1x8xf32> -> vector<8x1xf32>
    %397 = vector.broadcast %396 : vector<8x1xf32> to vector<8x8xf32>
    %398 = vector.broadcast %392 : vector<1x8xf32> to vector<8x8xf32>
    %399 = arith.subf %397, %398 : vector<8x8xf32>
    %400 = tpu.transpose %395, [1, 0] : vector<1x8xf32> -> vector<8x1xf32>
    %401 = vector.broadcast %400 : vector<8x1xf32> to vector<8x8xf32>
    %402 = vector.broadcast %395 : vector<1x8xf32> to vector<8x8xf32>
    %403 = arith.subf %401, %402 : vector<8x8xf32>
    %404 = arith.mulf %399, %399 : vector<8x8xf32>
    %405 = arith.mulf %403, %403 : vector<8x8xf32>
    %406 = arith.addf %404, %405 : vector<8x8xf32>
    %407 = arith.addf %406, %26 : vector<8x8xf32>
    %408 = math.rsqrt %407 : vector<8x8xf32>
    %409 = arith.mulf %24, %408 : vector<8x8xf32>
    %410 = arith.mulf %409, %409 : vector<8x8xf32>
    %411 = arith.mulf %410, %409 : vector<8x8xf32>
    %412 = vector.broadcast %7 : vector<8x1xf32> to vector<8x8xf32>
    %413 = arith.mulf %412, %411 : vector<8x8xf32>
    %414 = arith.mulf %413, %399 : vector<8x8xf32>
    %cst_111 = arith.constant dense<0.000000e+00> : vector<8xf32>
    %415 = vector.multi_reduction <add>, %414, %cst_111 [0] : vector<8x8xf32> to vector<8xf32>
    %416 = vector.shape_cast %415 : vector<8xf32> to vector<1x8xf32>
    %417 = arith.mulf %413, %403 : vector<8x8xf32>
    %cst_112 = arith.constant dense<0.000000e+00> : vector<8xf32>
    %418 = vector.multi_reduction <add>, %417, %cst_112 [0] : vector<8x8xf32> to vector<8xf32>
    %419 = vector.shape_cast %418 : vector<8xf32> to vector<1x8xf32>
    %420 = arith.mulf %13, %409 : vector<8x8xf32>
    %421 = vector.shape_cast %420 : vector<8x8xf32> to vector<1x8x8xf32>
    %cst_113 = arith.constant dense<0.000000e+00> : vector<1xf32>
    %422 = vector.multi_reduction <add>, %421, %cst_113 [1, 2] : vector<1x8x8xf32> to vector<1xf32>
    %423 = vector.shape_cast %422 : vector<1xf32> to vector<1x1x1xf32>
    %424 = vector.extract %423[0, 0, 0] : f32 from vector<1x1x1xf32>
    %425 = vector.broadcast %424 : f32 to vector<1x1xf32>
    %426 = arith.mulf %386, %386 : vector<1x8xf32>
    %427 = arith.mulf %389, %389 : vector<1x8xf32>
    %428 = arith.addf %426, %427 : vector<1x8xf32>
    %429 = arith.mulf %4, %428 : vector<1x8xf32>
    %430 = vector.shape_cast %429 : vector<1x8xf32> to vector<1x1x8xf32>
    %cst_114 = arith.constant dense<0.000000e+00> : vector<1xf32>
    %431 = vector.multi_reduction <add>, %430, %cst_114 [1, 2] : vector<1x1x8xf32> to vector<1xf32>
    %432 = vector.shape_cast %431 : vector<1xf32> to vector<1x1x1xf32>
    %433 = vector.extract %432[0, 0, 0] : f32 from vector<1x1x1xf32>
    %434 = vector.broadcast %433 : f32 to vector<1x1xf32>
    %cst_115 = arith.constant 5.000000e-01 : f32
    %435 = vector.broadcast %cst_115 : f32 to vector<1x1xf32>
    %436 = arith.mulf %435, %434 : vector<1x1xf32>
    %437 = arith.addf %436, %425 : vector<1x1xf32>
    %c0_116 = arith.constant 0 : index
    %438 = arith.index_cast %c4_i32_110 : i32 to index
    %c0_117 = arith.constant 0 : index
    %439 = vector.load %arg5[%c0_116, %438, %c0_117] : memref<8x8x8xf32, #tpu.memory_space<vmem>>, vector<1x1x8xf32>
    %440 = vector.shape_cast %439 : vector<1x1x8xf32> to vector<1x8xf32>
    %441 = vector.shape_cast %392 : vector<1x8xf32> to vector<1x1x8xf32>
    tpu.vector_store %arg5[%c0_116, %438, %c0_117], %441 {strides = array<i32>} : memref<8x8x8xf32, #tpu.memory_space<vmem>>, vector<1x1x8xf32>,
    %c1_118 = arith.constant 1 : index
    %442 = arith.index_cast %c4_i32_110 : i32 to index
    %c0_119 = arith.constant 0 : index
    %443 = vector.load %arg5[%c1_118, %442, %c0_119] : memref<8x8x8xf32, #tpu.memory_space<vmem>>, vector<1x1x8xf32>
    %444 = vector.shape_cast %443 : vector<1x1x8xf32> to vector<1x8xf32>
    %445 = vector.shape_cast %395 : vector<1x8xf32> to vector<1x1x8xf32>
    tpu.vector_store %arg5[%c1_118, %442, %c0_119], %445 {strides = array<i32>} : memref<8x8x8xf32, #tpu.memory_space<vmem>>, vector<1x1x8xf32>,
    %c2_120 = arith.constant 2 : index
    %446 = arith.index_cast %c4_i32_110 : i32 to index
    %c0_121 = arith.constant 0 : index
    %447 = vector.load %arg5[%c2_120, %446, %c0_121] : memref<8x8x8xf32, #tpu.memory_space<vmem>>, vector<1x1x8xf32>
    %448 = vector.shape_cast %447 : vector<1x1x8xf32> to vector<1x8xf32>
    %449 = vector.shape_cast %386 : vector<1x8xf32> to vector<1x1x8xf32>
    tpu.vector_store %arg5[%c2_120, %446, %c0_121], %449 {strides = array<i32>} : memref<8x8x8xf32, #tpu.memory_space<vmem>>, vector<1x1x8xf32>,
    %c3_122 = arith.constant 3 : index
    %450 = arith.index_cast %c4_i32_110 : i32 to index
    %c0_123 = arith.constant 0 : index
    %451 = vector.load %arg5[%c3_122, %450, %c0_123] : memref<8x8x8xf32, #tpu.memory_space<vmem>>, vector<1x1x8xf32>
    %452 = vector.shape_cast %451 : vector<1x1x8xf32> to vector<1x8xf32>
    %453 = vector.shape_cast %389 : vector<1x8xf32> to vector<1x1x8xf32>
    tpu.vector_store %arg5[%c3_122, %450, %c0_123], %453 {strides = array<i32>} : memref<8x8x8xf32, #tpu.memory_space<vmem>>, vector<1x1x8xf32>,
    %c4_124 = arith.constant 4 : index
    %454 = arith.index_cast %c4_i32_110 : i32 to index
    %c0_125 = arith.constant 0 : index
    %455 = vector.load %arg5[%c4_124, %454, %c0_125] : memref<8x8x8xf32, #tpu.memory_space<vmem>>, vector<1x1x8xf32>
    %456 = vector.shape_cast %455 : vector<1x1x8xf32> to vector<1x8xf32>
    %457 = vector.shape_cast %416 : vector<1x8xf32> to vector<1x1x8xf32>
    tpu.vector_store %arg5[%c4_124, %454, %c0_125], %457 {strides = array<i32>} : memref<8x8x8xf32, #tpu.memory_space<vmem>>, vector<1x1x8xf32>,
    %c5_126 = arith.constant 5 : index
    %458 = arith.index_cast %c4_i32_110 : i32 to index
    %c0_127 = arith.constant 0 : index
    %459 = vector.load %arg5[%c5_126, %458, %c0_127] : memref<8x8x8xf32, #tpu.memory_space<vmem>>, vector<1x1x8xf32>
    %460 = vector.shape_cast %459 : vector<1x1x8xf32> to vector<1x8xf32>
    %461 = vector.shape_cast %419 : vector<1x8xf32> to vector<1x1x8xf32>
    tpu.vector_store %arg5[%c5_126, %458, %c0_127], %461 {strides = array<i32>} : memref<8x8x8xf32, #tpu.memory_space<vmem>>, vector<1x1x8xf32>,
    %462 = vector.shape_cast %437 : vector<1x1xf32> to vector<1x1xf32>
    %463 = vector.broadcast %462 : vector<1x1xf32> to vector<1x8xf32>
    %c6_128 = arith.constant 6 : index
    %464 = arith.index_cast %c4_i32_110 : i32 to index
    %c0_129 = arith.constant 0 : index
    %465 = vector.load %arg5[%c6_128, %464, %c0_129] : memref<8x8x8xf32, #tpu.memory_space<vmem>>, vector<1x1x8xf32>
    %466 = vector.shape_cast %465 : vector<1x1x8xf32> to vector<1x8xf32>
    %467 = vector.shape_cast %463 : vector<1x8xf32> to vector<1x1x8xf32>
    tpu.vector_store %arg5[%c6_128, %464, %c0_129], %467 {strides = array<i32>} : memref<8x8x8xf32, #tpu.memory_space<vmem>>, vector<1x1x8xf32>,
    %468 = vector.shape_cast %425 : vector<1x1xf32> to vector<1x1xf32>
    %469 = vector.broadcast %468 : vector<1x1xf32> to vector<1x8xf32>
    %c7_130 = arith.constant 7 : index
    %470 = arith.index_cast %c4_i32_110 : i32 to index
    %c0_131 = arith.constant 0 : index
    %471 = vector.load %arg5[%c7_130, %470, %c0_131] : memref<8x8x8xf32, #tpu.memory_space<vmem>>, vector<1x1x8xf32>
    %472 = vector.shape_cast %471 : vector<1x1x8xf32> to vector<1x8xf32>
    %473 = vector.shape_cast %469 : vector<1x8xf32> to vector<1x1x8xf32>
    tpu.vector_store %arg5[%c7_130, %470, %c0_131], %473 {strides = array<i32>} : memref<8x8x8xf32, #tpu.memory_space<vmem>>, vector<1x1x8xf32>,
    %cst_132 = arith.constant 2.000000e-02 : f32
    %474 = vector.broadcast %cst_132 : f32 to vector<1x8xf32>
    %475 = arith.mulf %416, %474 : vector<1x8xf32>
    %476 = arith.addf %386, %475 : vector<1x8xf32>
    %cst_133 = arith.constant 2.000000e-02 : f32
    %477 = vector.broadcast %cst_133 : f32 to vector<1x8xf32>
    %478 = arith.mulf %419, %477 : vector<1x8xf32>
    %479 = arith.addf %389, %478 : vector<1x8xf32>
    %cst_134 = arith.constant 2.000000e-02 : f32
    %480 = vector.broadcast %cst_134 : f32 to vector<1x8xf32>
    %481 = arith.mulf %476, %480 : vector<1x8xf32>
    %482 = arith.addf %392, %481 : vector<1x8xf32>
    %cst_135 = arith.constant 2.000000e-02 : f32
    %483 = vector.broadcast %cst_135 : f32 to vector<1x8xf32>
    %484 = arith.mulf %479, %483 : vector<1x8xf32>
    %485 = arith.addf %395, %484 : vector<1x8xf32>
    %c5_i32 = arith.constant 5 : i32
    %486 = tpu.transpose %482, [1, 0] : vector<1x8xf32> -> vector<8x1xf32>
    %487 = vector.broadcast %486 : vector<8x1xf32> to vector<8x8xf32>
    %488 = vector.broadcast %482 : vector<1x8xf32> to vector<8x8xf32>
    %489 = arith.subf %487, %488 : vector<8x8xf32>
    %490 = tpu.transpose %485, [1, 0] : vector<1x8xf32> -> vector<8x1xf32>
    %491 = vector.broadcast %490 : vector<8x1xf32> to vector<8x8xf32>
    %492 = vector.broadcast %485 : vector<1x8xf32> to vector<8x8xf32>
    %493 = arith.subf %491, %492 : vector<8x8xf32>
    %494 = arith.mulf %489, %489 : vector<8x8xf32>
    %495 = arith.mulf %493, %493 : vector<8x8xf32>
    %496 = arith.addf %494, %495 : vector<8x8xf32>
    %497 = arith.addf %496, %26 : vector<8x8xf32>
    %498 = math.rsqrt %497 : vector<8x8xf32>
    %499 = arith.mulf %24, %498 : vector<8x8xf32>
    %500 = arith.mulf %499, %499 : vector<8x8xf32>
    %501 = arith.mulf %500, %499 : vector<8x8xf32>
    %502 = vector.broadcast %7 : vector<8x1xf32> to vector<8x8xf32>
    %503 = arith.mulf %502, %501 : vector<8x8xf32>
    %504 = arith.mulf %503, %489 : vector<8x8xf32>
    %cst_136 = arith.constant dense<0.000000e+00> : vector<8xf32>
    %505 = vector.multi_reduction <add>, %504, %cst_136 [0] : vector<8x8xf32> to vector<8xf32>
    %506 = vector.shape_cast %505 : vector<8xf32> to vector<1x8xf32>
    %507 = arith.mulf %503, %493 : vector<8x8xf32>
    %cst_137 = arith.constant dense<0.000000e+00> : vector<8xf32>
    %508 = vector.multi_reduction <add>, %507, %cst_137 [0] : vector<8x8xf32> to vector<8xf32>
    %509 = vector.shape_cast %508 : vector<8xf32> to vector<1x8xf32>
    %510 = arith.mulf %13, %499 : vector<8x8xf32>
    %511 = vector.shape_cast %510 : vector<8x8xf32> to vector<1x8x8xf32>
    %cst_138 = arith.constant dense<0.000000e+00> : vector<1xf32>
    %512 = vector.multi_reduction <add>, %511, %cst_138 [1, 2] : vector<1x8x8xf32> to vector<1xf32>
    %513 = vector.shape_cast %512 : vector<1xf32> to vector<1x1x1xf32>
    %514 = vector.extract %513[0, 0, 0] : f32 from vector<1x1x1xf32>
    %515 = vector.broadcast %514 : f32 to vector<1x1xf32>
    %516 = arith.mulf %476, %476 : vector<1x8xf32>
    %517 = arith.mulf %479, %479 : vector<1x8xf32>
    %518 = arith.addf %516, %517 : vector<1x8xf32>
    %519 = arith.mulf %4, %518 : vector<1x8xf32>
    %520 = vector.shape_cast %519 : vector<1x8xf32> to vector<1x1x8xf32>
    %cst_139 = arith.constant dense<0.000000e+00> : vector<1xf32>
    %521 = vector.multi_reduction <add>, %520, %cst_139 [1, 2] : vector<1x1x8xf32> to vector<1xf32>
    %522 = vector.shape_cast %521 : vector<1xf32> to vector<1x1x1xf32>
    %523 = vector.extract %522[0, 0, 0] : f32 from vector<1x1x1xf32>
    %524 = vector.broadcast %523 : f32 to vector<1x1xf32>
    %cst_140 = arith.constant 5.000000e-01 : f32
    %525 = vector.broadcast %cst_140 : f32 to vector<1x1xf32>
    %526 = arith.mulf %525, %524 : vector<1x1xf32>
    %527 = arith.addf %526, %515 : vector<1x1xf32>
    %c0_141 = arith.constant 0 : index
    %528 = arith.index_cast %c5_i32 : i32 to index
    %c0_142 = arith.constant 0 : index
    %529 = vector.load %arg5[%c0_141, %528, %c0_142] : memref<8x8x8xf32, #tpu.memory_space<vmem>>, vector<1x1x8xf32>
    %530 = vector.shape_cast %529 : vector<1x1x8xf32> to vector<1x8xf32>
    %531 = vector.shape_cast %482 : vector<1x8xf32> to vector<1x1x8xf32>
    tpu.vector_store %arg5[%c0_141, %528, %c0_142], %531 {strides = array<i32>} : memref<8x8x8xf32, #tpu.memory_space<vmem>>, vector<1x1x8xf32>,
    %c1_143 = arith.constant 1 : index
    %532 = arith.index_cast %c5_i32 : i32 to index
    %c0_144 = arith.constant 0 : index
    %533 = vector.load %arg5[%c1_143, %532, %c0_144] : memref<8x8x8xf32, #tpu.memory_space<vmem>>, vector<1x1x8xf32>
    %534 = vector.shape_cast %533 : vector<1x1x8xf32> to vector<1x8xf32>
    %535 = vector.shape_cast %485 : vector<1x8xf32> to vector<1x1x8xf32>
    tpu.vector_store %arg5[%c1_143, %532, %c0_144], %535 {strides = array<i32>} : memref<8x8x8xf32, #tpu.memory_space<vmem>>, vector<1x1x8xf32>,
    %c2_145 = arith.constant 2 : index
    %536 = arith.index_cast %c5_i32 : i32 to index
    %c0_146 = arith.constant 0 : index
    %537 = vector.load %arg5[%c2_145, %536, %c0_146] : memref<8x8x8xf32, #tpu.memory_space<vmem>>, vector<1x1x8xf32>
    %538 = vector.shape_cast %537 : vector<1x1x8xf32> to vector<1x8xf32>
    %539 = vector.shape_cast %476 : vector<1x8xf32> to vector<1x1x8xf32>
    tpu.vector_store %arg5[%c2_145, %536, %c0_146], %539 {strides = array<i32>} : memref<8x8x8xf32, #tpu.memory_space<vmem>>, vector<1x1x8xf32>,
    %c3_147 = arith.constant 3 : index
    %540 = arith.index_cast %c5_i32 : i32 to index
    %c0_148 = arith.constant 0 : index
    %541 = vector.load %arg5[%c3_147, %540, %c0_148] : memref<8x8x8xf32, #tpu.memory_space<vmem>>, vector<1x1x8xf32>
    %542 = vector.shape_cast %541 : vector<1x1x8xf32> to vector<1x8xf32>
    %543 = vector.shape_cast %479 : vector<1x8xf32> to vector<1x1x8xf32>
    tpu.vector_store %arg5[%c3_147, %540, %c0_148], %543 {strides = array<i32>} : memref<8x8x8xf32, #tpu.memory_space<vmem>>, vector<1x1x8xf32>,
    %c4_149 = arith.constant 4 : index
    %544 = arith.index_cast %c5_i32 : i32 to index
    %c0_150 = arith.constant 0 : index
    %545 = vector.load %arg5[%c4_149, %544, %c0_150] : memref<8x8x8xf32, #tpu.memory_space<vmem>>, vector<1x1x8xf32>
    %546 = vector.shape_cast %545 : vector<1x1x8xf32> to vector<1x8xf32>
    %547 = vector.shape_cast %506 : vector<1x8xf32> to vector<1x1x8xf32>
    tpu.vector_store %arg5[%c4_149, %544, %c0_150], %547 {strides = array<i32>} : memref<8x8x8xf32, #tpu.memory_space<vmem>>, vector<1x1x8xf32>,
    %c5_151 = arith.constant 5 : index
    %548 = arith.index_cast %c5_i32 : i32 to index
    %c0_152 = arith.constant 0 : index
    %549 = vector.load %arg5[%c5_151, %548, %c0_152] : memref<8x8x8xf32, #tpu.memory_space<vmem>>, vector<1x1x8xf32>
    %550 = vector.shape_cast %549 : vector<1x1x8xf32> to vector<1x8xf32>
    %551 = vector.shape_cast %509 : vector<1x8xf32> to vector<1x1x8xf32>
    tpu.vector_store %arg5[%c5_151, %548, %c0_152], %551 {strides = array<i32>} : memref<8x8x8xf32, #tpu.memory_space<vmem>>, vector<1x1x8xf32>,
    %552 = vector.shape_cast %527 : vector<1x1xf32> to vector<1x1xf32>
    %553 = vector.broadcast %552 : vector<1x1xf32> to vector<1x8xf32>
    %c6_153 = arith.constant 6 : index
    %554 = arith.index_cast %c5_i32 : i32 to index
    %c0_154 = arith.constant 0 : index
    %555 = vector.load %arg5[%c6_153, %554, %c0_154] : memref<8x8x8xf32, #tpu.memory_space<vmem>>, vector<1x1x8xf32>
    %556 = vector.shape_cast %555 : vector<1x1x8xf32> to vector<1x8xf32>
    %557 = vector.shape_cast %553 : vector<1x8xf32> to vector<1x1x8xf32>
    tpu.vector_store %arg5[%c6_153, %554, %c0_154], %557 {strides = array<i32>} : memref<8x8x8xf32, #tpu.memory_space<vmem>>, vector<1x1x8xf32>,
    %558 = vector.shape_cast %515 : vector<1x1xf32> to vector<1x1xf32>
    %559 = vector.broadcast %558 : vector<1x1xf32> to vector<1x8xf32>
    %c7_155 = arith.constant 7 : index
    %560 = arith.index_cast %c5_i32 : i32 to index
    %c0_156 = arith.constant 0 : index
    %561 = vector.load %arg5[%c7_155, %560, %c0_156] : memref<8x8x8xf32, #tpu.memory_space<vmem>>, vector<1x1x8xf32>
    %562 = vector.shape_cast %561 : vector<1x1x8xf32> to vector<1x8xf32>
    %563 = vector.shape_cast %559 : vector<1x8xf32> to vector<1x1x8xf32>
    tpu.vector_store %arg5[%c7_155, %560, %c0_156], %563 {strides = array<i32>} : memref<8x8x8xf32, #tpu.memory_space<vmem>>, vector<1x1x8xf32>,
    %cst_157 = arith.constant 2.000000e-02 : f32
    %564 = vector.broadcast %cst_157 : f32 to vector<1x8xf32>
    %565 = arith.mulf %506, %564 : vector<1x8xf32>
    %566 = arith.addf %476, %565 : vector<1x8xf32>
    %cst_158 = arith.constant 2.000000e-02 : f32
    %567 = vector.broadcast %cst_158 : f32 to vector<1x8xf32>
    %568 = arith.mulf %509, %567 : vector<1x8xf32>
    %569 = arith.addf %479, %568 : vector<1x8xf32>
    %cst_159 = arith.constant 2.000000e-02 : f32
    %570 = vector.broadcast %cst_159 : f32 to vector<1x8xf32>
    %571 = arith.mulf %566, %570 : vector<1x8xf32>
    %572 = arith.addf %482, %571 : vector<1x8xf32>
    %cst_160 = arith.constant 2.000000e-02 : f32
    %573 = vector.broadcast %cst_160 : f32 to vector<1x8xf32>
    %574 = arith.mulf %569, %573 : vector<1x8xf32>
    %575 = arith.addf %485, %574 : vector<1x8xf32>
    %c6_i32 = arith.constant 6 : i32
    %576 = tpu.transpose %572, [1, 0] : vector<1x8xf32> -> vector<8x1xf32>
    %577 = vector.broadcast %576 : vector<8x1xf32> to vector<8x8xf32>
    %578 = vector.broadcast %572 : vector<1x8xf32> to vector<8x8xf32>
    %579 = arith.subf %577, %578 : vector<8x8xf32>
    %580 = tpu.transpose %575, [1, 0] : vector<1x8xf32> -> vector<8x1xf32>
    %581 = vector.broadcast %580 : vector<8x1xf32> to vector<8x8xf32>
    %582 = vector.broadcast %575 : vector<1x8xf32> to vector<8x8xf32>
    %583 = arith.subf %581, %582 : vector<8x8xf32>
    %584 = arith.mulf %579, %579 : vector<8x8xf32>
    %585 = arith.mulf %583, %583 : vector<8x8xf32>
    %586 = arith.addf %584, %585 : vector<8x8xf32>
    %587 = arith.addf %586, %26 : vector<8x8xf32>
    %588 = math.rsqrt %587 : vector<8x8xf32>
    %589 = arith.mulf %24, %588 : vector<8x8xf32>
    %590 = arith.mulf %589, %589 : vector<8x8xf32>
    %591 = arith.mulf %590, %589 : vector<8x8xf32>
    %592 = vector.broadcast %7 : vector<8x1xf32> to vector<8x8xf32>
    %593 = arith.mulf %592, %591 : vector<8x8xf32>
    %594 = arith.mulf %593, %579 : vector<8x8xf32>
    %cst_161 = arith.constant dense<0.000000e+00> : vector<8xf32>
    %595 = vector.multi_reduction <add>, %594, %cst_161 [0] : vector<8x8xf32> to vector<8xf32>
    %596 = vector.shape_cast %595 : vector<8xf32> to vector<1x8xf32>
    %597 = arith.mulf %593, %583 : vector<8x8xf32>
    %cst_162 = arith.constant dense<0.000000e+00> : vector<8xf32>
    %598 = vector.multi_reduction <add>, %597, %cst_162 [0] : vector<8x8xf32> to vector<8xf32>
    %599 = vector.shape_cast %598 : vector<8xf32> to vector<1x8xf32>
    %600 = arith.mulf %13, %589 : vector<8x8xf32>
    %601 = vector.shape_cast %600 : vector<8x8xf32> to vector<1x8x8xf32>
    %cst_163 = arith.constant dense<0.000000e+00> : vector<1xf32>
    %602 = vector.multi_reduction <add>, %601, %cst_163 [1, 2] : vector<1x8x8xf32> to vector<1xf32>
    %603 = vector.shape_cast %602 : vector<1xf32> to vector<1x1x1xf32>
    %604 = vector.extract %603[0, 0, 0] : f32 from vector<1x1x1xf32>
    %605 = vector.broadcast %604 : f32 to vector<1x1xf32>
    %606 = arith.mulf %566, %566 : vector<1x8xf32>
    %607 = arith.mulf %569, %569 : vector<1x8xf32>
    %608 = arith.addf %606, %607 : vector<1x8xf32>
    %609 = arith.mulf %4, %608 : vector<1x8xf32>
    %610 = vector.shape_cast %609 : vector<1x8xf32> to vector<1x1x8xf32>
    %cst_164 = arith.constant dense<0.000000e+00> : vector<1xf32>
    %611 = vector.multi_reduction <add>, %610, %cst_164 [1, 2] : vector<1x1x8xf32> to vector<1xf32>
    %612 = vector.shape_cast %611 : vector<1xf32> to vector<1x1x1xf32>
    %613 = vector.extract %612[0, 0, 0] : f32 from vector<1x1x1xf32>
    %614 = vector.broadcast %613 : f32 to vector<1x1xf32>
    %cst_165 = arith.constant 5.000000e-01 : f32
    %615 = vector.broadcast %cst_165 : f32 to vector<1x1xf32>
    %616 = arith.mulf %615, %614 : vector<1x1xf32>
    %617 = arith.addf %616, %605 : vector<1x1xf32>
    %c0_166 = arith.constant 0 : index
    %618 = arith.index_cast %c6_i32 : i32 to index
    %c0_167 = arith.constant 0 : index
    %619 = vector.load %arg5[%c0_166, %618, %c0_167] : memref<8x8x8xf32, #tpu.memory_space<vmem>>, vector<1x1x8xf32>
    %620 = vector.shape_cast %619 : vector<1x1x8xf32> to vector<1x8xf32>
    %621 = vector.shape_cast %572 : vector<1x8xf32> to vector<1x1x8xf32>
    tpu.vector_store %arg5[%c0_166, %618, %c0_167], %621 {strides = array<i32>} : memref<8x8x8xf32, #tpu.memory_space<vmem>>, vector<1x1x8xf32>,
    %c1_168 = arith.constant 1 : index
    %622 = arith.index_cast %c6_i32 : i32 to index
    %c0_169 = arith.constant 0 : index
    %623 = vector.load %arg5[%c1_168, %622, %c0_169] : memref<8x8x8xf32, #tpu.memory_space<vmem>>, vector<1x1x8xf32>
    %624 = vector.shape_cast %623 : vector<1x1x8xf32> to vector<1x8xf32>
    %625 = vector.shape_cast %575 : vector<1x8xf32> to vector<1x1x8xf32>
    tpu.vector_store %arg5[%c1_168, %622, %c0_169], %625 {strides = array<i32>} : memref<8x8x8xf32, #tpu.memory_space<vmem>>, vector<1x1x8xf32>,
    %c2_170 = arith.constant 2 : index
    %626 = arith.index_cast %c6_i32 : i32 to index
    %c0_171 = arith.constant 0 : index
    %627 = vector.load %arg5[%c2_170, %626, %c0_171] : memref<8x8x8xf32, #tpu.memory_space<vmem>>, vector<1x1x8xf32>
    %628 = vector.shape_cast %627 : vector<1x1x8xf32> to vector<1x8xf32>
    %629 = vector.shape_cast %566 : vector<1x8xf32> to vector<1x1x8xf32>
    tpu.vector_store %arg5[%c2_170, %626, %c0_171], %629 {strides = array<i32>} : memref<8x8x8xf32, #tpu.memory_space<vmem>>, vector<1x1x8xf32>,
    %c3_172 = arith.constant 3 : index
    %630 = arith.index_cast %c6_i32 : i32 to index
    %c0_173 = arith.constant 0 : index
    %631 = vector.load %arg5[%c3_172, %630, %c0_173] : memref<8x8x8xf32, #tpu.memory_space<vmem>>, vector<1x1x8xf32>
    %632 = vector.shape_cast %631 : vector<1x1x8xf32> to vector<1x8xf32>
    %633 = vector.shape_cast %569 : vector<1x8xf32> to vector<1x1x8xf32>
    tpu.vector_store %arg5[%c3_172, %630, %c0_173], %633 {strides = array<i32>} : memref<8x8x8xf32, #tpu.memory_space<vmem>>, vector<1x1x8xf32>,
    %c4_174 = arith.constant 4 : index
    %634 = arith.index_cast %c6_i32 : i32 to index
    %c0_175 = arith.constant 0 : index
    %635 = vector.load %arg5[%c4_174, %634, %c0_175] : memref<8x8x8xf32, #tpu.memory_space<vmem>>, vector<1x1x8xf32>
    %636 = vector.shape_cast %635 : vector<1x1x8xf32> to vector<1x8xf32>
    %637 = vector.shape_cast %596 : vector<1x8xf32> to vector<1x1x8xf32>
    tpu.vector_store %arg5[%c4_174, %634, %c0_175], %637 {strides = array<i32>} : memref<8x8x8xf32, #tpu.memory_space<vmem>>, vector<1x1x8xf32>,
    %c5_176 = arith.constant 5 : index
    %638 = arith.index_cast %c6_i32 : i32 to index
    %c0_177 = arith.constant 0 : index
    %639 = vector.load %arg5[%c5_176, %638, %c0_177] : memref<8x8x8xf32, #tpu.memory_space<vmem>>, vector<1x1x8xf32>
    %640 = vector.shape_cast %639 : vector<1x1x8xf32> to vector<1x8xf32>
    %641 = vector.shape_cast %599 : vector<1x8xf32> to vector<1x1x8xf32>
    tpu.vector_store %arg5[%c5_176, %638, %c0_177], %641 {strides = array<i32>} : memref<8x8x8xf32, #tpu.memory_space<vmem>>, vector<1x1x8xf32>,
    %642 = vector.shape_cast %617 : vector<1x1xf32> to vector<1x1xf32>
    %643 = vector.broadcast %642 : vector<1x1xf32> to vector<1x8xf32>
    %c6_178 = arith.constant 6 : index
    %644 = arith.index_cast %c6_i32 : i32 to index
    %c0_179 = arith.constant 0 : index
    %645 = vector.load %arg5[%c6_178, %644, %c0_179] : memref<8x8x8xf32, #tpu.memory_space<vmem>>, vector<1x1x8xf32>
    %646 = vector.shape_cast %645 : vector<1x1x8xf32> to vector<1x8xf32>
    %647 = vector.shape_cast %643 : vector<1x8xf32> to vector<1x1x8xf32>
    tpu.vector_store %arg5[%c6_178, %644, %c0_179], %647 {strides = array<i32>} : memref<8x8x8xf32, #tpu.memory_space<vmem>>, vector<1x1x8xf32>,
    %648 = vector.shape_cast %605 : vector<1x1xf32> to vector<1x1xf32>
    %649 = vector.broadcast %648 : vector<1x1xf32> to vector<1x8xf32>
    %c7_180 = arith.constant 7 : index
    %650 = arith.index_cast %c6_i32 : i32 to index
    %c0_181 = arith.constant 0 : index
    %651 = vector.load %arg5[%c7_180, %650, %c0_181] : memref<8x8x8xf32, #tpu.memory_space<vmem>>, vector<1x1x8xf32>
    %652 = vector.shape_cast %651 : vector<1x1x8xf32> to vector<1x8xf32>
    %653 = vector.shape_cast %649 : vector<1x8xf32> to vector<1x1x8xf32>
    tpu.vector_store %arg5[%c7_180, %650, %c0_181], %653 {strides = array<i32>} : memref<8x8x8xf32, #tpu.memory_space<vmem>>, vector<1x1x8xf32>,
    %cst_182 = arith.constant 2.000000e-02 : f32
    %654 = vector.broadcast %cst_182 : f32 to vector<1x8xf32>
    %655 = arith.mulf %596, %654 : vector<1x8xf32>
    %656 = arith.addf %566, %655 : vector<1x8xf32>
    %cst_183 = arith.constant 2.000000e-02 : f32
    %657 = vector.broadcast %cst_183 : f32 to vector<1x8xf32>
    %658 = arith.mulf %599, %657 : vector<1x8xf32>
    %659 = arith.addf %569, %658 : vector<1x8xf32>
    %cst_184 = arith.constant 2.000000e-02 : f32
    %660 = vector.broadcast %cst_184 : f32 to vector<1x8xf32>
    %661 = arith.mulf %656, %660 : vector<1x8xf32>
    %662 = arith.addf %572, %661 : vector<1x8xf32>
    %cst_185 = arith.constant 2.000000e-02 : f32
    %663 = vector.broadcast %cst_185 : f32 to vector<1x8xf32>
    %664 = arith.mulf %659, %663 : vector<1x8xf32>
    %665 = arith.addf %575, %664 : vector<1x8xf32>
    %c7_i32 = arith.constant 7 : i32
    %666 = tpu.transpose %662, [1, 0] : vector<1x8xf32> -> vector<8x1xf32>
    %667 = vector.broadcast %666 : vector<8x1xf32> to vector<8x8xf32>
    %668 = vector.broadcast %662 : vector<1x8xf32> to vector<8x8xf32>
    %669 = arith.subf %667, %668 : vector<8x8xf32>
    %670 = tpu.transpose %665, [1, 0] : vector<1x8xf32> -> vector<8x1xf32>
    %671 = vector.broadcast %670 : vector<8x1xf32> to vector<8x8xf32>
    %672 = vector.broadcast %665 : vector<1x8xf32> to vector<8x8xf32>
    %673 = arith.subf %671, %672 : vector<8x8xf32>
    %674 = arith.mulf %669, %669 : vector<8x8xf32>
    %675 = arith.mulf %673, %673 : vector<8x8xf32>
    %676 = arith.addf %674, %675 : vector<8x8xf32>
    %677 = arith.addf %676, %26 : vector<8x8xf32>
    %678 = math.rsqrt %677 : vector<8x8xf32>
    %679 = arith.mulf %24, %678 : vector<8x8xf32>
    %680 = arith.mulf %679, %679 : vector<8x8xf32>
    %681 = arith.mulf %680, %679 : vector<8x8xf32>
    %682 = vector.broadcast %7 : vector<8x1xf32> to vector<8x8xf32>
    %683 = arith.mulf %682, %681 : vector<8x8xf32>
    %684 = arith.mulf %683, %669 : vector<8x8xf32>
    %cst_186 = arith.constant dense<0.000000e+00> : vector<8xf32>
    %685 = vector.multi_reduction <add>, %684, %cst_186 [0] : vector<8x8xf32> to vector<8xf32>
    %686 = vector.shape_cast %685 : vector<8xf32> to vector<1x8xf32>
    %687 = arith.mulf %683, %673 : vector<8x8xf32>
    %cst_187 = arith.constant dense<0.000000e+00> : vector<8xf32>
    %688 = vector.multi_reduction <add>, %687, %cst_187 [0] : vector<8x8xf32> to vector<8xf32>
    %689 = vector.shape_cast %688 : vector<8xf32> to vector<1x8xf32>
    %690 = arith.mulf %13, %679 : vector<8x8xf32>
    %691 = vector.shape_cast %690 : vector<8x8xf32> to vector<1x8x8xf32>
    %cst_188 = arith.constant dense<0.000000e+00> : vector<1xf32>
    %692 = vector.multi_reduction <add>, %691, %cst_188 [1, 2] : vector<1x8x8xf32> to vector<1xf32>
    %693 = vector.shape_cast %692 : vector<1xf32> to vector<1x1x1xf32>
    %694 = vector.extract %693[0, 0, 0] : f32 from vector<1x1x1xf32>
    %695 = vector.broadcast %694 : f32 to vector<1x1xf32>
    %696 = arith.mulf %656, %656 : vector<1x8xf32>
    %697 = arith.mulf %659, %659 : vector<1x8xf32>
    %698 = arith.addf %696, %697 : vector<1x8xf32>
    %699 = arith.mulf %4, %698 : vector<1x8xf32>
    %700 = vector.shape_cast %699 : vector<1x8xf32> to vector<1x1x8xf32>
    %cst_189 = arith.constant dense<0.000000e+00> : vector<1xf32>
    %701 = vector.multi_reduction <add>, %700, %cst_189 [1, 2] : vector<1x1x8xf32> to vector<1xf32>
    %702 = vector.shape_cast %701 : vector<1xf32> to vector<1x1x1xf32>
    %703 = vector.extract %702[0, 0, 0] : f32 from vector<1x1x1xf32>
    %704 = vector.broadcast %703 : f32 to vector<1x1xf32>
    %cst_190 = arith.constant 5.000000e-01 : f32
    %705 = vector.broadcast %cst_190 : f32 to vector<1x1xf32>
    %706 = arith.mulf %705, %704 : vector<1x1xf32>
    %707 = arith.addf %706, %695 : vector<1x1xf32>
    %c0_191 = arith.constant 0 : index
    %708 = arith.index_cast %c7_i32 : i32 to index
    %c0_192 = arith.constant 0 : index
    %709 = vector.load %arg5[%c0_191, %708, %c0_192] : memref<8x8x8xf32, #tpu.memory_space<vmem>>, vector<1x1x8xf32>
    %710 = vector.shape_cast %709 : vector<1x1x8xf32> to vector<1x8xf32>
    %711 = vector.shape_cast %662 : vector<1x8xf32> to vector<1x1x8xf32>
    tpu.vector_store %arg5[%c0_191, %708, %c0_192], %711 {strides = array<i32>} : memref<8x8x8xf32, #tpu.memory_space<vmem>>, vector<1x1x8xf32>,
    %c1_193 = arith.constant 1 : index
    %712 = arith.index_cast %c7_i32 : i32 to index
    %c0_194 = arith.constant 0 : index
    %713 = vector.load %arg5[%c1_193, %712, %c0_194] : memref<8x8x8xf32, #tpu.memory_space<vmem>>, vector<1x1x8xf32>
    %714 = vector.shape_cast %713 : vector<1x1x8xf32> to vector<1x8xf32>
    %715 = vector.shape_cast %665 : vector<1x8xf32> to vector<1x1x8xf32>
    tpu.vector_store %arg5[%c1_193, %712, %c0_194], %715 {strides = array<i32>} : memref<8x8x8xf32, #tpu.memory_space<vmem>>, vector<1x1x8xf32>,
    %c2_195 = arith.constant 2 : index
    %716 = arith.index_cast %c7_i32 : i32 to index
    %c0_196 = arith.constant 0 : index
    %717 = vector.load %arg5[%c2_195, %716, %c0_196] : memref<8x8x8xf32, #tpu.memory_space<vmem>>, vector<1x1x8xf32>
    %718 = vector.shape_cast %717 : vector<1x1x8xf32> to vector<1x8xf32>
    %719 = vector.shape_cast %656 : vector<1x8xf32> to vector<1x1x8xf32>
    tpu.vector_store %arg5[%c2_195, %716, %c0_196], %719 {strides = array<i32>} : memref<8x8x8xf32, #tpu.memory_space<vmem>>, vector<1x1x8xf32>,
    %c3_197 = arith.constant 3 : index
    %720 = arith.index_cast %c7_i32 : i32 to index
    %c0_198 = arith.constant 0 : index
    %721 = vector.load %arg5[%c3_197, %720, %c0_198] : memref<8x8x8xf32, #tpu.memory_space<vmem>>, vector<1x1x8xf32>
    %722 = vector.shape_cast %721 : vector<1x1x8xf32> to vector<1x8xf32>
    %723 = vector.shape_cast %659 : vector<1x8xf32> to vector<1x1x8xf32>
    tpu.vector_store %arg5[%c3_197, %720, %c0_198], %723 {strides = array<i32>} : memref<8x8x8xf32, #tpu.memory_space<vmem>>, vector<1x1x8xf32>,
    %c4_199 = arith.constant 4 : index
    %724 = arith.index_cast %c7_i32 : i32 to index
    %c0_200 = arith.constant 0 : index
    %725 = vector.load %arg5[%c4_199, %724, %c0_200] : memref<8x8x8xf32, #tpu.memory_space<vmem>>, vector<1x1x8xf32>
    %726 = vector.shape_cast %725 : vector<1x1x8xf32> to vector<1x8xf32>
    %727 = vector.shape_cast %686 : vector<1x8xf32> to vector<1x1x8xf32>
    tpu.vector_store %arg5[%c4_199, %724, %c0_200], %727 {strides = array<i32>} : memref<8x8x8xf32, #tpu.memory_space<vmem>>, vector<1x1x8xf32>,
    %c5_201 = arith.constant 5 : index
    %728 = arith.index_cast %c7_i32 : i32 to index
    %c0_202 = arith.constant 0 : index
    %729 = vector.load %arg5[%c5_201, %728, %c0_202] : memref<8x8x8xf32, #tpu.memory_space<vmem>>, vector<1x1x8xf32>
    %730 = vector.shape_cast %729 : vector<1x1x8xf32> to vector<1x8xf32>
    %731 = vector.shape_cast %689 : vector<1x8xf32> to vector<1x1x8xf32>
    tpu.vector_store %arg5[%c5_201, %728, %c0_202], %731 {strides = array<i32>} : memref<8x8x8xf32, #tpu.memory_space<vmem>>, vector<1x1x8xf32>,
    %732 = vector.shape_cast %707 : vector<1x1xf32> to vector<1x1xf32>
    %733 = vector.broadcast %732 : vector<1x1xf32> to vector<1x8xf32>
    %c6_203 = arith.constant 6 : index
    %734 = arith.index_cast %c7_i32 : i32 to index
    %c0_204 = arith.constant 0 : index
    %735 = vector.load %arg5[%c6_203, %734, %c0_204] : memref<8x8x8xf32, #tpu.memory_space<vmem>>, vector<1x1x8xf32>
    %736 = vector.shape_cast %735 : vector<1x1x8xf32> to vector<1x8xf32>
    %737 = vector.shape_cast %733 : vector<1x8xf32> to vector<1x1x8xf32>
    tpu.vector_store %arg5[%c6_203, %734, %c0_204], %737 {strides = array<i32>} : memref<8x8x8xf32, #tpu.memory_space<vmem>>, vector<1x1x8xf32>,
    %738 = vector.shape_cast %695 : vector<1x1xf32> to vector<1x1xf32>
    %739 = vector.broadcast %738 : vector<1x1xf32> to vector<1x8xf32>
    %c7_205 = arith.constant 7 : index
    %740 = arith.index_cast %c7_i32 : i32 to index
    %c0_206 = arith.constant 0 : index
    %741 = vector.load %arg5[%c7_205, %740, %c0_206] : memref<8x8x8xf32, #tpu.memory_space<vmem>>, vector<1x1x8xf32>
    %742 = vector.shape_cast %741 : vector<1x1x8xf32> to vector<1x8xf32>
    %743 = vector.shape_cast %739 : vector<1x8xf32> to vector<1x1x8xf32>
    tpu.vector_store %arg5[%c7_205, %740, %c0_206], %743 {strides = array<i32>} : memref<8x8x8xf32, #tpu.memory_space<vmem>>, vector<1x1x8xf32>,
    %cst_207 = arith.constant 2.000000e-02 : f32
    %744 = vector.broadcast %cst_207 : f32 to vector<1x8xf32>
    %745 = arith.mulf %686, %744 : vector<1x8xf32>
    %746 = arith.addf %656, %745 : vector<1x8xf32>
    %cst_208 = arith.constant 2.000000e-02 : f32
    %747 = vector.broadcast %cst_208 : f32 to vector<1x8xf32>
    %748 = arith.mulf %689, %747 : vector<1x8xf32>
    %749 = arith.addf %659, %748 : vector<1x8xf32>
    %cst_209 = arith.constant 2.000000e-02 : f32
    %750 = vector.broadcast %cst_209 : f32 to vector<1x8xf32>
    %751 = arith.mulf %746, %750 : vector<1x8xf32>
    %752 = arith.addf %662, %751 : vector<1x8xf32>
    %cst_210 = arith.constant 2.000000e-02 : f32
    %753 = vector.broadcast %cst_210 : f32 to vector<1x8xf32>
    %754 = arith.mulf %749, %753 : vector<1x8xf32>
    %755 = arith.addf %665, %754 : vector<1x8xf32>
    %c8_i32 = arith.constant 8 : i32
    %c0_211 = arith.constant 0 : index
    %c0_212 = arith.constant 0 : index
    %756 = vector.load %arg4[%c0_211, %c0_212] : memref<8x8xf32, #tpu.memory_space<vmem>>, vector<1x8xf32>
    tpu.vector_store %arg4[%c0_211, %c0_212], %752 {strides = array<i32>} : memref<8x8xf32, #tpu.memory_space<vmem>>, vector<1x8xf32>,
    %c1_213 = arith.constant 1 : index
    %c0_214 = arith.constant 0 : index
    %757 = vector.load %arg4[%c1_213, %c0_214] : memref<8x8xf32, #tpu.memory_space<vmem>>, vector<1x8xf32>
    tpu.vector_store %arg4[%c1_213, %c0_214], %755 {strides = array<i32>} : memref<8x8xf32, #tpu.memory_space<vmem>>, vector<1x8xf32>,
    %c2_215 = arith.constant 2 : index
    %c0_216 = arith.constant 0 : index
    %758 = vector.load %arg4[%c2_215, %c0_216] : memref<8x8xf32, #tpu.memory_space<vmem>>, vector<1x8xf32>
    tpu.vector_store %arg4[%c2_215, %c0_216], %746 {strides = array<i32>} : memref<8x8xf32, #tpu.memory_space<vmem>>, vector<1x8xf32>,
    %c3_217 = arith.constant 3 : index
    %c0_218 = arith.constant 0 : index
    %759 = vector.load %arg4[%c3_217, %c0_218] : memref<8x8xf32, #tpu.memory_space<vmem>>, vector<1x8xf32>
    tpu.vector_store %arg4[%c3_217, %c0_218], %749 {strides = array<i32>} : memref<8x8xf32, #tpu.memory_space<vmem>>, vector<1x8xf32>,
    %c0_219 = arith.constant 0 : index
    %c0_220 = arith.constant 0 : index
    %c0_221 = arith.constant 0 : index
    %760 = vector.load %arg5[%c0_219, %c0_220, %c0_221] : memref<8x8x8xf32, #tpu.memory_space<vmem>>, vector<1x8x8xf32>
    %761 = vector.shape_cast %760 : vector<1x8x8xf32> to vector<8x8xf32>
    %762 = tpu.transpose %761, [1, 0] : vector<8x8xf32> -> vector<8x8xf32>
    %c0_222 = arith.constant 0 : index
    %c0_223 = arith.constant 0 : index
    %c0_224 = arith.constant 0 : index
    %763 = vector.load %arg3[%c0_222, %c0_223, %c0_224] : memref<9x8x8xf32, #tpu.memory_space<vmem>>, vector<1x8x8xf32>
    %764 = vector.shape_cast %763 : vector<1x8x8xf32> to vector<8x8xf32>
    %765 = vector.shape_cast %762 : vector<8x8xf32> to vector<1x8x8xf32>
    tpu.vector_store %arg3[%c0_222, %c0_223, %c0_224], %765 {strides = array<i32>} : memref<9x8x8xf32, #tpu.memory_space<vmem>>, vector<1x8x8xf32>,
    %c1_225 = arith.constant 1 : index
    %c0_226 = arith.constant 0 : index
    %c0_227 = arith.constant 0 : index
    %766 = vector.load %arg5[%c1_225, %c0_226, %c0_227] : memref<8x8x8xf32, #tpu.memory_space<vmem>>, vector<1x8x8xf32>
    %767 = vector.shape_cast %766 : vector<1x8x8xf32> to vector<8x8xf32>
    %768 = tpu.transpose %767, [1, 0] : vector<8x8xf32> -> vector<8x8xf32>
    %c1_228 = arith.constant 1 : index
    %c0_229 = arith.constant 0 : index
    %c0_230 = arith.constant 0 : index
    %769 = vector.load %arg3[%c1_228, %c0_229, %c0_230] : memref<9x8x8xf32, #tpu.memory_space<vmem>>, vector<1x8x8xf32>
    %770 = vector.shape_cast %769 : vector<1x8x8xf32> to vector<8x8xf32>
    %771 = vector.shape_cast %768 : vector<8x8xf32> to vector<1x8x8xf32>
    tpu.vector_store %arg3[%c1_228, %c0_229, %c0_230], %771 {strides = array<i32>} : memref<9x8x8xf32, #tpu.memory_space<vmem>>, vector<1x8x8xf32>,
    %c2_231 = arith.constant 2 : index
    %c0_232 = arith.constant 0 : index
    %c0_233 = arith.constant 0 : index
    %772 = vector.load %arg5[%c2_231, %c0_232, %c0_233] : memref<8x8x8xf32, #tpu.memory_space<vmem>>, vector<1x8x8xf32>
    %773 = vector.shape_cast %772 : vector<1x8x8xf32> to vector<8x8xf32>
    %774 = tpu.transpose %773, [1, 0] : vector<8x8xf32> -> vector<8x8xf32>
    %c2_234 = arith.constant 2 : index
    %c0_235 = arith.constant 0 : index
    %c0_236 = arith.constant 0 : index
    %775 = vector.load %arg3[%c2_234, %c0_235, %c0_236] : memref<9x8x8xf32, #tpu.memory_space<vmem>>, vector<1x8x8xf32>
    %776 = vector.shape_cast %775 : vector<1x8x8xf32> to vector<8x8xf32>
    %777 = vector.shape_cast %774 : vector<8x8xf32> to vector<1x8x8xf32>
    tpu.vector_store %arg3[%c2_234, %c0_235, %c0_236], %777 {strides = array<i32>} : memref<9x8x8xf32, #tpu.memory_space<vmem>>, vector<1x8x8xf32>,
    %c3_237 = arith.constant 3 : index
    %c0_238 = arith.constant 0 : index
    %c0_239 = arith.constant 0 : index
    %778 = vector.load %arg5[%c3_237, %c0_238, %c0_239] : memref<8x8x8xf32, #tpu.memory_space<vmem>>, vector<1x8x8xf32>
    %779 = vector.shape_cast %778 : vector<1x8x8xf32> to vector<8x8xf32>
    %780 = tpu.transpose %779, [1, 0] : vector<8x8xf32> -> vector<8x8xf32>
    %c3_240 = arith.constant 3 : index
    %c0_241 = arith.constant 0 : index
    %c0_242 = arith.constant 0 : index
    %781 = vector.load %arg3[%c3_240, %c0_241, %c0_242] : memref<9x8x8xf32, #tpu.memory_space<vmem>>, vector<1x8x8xf32>
    %782 = vector.shape_cast %781 : vector<1x8x8xf32> to vector<8x8xf32>
    %783 = vector.shape_cast %780 : vector<8x8xf32> to vector<1x8x8xf32>
    tpu.vector_store %arg3[%c3_240, %c0_241, %c0_242], %783 {strides = array<i32>} : memref<9x8x8xf32, #tpu.memory_space<vmem>>, vector<1x8x8xf32>,
    %c4_243 = arith.constant 4 : index
    %c0_244 = arith.constant 0 : index
    %c0_245 = arith.constant 0 : index
    %784 = vector.load %arg5[%c4_243, %c0_244, %c0_245] : memref<8x8x8xf32, #tpu.memory_space<vmem>>, vector<1x8x8xf32>
    %785 = vector.shape_cast %784 : vector<1x8x8xf32> to vector<8x8xf32>
    %786 = tpu.transpose %785, [1, 0] : vector<8x8xf32> -> vector<8x8xf32>
    %c4_246 = arith.constant 4 : index
    %c0_247 = arith.constant 0 : index
    %c0_248 = arith.constant 0 : index
    %787 = vector.load %arg3[%c4_246, %c0_247, %c0_248] : memref<9x8x8xf32, #tpu.memory_space<vmem>>, vector<1x8x8xf32>
    %788 = vector.shape_cast %787 : vector<1x8x8xf32> to vector<8x8xf32>
    %789 = vector.shape_cast %786 : vector<8x8xf32> to vector<1x8x8xf32>
    tpu.vector_store %arg3[%c4_246, %c0_247, %c0_248], %789 {strides = array<i32>} : memref<9x8x8xf32, #tpu.memory_space<vmem>>, vector<1x8x8xf32>,
    %c5_249 = arith.constant 5 : index
    %c0_250 = arith.constant 0 : index
    %c0_251 = arith.constant 0 : index
    %790 = vector.load %arg5[%c5_249, %c0_250, %c0_251] : memref<8x8x8xf32, #tpu.memory_space<vmem>>, vector<1x8x8xf32>
    %791 = vector.shape_cast %790 : vector<1x8x8xf32> to vector<8x8xf32>
    %792 = tpu.transpose %791, [1, 0] : vector<8x8xf32> -> vector<8x8xf32>
    %c5_252 = arith.constant 5 : index
    %c0_253 = arith.constant 0 : index
    %c0_254 = arith.constant 0 : index
    %793 = vector.load %arg3[%c5_252, %c0_253, %c0_254] : memref<9x8x8xf32, #tpu.memory_space<vmem>>, vector<1x8x8xf32>
    %794 = vector.shape_cast %793 : vector<1x8x8xf32> to vector<8x8xf32>
    %795 = vector.shape_cast %792 : vector<8x8xf32> to vector<1x8x8xf32>
    tpu.vector_store %arg3[%c5_252, %c0_253, %c0_254], %795 {strides = array<i32>} : memref<9x8x8xf32, #tpu.memory_space<vmem>>, vector<1x8x8xf32>,
    %c6_255 = arith.constant 6 : index
    %c0_256 = arith.constant 0 : index
    %c0_257 = arith.constant 0 : index
    %796 = vector.load %arg5[%c6_255, %c0_256, %c0_257] : memref<8x8x8xf32, #tpu.memory_space<vmem>>, vector<1x8x8xf32>
    %797 = vector.shape_cast %796 : vector<1x8x8xf32> to vector<8x8xf32>
    %798 = tpu.transpose %797, [1, 0] : vector<8x8xf32> -> vector<8x8xf32>
    %c7_258 = arith.constant 7 : index
    %c0_259 = arith.constant 0 : index
    %c0_260 = arith.constant 0 : index
    %799 = vector.load %arg3[%c7_258, %c0_259, %c0_260] : memref<9x8x8xf32, #tpu.memory_space<vmem>>, vector<1x8x8xf32>
    %800 = vector.shape_cast %799 : vector<1x8x8xf32> to vector<8x8xf32>
    %801 = vector.shape_cast %798 : vector<8x8xf32> to vector<1x8x8xf32>
    tpu.vector_store %arg3[%c7_258, %c0_259, %c0_260], %801 {strides = array<i32>} : memref<9x8x8xf32, #tpu.memory_space<vmem>>, vector<1x8x8xf32>,
    %c7_261 = arith.constant 7 : index
    %c0_262 = arith.constant 0 : index
    %c0_263 = arith.constant 0 : index
    %802 = vector.load %arg5[%c7_261, %c0_262, %c0_263] : memref<8x8x8xf32, #tpu.memory_space<vmem>>, vector<1x8x8xf32>
    %803 = vector.shape_cast %802 : vector<1x8x8xf32> to vector<8x8xf32>
    %804 = tpu.transpose %803, [1, 0] : vector<8x8xf32> -> vector<8x8xf32>
    %c8 = arith.constant 8 : index
    %c0_264 = arith.constant 0 : index
    %c0_265 = arith.constant 0 : index
    %805 = vector.load %arg3[%c8, %c0_264, %c0_265] : memref<9x8x8xf32, #tpu.memory_space<vmem>>, vector<1x8x8xf32>
    %806 = vector.shape_cast %805 : vector<1x8x8xf32> to vector<8x8xf32>
    %807 = vector.shape_cast %804 : vector<8x8xf32> to vector<1x8x8xf32>
    tpu.vector_store %arg3[%c8, %c0_264, %c0_265], %807 {strides = array<i32>} : memref<9x8x8xf32, #tpu.memory_space<vmem>>, vector<1x8x8xf32>,
    return
  }
  func.func @transform_1(%arg0: i32, %arg1: memref<1xf32, #tpu.memory_space<smem>>) -> (i32, i32, i32) {
    %c0_i32 = arith.constant 0 : i32
    %c0_i32_0 = arith.constant 0 : i32
    %c0_i32_1 = arith.constant 0 : i32
    return %c0_i32, %c0_i32_0, %arg0 : i32, i32, i32
  }
}

</mosaic_0001>

<llo_original>
// kernel: tpu_custom_call.1
$region0: #{tpu_custom_call.1}
  #allocation0 [shape = 'u32[]', space=smem, size = 0x4, offset = 0x4, fixed_abs, tag = 'smem constant byte address 0x4 - core index']
  #allocation1 [shape = 'u32[144,128]{1,0:T(1,128)}', space=vmem, size = 0x12000, scoped, tag = 'internal scratch']
  #allocation2 [shape = 'f32[8,8]{1,0:T(8,128)}', space=vmem, size = 0x1000, scoped, tag = 'scratch operand']
  #allocation3 [shape = 'f32[8,8,8]{2,1,0:T(8,128)}', space=vmem, size = 0x8000, scoped, tag = 'scratch operand']
  #allocation4 [shape = 's32[1]{0}', space=sflag, size = 0x4, scoped, tag = 'scratch operand']
  #allocation5 [shape = 's32[1]{0}', space=sflag, size = 0x4, scoped, tag = 'scoped memory for tpu_custom_call.1']
  #allocation6 [shape = 'f32[1]{0:T(128)S(6)}', space=smem, size = 0x200, scoped, tag = 'prefetched SMEM operand 0']
  #allocation7 [shape = 's32[]', space=sflag, size = 0x4, offset = 0, fixed_abs, tag = 'sflag constant byte address 0x0 - dummy sync flag']
  #allocation8 [shape = 's32[]', space=sflag, size = 0x4, offset = 0, fixed_abs, tag = 'sflag constant byte address 0x0 - dummy sync flag']
  #allocation9 [shape = 'u32[]', space=smem, size = 0x4, offset = 0x44, fixed_abs, tag = 'smem constant byte address 0x44 - assertion arg 0']
  #allocation10 [shape = 'u32[]', space=smem, size = 0x4, offset = 0x48, fixed_abs, tag = 'smem constant byte address 0x48 - assertion arg 1']
  %s0 = inlined_call_operand.<no memory space> [shape: f32[1], index: 0, kind: input, shape index: {}]
  %s1 = inlined_call_operand.hbm [shape: f32[8,8], index: 1, kind: input, shape index: {}]
  %s2 = inlined_call_operand.vmem [shape: f32[9,8,8], index: 2, kind: output, shape index: {}]
  %s3 = sld [smem:[#allocation0]]
  $region18: #{tpu_custom_call.1} parent=0
    _
  %s5 = ssub.s32 1, %s3
  %s6 = scalar_select 0, %s5, %s3
  %7 = sst [smem:[#allocation6]] %s0
  %p8 = scmp.eq.s32.totalorder 0, 0
  // Predicated region
  $region2: #{tpu_custom_call.1} parent=0 // pred_check
    %p9 = pneg %p8
  $region3: #{tpu_custom_call.1} parent=0 // pred_check_branch
    %11 = sbr.rel (%p9) target = $region5
  $region4: #{tpu_custom_call.1} parent=0 // pred_region
    // Predicated region
    $region6: #{tpu_custom_call.1} parent=4 // pred_check
      _
    $region7: #{tpu_custom_call.1} parent=4 // pred_check_branch
      %13 = sbr.rel target = $region9
    $region8: #{tpu_custom_call.1} parent=4 // pred_region
      %14 = sst [smem:[#allocation9]] [#allocation8]
      %15 = sst [smem:[#allocation10]] [#allocation7]
    $region9: #{tpu_custom_call.1} parent=4 // pred_fallthru
      _
    %17 = shalt.err (0)
    %s19 = sshll.u32 [#allocation2], 4
    %s20 = int_to_ptr.vmem [resolvable:$true] %s19
    %22 = dma.hbm_to_vmem [thread:$0]  %s1, 128, %s20, [#allocation4]
    %s23 = smul.u32 8, 1
    %s24 = sshll.u32 %s23, 4
    %25 = dma.done [#allocation4], %s24
  $region5: #{tpu_custom_call.1} parent=0 // pred_fallthru
    _
  %s26 = sld [smem:[#allocation6]]
  %v27 = vld [vmem:[#allocation2 + $0x6] sm:$0x1]
  %28 = vxpose.xlu0.b32.start [1/16] %v27, 128
  %29 = vxpose.xlu0.b32.cont [2/16] 0.0, 128
  %30 = vxpose.xlu0.b32.cont [3/16] 0.0, 128
  %31 = vxpose.xlu0.b32.cont [4/16] 0.0, 128
  %32 = vxpose.xlu0.b32.cont [5/16] 0.0, 128
  %33 = vxpose.xlu0.b32.cont [6/16] 0.0, 128
  %34 = vxpose.xlu0.b32.cont [7/16] 0.0, 128
  %35 = vxpose.xlu0.b32.cont [8/16] 0.0, 128
  %36 = vxpose.xlu0.b32.cont [9/16] 0.0, 128
  %37 = vxpose.xlu0.b32.cont [10/16] 0.0, 128
  %38 = vxpose.xlu0.b32.cont [11/16] 0.0, 128
  %39 = vxpose.xlu0.b32.cont [12/16] 0.0, 128
  %40 = vxpose.xlu0.b32.cont [13/16] 0.0, 128
  %41 = vxpose.xlu0.b32.cont [14/16] 0.0, 128
  %42 = vxpose.xlu0.b32.cont [15/16] 0.0, 128
  %43 = vxpose.xlu0.b32.end [16/16] 0.0, 128
  %v44 = vpop.trf.xlu0
  %v45 = vpop.trf.xlu0
  %v46 = vpop.trf.xlu0
  %v47 = vpop.trf.xlu0
  %v48 = vpop.trf.xlu0
  %v49 = vpop.trf.xlu0
  %v50 = vpop.trf.xlu0
  %v51 = vpop.trf.xlu0
  %v52 = vpop.trf.xlu0
  %v53 = vpop.trf.xlu0
  %v54 = vpop.trf.xlu0
  %v55 = vpop.trf.xlu0
  %v56 = vpop.trf.xlu0
  %v57 = vpop.trf.xlu0
  %v58 = vpop.trf.xlu0
  %v59 = vpop.trf.xlu0
  %v60 = vstv %s26
  %v61 = vmul.f32 %v60, %v44
  %s62 = smul.f32 %s26, -0.5
  %64 = vset.pattern.permute.xlu0 0
  %65 = vperm.xlu0 %64, %v44
  %v66 = vpop.permute.xlu0 %65
  %v68 = vlaneseq
  %v69 = vshrl.u32 %v68, 7
  %v70 = vsub.s32 0, %v69
  %v71 = vrot.slane %v27, %v70
  %v72 = vmul.f32 %v66, %v71
  %v73 = vstv %s62
  %v74 = vmul.f32 %v73, %v72
  %v75 = vlaneseq
  %v76 = vshrl.u32 %v75, 7
  %v77 = vlaneseq
  %v78 = vand.u32 %v77, 127
  %vm79 = vcmp.ne.s32.totalorder %v76, %v78
  %vm80 = vcmp.lt.s32.totalorder %v76, 4
  %vm81 = vcmp.lt.s32.totalorder %v78, 4
  %vm82 = vmand %vm80, %vm81
  %vm83 = vmand %vm79, %vm82
  %v84 = vsel %vm83, 1, 0
  %v85 = vcvt.s32.f32 %v84
  %v86 = vsub.f32 1.0, %v85
  %s87 = scalar_lea.vmem %s2, 48
  %vm88 = vcmask 64512
  %89 = vst.msk [vmem:[%s87] sm:$0xff] %vm88, %v66
  %v90 = vld [vmem:[#allocation2] sm:$0x1]
  %v91 = vld [vmem:[#allocation2 + $0x1] sm:$0x1]
  %v92 = vld [vmem:[#allocation2 + $0x2] sm:$0x1]
  %v93 = vld [vmem:[#allocation2 + $0x3] sm:$0x1]
  %94 = vxpose.xlu0.b32.start [1/16] %v90, 128
  %95 = vxpose.xlu0.b32.cont [2/16] 0.0, 128
  %96 = vxpose.xlu0.b32.cont [3/16] 0.0, 128
  %97 = vxpose.xlu0.b32.cont [4/16] 0.0, 128
  %98 = vxpose.xlu0.b32.cont [5/16] 0.0, 128
  %99 = vxpose.xlu0.b32.cont [6/16] 0.0, 128
  %100 = vxpose.xlu0.b32.cont [7/16] 0.0, 128
  %101 = vxpose.xlu0.b32.cont [8/16] 0.0, 128
  %102 = vxpose.xlu0.b32.cont [9/16] 0.0, 128
  %103 = vxpose.xlu0.b32.cont [10/16] 0.0, 128
  %104 = vxpose.xlu0.b32.cont [11/16] 0.0, 128
  %105 = vxpose.xlu0.b32.cont [12/16] 0.0, 128
  %106 = vxpose.xlu0.b32.cont [13/16] 0.0, 128
  %107 = vxpose.xlu0.b32.cont [14/16] 0.0, 128
  %108 = vxpose.xlu0.b32.cont [15/16] 0.0, 128
  %109 = vxpose.xlu0.b32.end [16/16] 0.0, 128
  %v110 = vpop.trf.xlu0
  %v111 = vpop.trf.xlu0
  %v112 = vpop.trf.xlu0
  %v113 = vpop.trf.xlu0
  %v114 = vpop.trf.xlu0
  %v115 = vpop.trf.xlu0
  %v116 = vpop.trf.xlu0
  %v117 = vpop.trf.xlu0
  %v118 = vpop.trf.xlu0
  %v119 = vpop.trf.xlu0
  %v120 = vpop.trf.xlu0
  %v121 = vpop.trf.xlu0
  %v122 = vpop.trf.xlu0
  %v123 = vpop.trf.xlu0
  %v124 = vpop.trf.xlu0
  %v125 = vpop.trf.xlu0
  %127 = vset.pattern.permute.xlu0 0
  %128 = vperm.xlu0 %127, %v110
  %v129 = vpop.permute.xlu0 %128
  %v131 = vlaneseq
  %v132 = vshrl.u32 %v131, 7
  %v133 = vsub.s32 0, %v132
  %v134 = vrot.slane %v90, %v133
  %v135 = vsub.f32 %v129, %v134
  %136 = vxpose.xlu0.b32.start [1/16] %v91, 128
  %137 = vxpose.xlu0.b32.cont [2/16] 0.0, 128
  %138 = vxpose.xlu0.b32.cont [3/16] 0.0, 128
  %139 = vxpose.xlu0.b32.cont [4/16] 0.0, 128
  %140 = vxpose.xlu0.b32.cont [5/16] 0.0, 128
  %141 = vxpose.xlu0.b32.cont [6/16] 0.0, 128
  %142 = vxpose.xlu0.b32.cont [7/16] 0.0, 128
  %143 = vxpose.xlu0.b32.cont [8/16] 0.0, 128
  %144 = vxpose.xlu0.b32.cont [9/16] 0.0, 128
  %145 = vxpose.xlu0.b32.cont [10/16] 0.0, 128
  %146 = vxpose.xlu0.b32.cont [11/16] 0.0, 128
  %147 = vxpose.xlu0.b32.cont [12/16] 0.0, 128
  %148 = vxpose.xlu0.b32.cont [13/16] 0.0, 128
  %149 = vxpose.xlu0.b32.cont [14/16] 0.0, 128
  %150 = vxpose.xlu0.b32.cont [15/16] 0.0, 128
  %151 = vxpose.xlu0.b32.end [16/16] 0.0, 128
  %v152 = vpop.trf.xlu0
  %v153 = vpop.trf.xlu0
  %v154 = vpop.trf.xlu0
  %v155 = vpop.trf.xlu0
  %v156 = vpop.trf.xlu0
  %v157 = vpop.trf.xlu0
  %v158 = vpop.trf.xlu0
  %v159 = vpop.trf.xlu0
  %v160 = vpop.trf.xlu0
  %v161 = vpop.trf.xlu0
  %v162 = vpop.trf.xlu0
  %v163 = vpop.trf.xlu0
  %v164 = vpop.trf.xlu0
  %v165 = vpop.trf.xlu0
  %v166 = vpop.trf.xlu0
  %v167 = vpop.trf.xlu0
  %169 = vset.pattern.permute.xlu0 0
  %170 = vperm.xlu0 %169, %v152
  %v171 = vpop.permute.xlu0 %170
  %v173 = vlaneseq
  %v174 = vshrl.u32 %v173, 7
  %v175 = vsub.s32 0, %v174
  %v176 = vrot.slane %v91, %v175
  %v177 = vsub.f32 %v171, %v176
  %v178 = vmul.f32 %v135, %v135
  %v179 = vmul.f32 %v177, %v177
  %v180 = vadd.f32 %v178, %v179
  %v181 = vadd.f32 %v180, %v86
  %v182 = vrsqrt.pop %v181
  %v183 = vmul.f32 %v85, %v182
  %v184 = vmul.f32 %v183, %v183
  %v185 = vmul.f32 %v184, %v183
  %187 = vset.pattern.permute.xlu0 0
  %188 = vperm.xlu0 %187, %v61
  %v189 = vpop.permute.xlu0 %188
  %v191 = vmul.f32 %v189, %v185
  %v192 = vmul.f32 %v191, %v135
  %v193 = vsel %vm88, %v192, 0.0
  %v194 = vrot.slane %v193, 4
  %v195 = vadd.f32 %v193, %v194
  %v196 = vrot.slane %v195, 2
  %v197 = vadd.f32 %v195, %v196
  %v198 = vrot.slane %v197, 1
  %v199 = vadd.f32 %v197, %v198
  %v200 = vmul.f32 %v191, %v177
  %v201 = vsel %vm88, %v200, 0.0
  %v202 = vrot.slane %v201, 4
  %v203 = vadd.f32 %v201, %v202
  %v204 = vrot.slane %v203, 2
  %v205 = vadd.f32 %v203, %v204
  %v206 = vrot.slane %v205, 1
  %v207 = vadd.f32 %v205, %v206
  %v208 = vmul.f32 %v74, %v183
  %v209 = vsel %vm88, %v208, 0.0
  %210 = vadd.xlane.f32.xlu0 %v209
  %v211 = vpop.xlane.xlu0 %210
  %v212 = vrot.slane %v211, 4
  %v213 = vadd.f32 %v211, %v212
  %v214 = vrot.slane %v213, 2
  %v215 = vadd.f32 %v213, %v214
  %v216 = vrot.slane %v215, 1
  %v217 = vadd.f32 %v215, %v216
  %s218 = vtos %v217
  %v219 = vstv %s218
  %v220 = vmul.f32 %v92, %v92
  %v221 = vmul.f32 %v93, %v93
  %v222 = vadd.f32 %v220, %v221
  %v223 = vmul.f32 %v27, %v222
  %vm224 = vcmask 57344
  %v225 = vsel %vm224, %v223, 0.0
  %226 = vadd.xlane.f32.xlu0 %v225
  %v227 = vpop.xlane.xlu0 %226
  %v228 = vrot.slane %v227, 4
  %v229 = vadd.f32 %v227, %v228
  %v230 = vrot.slane %v229, 2
  %v231 = vadd.f32 %v229, %v230
  %v232 = vrot.slane %v231, 1
  %v233 = vadd.f32 %v231, %v232
  %s234 = vtos %v233
  %v235 = vstv %s234
  %v236 = vmul.f32 %v235, 0.5
  %v237 = vadd.f32 %v236, %v219
  %238 = vst.msk [vmem:[#allocation3] sm:$0x1] %vm224, %v90
  %s239 = scalar_lea.vmem [#allocation3], 8
  %240 = vst.msk [vmem:[%s239] sm:$0x1] %vm224, %v91
  %s241 = scalar_lea.vmem [#allocation3], 16
  %242 = vst.msk [vmem:[%s241] sm:$0x1] %vm224, %v92
  %s243 = scalar_lea.vmem [#allocation3], 24
  %244 = vst.msk [vmem:[%s243] sm:$0x1] %vm224, %v93
  %s245 = scalar_lea.vmem [#allocation3], 32
  %246 = vst.msk [vmem:[%s245] sm:$0x1] %vm224, %v199
  %s247 = scalar_lea.vmem [#allocation3], 40
  %248 = vst.msk [vmem:[%s247] sm:$0x1] %vm224, %v207
  %s249 = scalar_lea.vmem [#allocation3], 48
  %250 = vst.msk [vmem:[%s249] sm:$0x1] %vm224, %v237
  %s251 = scalar_lea.vmem [#allocation3], 56
  %252 = vst.msk [vmem:[%s251] sm:$0x1] %vm224, %v219
  %v253 = vmul.f32 %v199, 0.02
  %v254 = vadd.f32 %v92, %v253
  %v255 = vmul.f32 %v207, 0.02
  %v256 = vadd.f32 %v93, %v255
  %v257 = vmul.f32 %v254, 0.02
  %v258 = vadd.f32 %v90, %v257
  %v259 = vmul.f32 %v256, 0.02
  %v260 = vadd.f32 %v91, %v259
  %261 = vxpose.xlu0.b32.start [1/16] %v258, 128
  %262 = vxpose.xlu0.b32.cont [2/16] 0.0, 128
  %263 = vxpose.xlu0.b32.cont [3/16] 0.0, 128
  %264 = vxpose.xlu0.b32.cont [4/16] 0.0, 128
  %265 = vxpose.xlu0.b32.cont [5/16] 0.0, 128
  %266 = vxpose.xlu0.b32.cont [6/16] 0.0, 128
  %267 = vxpose.xlu0.b32.cont [7/16] 0.0, 128
  %268 = vxpose.xlu0.b32.cont [8/16] 0.0, 128
  %269 = vxpose.xlu0.b32.cont [9/16] 0.0, 128
  %270 = vxpose.xlu0.b32.cont [10/16] 0.0, 128
  %271 = vxpose.xlu0.b32.cont [11/16] 0.0, 128
  %272 = vxpose.xlu0.b32.cont [12/16] 0.0, 128
  %273 = vxpose.xlu0.b32.cont [13/16] 0.0, 128
  %274 = vxpose.xlu0.b32.cont [14/16] 0.0, 128
  %275 = vxpose.xlu0.b32.cont [15/16] 0.0, 128
  %276 = vxpose.xlu0.b32.end [16/16] 0.0, 128
  %v277 = vpop.trf.xlu0
  %v278 = vpop.trf.xlu0
  %v279 = vpop.trf.xlu0
  %v280 = vpop.trf.xlu0
  %v281 = vpop.trf.xlu0
  %v282 = vpop.trf.xlu0
  %v283 = vpop.trf.xlu0
  %v284 = vpop.trf.xlu0
  %v285 = vpop.trf.xlu0
  %v286 = vpop.trf.xlu0
  %v287 = vpop.trf.xlu0
  %v288 = vpop.trf.xlu0
  %v289 = vpop.trf.xlu0
  %v290 = vpop.trf.xlu0
  %v291 = vpop.trf.xlu0
  %v292 = vpop.trf.xlu0
  %294 = vset.pattern.permute.xlu0 0
  %295 = vperm.xlu0 %294, %v277
  %v296 = vpop.permute.xlu0 %295
  %v298 = vlaneseq
  %v299 = vshrl.u32 %v298, 7
  %v300 = vsub.s32 0, %v299
  %v301 = vrot.slane %v258, %v300
  %v302 = vsub.f32 %v296, %v301
  %303 = vxpose.xlu0.b32.start [1/16] %v260, 128
  %304 = vxpose.xlu0.b32.cont [2/16] 0.0, 128
  %305 = vxpose.xlu0.b32.cont [3/16] 0.0, 128
  %306 = vxpose.xlu0.b32.cont [4/16] 0.0, 128
  %307 = vxpose.xlu0.b32.cont [5/16] 0.0, 128
  %308 = vxpose.xlu0.b32.cont [6/16] 0.0, 128
  %309 = vxpose.xlu0.b32.cont [7/16] 0.0, 128
  %310 = vxpose.xlu0.b32.cont [8/16] 0.0, 128
  %311 = vxpose.xlu0.b32.cont [9/16] 0.0, 128
  %312 = vxpose.xlu0.b32.cont [10/16] 0.0, 128
  %313 = vxpose.xlu0.b32.cont [11/16] 0.0, 128
  %314 = vxpose.xlu0.b32.cont [12/16] 0.0, 128
  %315 = vxpose.xlu0.b32.cont [13/16] 0.0, 128
  %316 = vxpose.xlu0.b32.cont [14/16] 0.0, 128
  %317 = vxpose.xlu0.b32.cont [15/16] 0.0, 128
  %318 = vxpose.xlu0.b32.end [16/16] 0.0, 128
  %v319 = vpop.trf.xlu0
  %v320 = vpop.trf.xlu0
  %v321 = vpop.trf.xlu0
  %v322 = vpop.trf.xlu0
  %v323 = vpop.trf.xlu0
  %v324 = vpop.trf.xlu0
  %v325 = vpop.trf.xlu0
  %v326 = vpop.trf.xlu0
  %v327 = vpop.trf.xlu0
  %v328 = vpop.trf.xlu0
  %v329 = vpop.trf.xlu0
  %v330 = vpop.trf.xlu0
  %v331 = vpop.trf.xlu0
  %v332 = vpop.trf.xlu0
  %v333 = vpop.trf.xlu0
  %v334 = vpop.trf.xlu0
  %336 = vset.pattern.permute.xlu0 0
  %337 = vperm.xlu0 %336, %v319
  %v338 = vpop.permute.xlu0 %337
  %v340 = vlaneseq
  %v341 = vshrl.u32 %v340, 7
  %v342 = vsub.s32 0, %v341
  %v343 = vrot.slane %v260, %v342
  %v344 = vsub.f32 %v338, %v343
  %v345 = vmul.f32 %v302, %v302
  %v346 = vmul.f32 %v344, %v344
  %v347 = vadd.f32 %v345, %v346
  %v348 = vadd.f32 %v347, %v86
  %v349 = vrsqrt.pop %v348
  %v350 = vmul.f32 %v85, %v349
  %v351 = vmul.f32 %v350, %v350
  %v352 = vmul.f32 %v351, %v350
  %v353 = vmul.f32 %v189, %v352
  %v354 = vmul.f32 %v353, %v302
  %v355 = vsel %vm88, %v354, 0.0
  %v356 = vrot.slane %v355, 4
  %v357 = vadd.f32 %v355, %v356
  %v358 = vrot.slane %v357, 2
  %v359 = vadd.f32 %v357, %v358
  %v360 = vrot.slane %v359, 1
  %v361 = vadd.f32 %v359, %v360
  %v362 = vmul.f32 %v353, %v344
  %v363 = vsel %vm88, %v362, 0.0
  %v364 = vrot.slane %v363, 4
  %v365 = vadd.f32 %v363, %v364
  %v366 = vrot.slane %v365, 2
  %v367 = vadd.f32 %v365, %v366
  %v368 = vrot.slane %v367, 1
  %v369 = vadd.f32 %v367, %v368
  %v370 = vmul.f32 %v74, %v350
  %v371 = vsel %vm88, %v370, 0.0
  %372 = vadd.xlane.f32.xlu0 %v371
  %v373 = vpop.xlane.xlu0 %372
  %v374 = vrot.slane %v373, 4
  %v375 = vadd.f32 %v373, %v374
  %v376 = vrot.slane %v375, 2
  %v377 = vadd.f32 %v375, %v376
  %v378 = vrot.slane %v377, 1
  %v379 = vadd.f32 %v377, %v378
  %s380 = vtos %v379
  %v381 = vstv %s380
  %v382 = vmul.f32 %v254, %v254
  %v383 = vmul.f32 %v256, %v256
  %v384 = vadd.f32 %v382, %v383
  %v385 = vmul.f32 %v27, %v384
  %v386 = vsel %vm224, %v385, 0.0
  %387 = vadd.xlane.f32.xlu0 %v386
  %v388 = vpop.xlane.xlu0 %387
  %v389 = vrot.slane %v388, 4
  %v390 = vadd.f32 %v388, %v389
  %v391 = vrot.slane %v390, 2
  %v392 = vadd.f32 %v390, %v391
  %v393 = vrot.slane %v392, 1
  %v394 = vadd.f32 %v392, %v393
  %s395 = vtos %v394
  %v396 = vstv %s395
  %v397 = vmul.f32 %v396, 0.5
  %v398 = vadd.f32 %v397, %v381
  %399 = vst.msk [vmem:[#allocation3 + $0x1] sm:$0x1] %vm224, %v258
  %400 = vst.msk [vmem:[%s239 + $0x1] sm:$0x1] %vm224, %v260
  %401 = vst.msk [vmem:[%s241 + $0x1] sm:$0x1] %vm224, %v254
  %402 = vst.msk [vmem:[%s243 + $0x1] sm:$0x1] %vm224, %v256
  %403 = vst.msk [vmem:[%s245 + $0x1] sm:$0x1] %vm224, %v361
  %404 = vst.msk [vmem:[%s247 + $0x1] sm:$0x1] %vm224, %v369
  %405 = vst.msk [vmem:[%s249 + $0x1] sm:$0x1] %vm224, %v398
  %406 = vst.msk [vmem:[%s251 + $0x1] sm:$0x1] %vm224, %v381
  %v407 = vmul.f32 %v361, 0.02
  %v408 = vadd.f32 %v254, %v407
  %v409 = vmul.f32 %v369, 0.02
  %v410 = vadd.f32 %v256, %v409
  %v411 = vmul.f32 %v408, 0.02
  %v412 = vadd.f32 %v258, %v411
  %v413 = vmul.f32 %v410, 0.02
  %v414 = vadd.f32 %v260, %v413
  %415 = vxpose.xlu0.b32.start [1/16] %v412, 128
  %416 = vxpose.xlu0.b32.cont [2/16] 0.0, 128
  %417 = vxpose.xlu0.b32.cont [3/16] 0.0, 128
  %418 = vxpose.xlu0.b32.cont [4/16] 0.0, 128
  %419 = vxpose.xlu0.b32.cont [5/16] 0.0, 128
  %420 = vxpose.xlu0.b32.cont [6/16] 0.0, 128
  %421 = vxpose.xlu0.b32.cont [7/16] 0.0, 128
  %422 = vxpose.xlu0.b32.cont [8/16] 0.0, 128
  %423 = vxpose.xlu0.b32.cont [9/16] 0.0, 128
  %424 = vxpose.xlu0.b32.cont [10/16] 0.0, 128
  %425 = vxpose.xlu0.b32.cont [11/16] 0.0, 128
  %426 = vxpose.xlu0.b32.cont [12/16] 0.0, 128
  %427 = vxpose.xlu0.b32.cont [13/16] 0.0, 128
  %428 = vxpose.xlu0.b32.cont [14/16] 0.0, 128
  %429 = vxpose.xlu0.b32.cont [15/16] 0.0, 128
  %430 = vxpose.xlu0.b32.end [16/16] 0.0, 128
  %v431 = vpop.trf.xlu0
  %v432 = vpop.trf.xlu0
  %v433 = vpop.trf.xlu0
  %v434 = vpop.trf.xlu0
  %v435 = vpop.trf.xlu0
  %v436 = vpop.trf.xlu0
  %v437 = vpop.trf.xlu0
  %v438 = vpop.trf.xlu0
  %v439 = vpop.trf.xlu0
  %v440 = vpop.trf.xlu0
  %v441 = vpop.trf.xlu0
  %v442 = vpop.trf.xlu0
  %v443 = vpop.trf.xlu0
  %v444 = vpop.trf.xlu0
  %v445 = vpop.trf.xlu0
  %v446 = vpop.trf.xlu0
  %448 = vset.pattern.permute.xlu0 0
  %449 = vperm.xlu0 %448, %v431
  %v450 = vpop.permute.xlu0 %449
  %v452 = vlaneseq
  %v453 = vshrl.u32 %v452, 7
  %v454 = vsub.s32 0, %v453
  %v455 = vrot.slane %v412, %v454
  %v456 = vsub.f32 %v450, %v455
  %457 = vxpose.xlu0.b32.start [1/16] %v414, 128
  %458 = vxpose.xlu0.b32.cont [2/16] 0.0, 128
  %459 = vxpose.xlu0.b32.cont [3/16] 0.0, 128
  %460 = vxpose.xlu0.b32.cont [4/16] 0.0, 128
  %461 = vxpose.xlu0.b32.cont [5/16] 0.0, 128
  %462 = vxpose.xlu0.b32.cont [6/16] 0.0, 128
  %463 = vxpose.xlu0.b32.cont [7/16] 0.0, 128
  %464 = vxpose.xlu0.b32.cont [8/16] 0.0, 128
  %465 = vxpose.xlu0.b32.cont [9/16] 0.0, 128
  %466 = vxpose.xlu0.b32.cont [10/16] 0.0, 128
  %467 = vxpose.xlu0.b32.cont [11/16] 0.0, 128
  %468 = vxpose.xlu0.b32.cont [12/16] 0.0, 128
  %469 = vxpose.xlu0.b32.cont [13/16] 0.0, 128
  %470 = vxpose.xlu0.b32.cont [14/16] 0.0, 128
  %471 = vxpose.xlu0.b32.cont [15/16] 0.0, 128
  %472 = vxpose.xlu0.b32.end [16/16] 0.0, 128
  %v473 = vpop.trf.xlu0
  %v474 = vpop.trf.xlu0
  %v475 = vpop.trf.xlu0
  %v476 = vpop.trf.xlu0
  %v477 = vpop.trf.xlu0
  %v478 = vpop.trf.xlu0
  %v479 = vpop.trf.xlu0
  %v480 = vpop.trf.xlu0
  %v481 = vpop.trf.xlu0
  %v482 = vpop.trf.xlu0
  %v483 = vpop.trf.xlu0
  %v484 = vpop.trf.xlu0
  %v485 = vpop.trf.xlu0
  %v486 = vpop.trf.xlu0
  %v487 = vpop.trf.xlu0
  %v488 = vpop.trf.xlu0
  %490 = vset.pattern.permute.xlu0 0
  %491 = vperm.xlu0 %490, %v473
  %v492 = vpop.permute.xlu0 %491
  %v494 = vlaneseq
  %v495 = vshrl.u32 %v494, 7
  %v496 = vsub.s32 0, %v495
  %v497 = vrot.slane %v414, %v496
  %v498 = vsub.f32 %v492, %v497
  %v499 = vmul.f32 %v456, %v456
  %v500 = vmul.f32 %v498, %v498
  %v501 = vadd.f32 %v499, %v500
  %v502 = vadd.f32 %v501, %v86
  %v503 = vrsqrt.pop %v502
  %v504 = vmul.f32 %v85, %v503
  %v505 = vmul.f32 %v504, %v504
  %v506 = vmul.f32 %v505, %v504
  %v507 = vmul.f32 %v189, %v506
  %v508 = vmul.f32 %v507, %v456
  %v509 = vsel %vm88, %v508, 0.0
  %v510 = vrot.slane %v509, 4
  %v511 = vadd.f32 %v509, %v510
  %v512 = vrot.slane %v511, 2
  %v513 = vadd.f32 %v511, %v512
  %v514 = vrot.slane %v513, 1
  %v515 = vadd.f32 %v513, %v514
  %v516 = vmul.f32 %v507, %v498
  %v517 = vsel %vm88, %v516, 0.0
  %v518 = vrot.slane %v517, 4
  %v519 = vadd.f32 %v517, %v518
  %v520 = vrot.slane %v519, 2
  %v521 = vadd.f32 %v519, %v520
  %v522 = vrot.slane %v521, 1
  %v523 = vadd.f32 %v521, %v522
  %v524 = vmul.f32 %v74, %v504
  %v525 = vsel %vm88, %v524, 0.0
  %526 = vadd.xlane.f32.xlu0 %v525
  %v527 = vpop.xlane.xlu0 %526
  %v528 = vrot.slane %v527, 4
  %v529 = vadd.f32 %v527, %v528
  %v530 = vrot.slane %v529, 2
  %v531 = vadd.f32 %v529, %v530
  %v532 = vrot.slane %v531, 1
  %v533 = vadd.f32 %v531, %v532
  %s534 = vtos %v533
  %v535 = vstv %s534
  %v536 = vmul.f32 %v408, %v408
  %v537 = vmul.f32 %v410, %v410
  %v538 = vadd.f32 %v536, %v537
  %v539 = vmul.f32 %v27, %v538
  %v540 = vsel %vm224, %v539, 0.0
  %541 = vadd.xlane.f32.xlu0 %v540
  %v542 = vpop.xlane.xlu0 %541
  %v543 = vrot.slane %v542, 4
  %v544 = vadd.f32 %v542, %v543
  %v545 = vrot.slane %v544, 2
  %v546 = vadd.f32 %v544, %v545
  %v547 = vrot.slane %v546, 1
  %v548 = vadd.f32 %v546, %v547
  %s549 = vtos %v548
  %v550 = vstv %s549
  %v551 = vmul.f32 %v550, 0.5
  %v552 = vadd.f32 %v551, %v535
  %553 = vst.msk [vmem:[#allocation3 + $0x2] sm:$0x1] %vm224, %v412
  %554 = vst.msk [vmem:[%s239 + $0x2] sm:$0x1] %vm224, %v414
  %555 = vst.msk [vmem:[%s241 + $0x2] sm:$0x1] %vm224, %v408
  %556 = vst.msk [vmem:[%s243 + $0x2] sm:$0x1] %vm224, %v410
  %557 = vst.msk [vmem:[%s245 + $0x2] sm:$0x1] %vm224, %v515
  %558 = vst.msk [vmem:[%s247 + $0x2] sm:$0x1] %vm224, %v523
  %559 = vst.msk [vmem:[%s249 + $0x2] sm:$0x1] %vm224, %v552
  %560 = vst.msk [vmem:[%s251 + $0x2] sm:$0x1] %vm224, %v535
  %v561 = vmul.f32 %v515, 0.02
  %v562 = vadd.f32 %v408, %v561
  %v563 = vmul.f32 %v523, 0.02
  %v564 = vadd.f32 %v410, %v563
  %v565 = vmul.f32 %v562, 0.02
  %v566 = vadd.f32 %v412, %v565
  %v567 = vmul.f32 %v564, 0.02
  %v568 = vadd.f32 %v414, %v567
  %569 = vxpose.xlu0.b32.start [1/16] %v566, 128
  %570 = vxpose.xlu0.b32.cont [2/16] 0.0, 128
  %571 = vxpose.xlu0.b32.cont [3/16] 0.0, 128
  %572 = vxpose.xlu0.b32.cont [4/16] 0.0, 128
  %573 = vxpose.xlu0.b32.cont [5/16] 0.0, 128
  %574 = vxpose.xlu0.b32.cont [6/16] 0.0, 128
  %575 = vxpose.xlu0.b32.cont [7/16] 0.0, 128
  %576 = vxpose.xlu0.b32.cont [8/16] 0.0, 128
  %577 = vxpose.xlu0.b32.cont [9/16] 0.0, 128
  %578 = vxpose.xlu0.b32.cont [10/16] 0.0, 128
  %579 = vxpose.xlu0.b32.cont [11/16] 0.0, 128
  %580 = vxpose.xlu0.b32.cont [12/16] 0.0, 128
  %581 = vxpose.xlu0.b32.cont [13/16] 0.0, 128
  %582 = vxpose.xlu0.b32.cont [14/16] 0.0, 128
  %583 = vxpose.xlu0.b32.cont [15/16] 0.0, 128
  %584 = vxpose.xlu0.b32.end [16/16] 0.0, 128
  %v585 = vpop.trf.xlu0
  %v586 = vpop.trf.xlu0
  %v587 = vpop.trf.xlu0
  %v588 = vpop.trf.xlu0
  %v589 = vpop.trf.xlu0
  %v590 = vpop.trf.xlu0
  %v591 = vpop.trf.xlu0
  %v592 = vpop.trf.xlu0
  %v593 = vpop.trf.xlu0
  %v594 = vpop.trf.xlu0
  %v595 = vpop.trf.xlu0
  %v596 = vpop.trf.xlu0
  %v597 = vpop.trf.xlu0
  %v598 = vpop.trf.xlu0
  %v599 = vpop.trf.xlu0
  %v600 = vpop.trf.xlu0
  %602 = vset.pattern.permute.xlu0 0
  %603 = vperm.xlu0 %602, %v585
  %v604 = vpop.permute.xlu0 %603
  %v606 = vlaneseq
  %v607 = vshrl.u32 %v606, 7
  %v608 = vsub.s32 0, %v607
  %v609 = vrot.slane %v566, %v608
  %v610 = vsub.f32 %v604, %v609
  %611 = vxpose.xlu0.b32.start [1/16] %v568, 128
  %612 = vxpose.xlu0.b32.cont [2/16] 0.0, 128
  %613 = vxpose.xlu0.b32.cont [3/16] 0.0, 128
  %614 = vxpose.xlu0.b32.cont [4/16] 0.0, 128
  %615 = vxpose.xlu0.b32.cont [5/16] 0.0, 128
  %616 = vxpose.xlu0.b32.cont [6/16] 0.0, 128
  %617 = vxpose.xlu0.b32.cont [7/16] 0.0, 128
  %618 = vxpose.xlu0.b32.cont [8/16] 0.0, 128
  %619 = vxpose.xlu0.b32.cont [9/16] 0.0, 128
  %620 = vxpose.xlu0.b32.cont [10/16] 0.0, 128
  %621 = vxpose.xlu0.b32.cont [11/16] 0.0, 128
  %622 = vxpose.xlu0.b32.cont [12/16] 0.0, 128
  %623 = vxpose.xlu0.b32.cont [13/16] 0.0, 128
  %624 = vxpose.xlu0.b32.cont [14/16] 0.0, 128
  %625 = vxpose.xlu0.b32.cont [15/16] 0.0, 128
  %626 = vxpose.xlu0.b32.end [16/16] 0.0, 128
  %v627 = vpop.trf.xlu0
  %v628 = vpop.trf.xlu0
  %v629 = vpop.trf.xlu0
  %v630 = vpop.trf.xlu0
  %v631 = vpop.trf.xlu0
  %v632 = vpop.trf.xlu0
  %v633 = vpop.trf.xlu0
  %v634 = vpop.trf.xlu0
  %v635 = vpop.trf.xlu0
  %v636 = vpop.trf.xlu0
  %v637 = vpop.trf.xlu0
  %v638 = vpop.trf.xlu0
  %v639 = vpop.trf.xlu0
  %v640 = vpop.trf.xlu0
  %v641 = vpop.trf.xlu0
  %v642 = vpop.trf.xlu0
  %644 = vset.pattern.permute.xlu0 0
  %645 = vperm.xlu0 %644, %v627
  %v646 = vpop.permute.xlu0 %645
  %v648 = vlaneseq
  %v649 = vshrl.u32 %v648, 7
  %v650 = vsub.s32 0, %v649
  %v651 = vrot.slane %v568, %v650
  %v652 = vsub.f32 %v646, %v651
  %v653 = vmul.f32 %v610, %v610
  %v654 = vmul.f32 %v652, %v652
  %v655 = vadd.f32 %v653, %v654
  %v656 = vadd.f32 %v655, %v86
  %v657 = vrsqrt.pop %v656
  %v658 = vmul.f32 %v85, %v657
  %v659 = vmul.f32 %v658, %v658
  %v660 = vmul.f32 %v659, %v658
  %v661 = vmul.f32 %v189, %v660
  %v662 = vmul.f32 %v661, %v610
  %v663 = vsel %vm88, %v662, 0.0
  %v664 = vrot.slane %v663, 4
  %v665 = vadd.f32 %v663, %v664
  %v666 = vrot.slane %v665, 2
  %v667 = vadd.f32 %v665, %v666
  %v668 = vrot.slane %v667, 1
  %v669 = vadd.f32 %v667, %v668
  %v670 = vmul.f32 %v661, %v652
  %v671 = vsel %vm88, %v670, 0.0
  %v672 = vrot.slane %v671, 4
  %v673 = vadd.f32 %v671, %v672
  %v674 = vrot.slane %v673, 2
  %v675 = vadd.f32 %v673, %v674
  %v676 = vrot.slane %v675, 1
  %v677 = vadd.f32 %v675, %v676
  %v678 = vmul.f32 %v74, %v658
  %v679 = vsel %vm88, %v678, 0.0
  %680 = vadd.xlane.f32.xlu0 %v679
  %v681 = vpop.xlane.xlu0 %680
  %v682 = vrot.slane %v681, 4
  %v683 = vadd.f32 %v681, %v682
  %v684 = vrot.slane %v683, 2
  %v685 = vadd.f32 %v683, %v684
  %v686 = vrot.slane %v685, 1
  %v687 = vadd.f32 %v685, %v686
  %s688 = vtos %v687
  %v689 = vstv %s688
  %v690 = vmul.f32 %v562, %v562
  %v691 = vmul.f32 %v564, %v564
  %v692 = vadd.f32 %v690, %v691
  %v693 = vmul.f32 %v27, %v692
  %v694 = vsel %vm224, %v693, 0.0
  %695 = vadd.xlane.f32.xlu0 %v694
  %v696 = vpop.xlane.xlu0 %695
  %v697 = vrot.slane %v696, 4
  %v698 = vadd.f32 %v696, %v697
  %v699 = vrot.slane %v698, 2
  %v700 = vadd.f32 %v698, %v699
  %v701 = vrot.slane %v700, 1
  %v702 = vadd.f32 %v700, %v701
  %s703 = vtos %v702
  %v704 = vstv %s703
  %v705 = vmul.f32 %v704, 0.5
  %v706 = vadd.f32 %v705, %v689
  %707 = vst.msk [vmem:[#allocation3 + $0x3] sm:$0x1] %vm224, %v566
  %708 = vst.msk [vmem:[%s239 + $0x3] sm:$0x1] %vm224, %v568
  %709 = vst.msk [vmem:[%s241 + $0x3] sm:$0x1] %vm224, %v562
  %710 = vst.msk [vmem:[%s243 + $0x3] sm:$0x1] %vm224, %v564
  %711 = vst.msk [vmem:[%s245 + $0x3] sm:$0x1] %vm224, %v669
  %712 = vst.msk [vmem:[%s247 + $0x3] sm:$0x1] %vm224, %v677
  %713 = vst.msk [vmem:[%s249 + $0x3] sm:$0x1] %vm224, %v706
  %714 = vst.msk [vmem:[%s251 + $0x3] sm:$0x1] %vm224, %v689
  %v715 = vmul.f32 %v669, 0.02
  %v716 = vadd.f32 %v562, %v715
  %v717 = vmul.f32 %v677, 0.02
  %v718 = vadd.f32 %v564, %v717
  %v719 = vmul.f32 %v716, 0.02
  %v720 = vadd.f32 %v566, %v719
  %v721 = vmul.f32 %v718, 0.02
  %v722 = vadd.f32 %v568, %v721
  %723 = vxpose.xlu0.b32.start [1/16] %v720, 128
  %724 = vxpose.xlu0.b32.cont [2/16] 0.0, 128
  %725 = vxpose.xlu0.b32.cont [3/16] 0.0, 128
  %726 = vxpose.xlu0.b32.cont [4/16] 0.0, 128
  %727 = vxpose.xlu0.b32.cont [5/16] 0.0, 128
  %728 = vxpose.xlu0.b32.cont [6/16] 0.0, 128
  %729 = vxpose.xlu0.b32.cont [7/16] 0.0, 128
  %730 = vxpose.xlu0.b32.cont [8/16] 0.0, 128
  %731 = vxpose.xlu0.b32.cont [9/16] 0.0, 128
  %732 = vxpose.xlu0.b32.cont [10/16] 0.0, 128
  %733 = vxpose.xlu0.b32.cont [11/16] 0.0, 128
  %734 = vxpose.xlu0.b32.cont [12/16] 0.0, 128
  %735 = vxpose.xlu0.b32.cont [13/16] 0.0, 128
  %736 = vxpose.xlu0.b32.cont [14/16] 0.0, 128
  %737 = vxpose.xlu0.b32.cont [15/16] 0.0, 128
  %738 = vxpose.xlu0.b32.end [16/16] 0.0, 128
  %v739 = vpop.trf.xlu0
  %v740 = vpop.trf.xlu0
  %v741 = vpop.trf.xlu0
  %v742 = vpop.trf.xlu0
  %v743 = vpop.trf.xlu0
  %v744 = vpop.trf.xlu0
  %v745 = vpop.trf.xlu0
  %v746 = vpop.trf.xlu0
  %v747 = vpop.trf.xlu0
  %v748 = vpop.trf.xlu0
  %v749 = vpop.trf.xlu0
  %v750 = vpop.trf.xlu0
  %v751 = vpop.trf.xlu0
  %v752 = vpop.trf.xlu0
  %v753 = vpop.trf.xlu0
  %v754 = vpop.trf.xlu0
  %756 = vset.pattern.permute.xlu0 0
  %757 = vperm.xlu0 %756, %v739
  %v758 = vpop.permute.xlu0 %757
  %v760 = vlaneseq
  %v761 = vshrl.u32 %v760, 7
  %v762 = vsub.s32 0, %v761
  %v763 = vrot.slane %v720, %v762
  %v764 = vsub.f32 %v758, %v763
  %765 = vxpose.xlu0.b32.start [1/16] %v722, 128
  %766 = vxpose.xlu0.b32.cont [2/16] 0.0, 128
  %767 = vxpose.xlu0.b32.cont [3/16] 0.0, 128
  %768 = vxpose.xlu0.b32.cont [4/16] 0.0, 128
  %769 = vxpose.xlu0.b32.cont [5/16] 0.0, 128
  %770 = vxpose.xlu0.b32.cont [6/16] 0.0, 128
  %771 = vxpose.xlu0.b32.cont [7/16] 0.0, 128
  %772 = vxpose.xlu0.b32.cont [8/16] 0.0, 128
  %773 = vxpose.xlu0.b32.cont [9/16] 0.0, 128
  %774 = vxpose.xlu0.b32.cont [10/16] 0.0, 128
  %775 = vxpose.xlu0.b32.cont [11/16] 0.0, 128
  %776 = vxpose.xlu0.b32.cont [12/16] 0.0, 128
  %777 = vxpose.xlu0.b32.cont [13/16] 0.0, 128
  %778 = vxpose.xlu0.b32.cont [14/16] 0.0, 128
  %779 = vxpose.xlu0.b32.cont [15/16] 0.0, 128
  %780 = vxpose.xlu0.b32.end [16/16] 0.0, 128
  %v781 = vpop.trf.xlu0
  %v782 = vpop.trf.xlu0
  %v783 = vpop.trf.xlu0
  %v784 = vpop.trf.xlu0
  %v785 = vpop.trf.xlu0
  %v786 = vpop.trf.xlu0
  %v787 = vpop.trf.xlu0
  %v788 = vpop.trf.xlu0
  %v789 = vpop.trf.xlu0
  %v790 = vpop.trf.xlu0
  %v791 = vpop.trf.xlu0
  %v792 = vpop.trf.xlu0
  %v793 = vpop.trf.xlu0
  %v794 = vpop.trf.xlu0
  %v795 = vpop.trf.xlu0
  %v796 = vpop.trf.xlu0
  %798 = vset.pattern.permute.xlu0 0
  %799 = vperm.xlu0 %798, %v781
  %v800 = vpop.permute.xlu0 %799
  %v802 = vlaneseq
  %v803 = vshrl.u32 %v802, 7
  %v804 = vsub.s32 0, %v803
  %v805 = vrot.slane %v722, %v804
  %v806 = vsub.f32 %v800, %v805
  %v807 = vmul.f32 %v764, %v764
  %v808 = vmul.f32 %v806, %v806
  %v809 = vadd.f32 %v807, %v808
  %v810 = vadd.f32 %v809, %v86
  %v811 = vrsqrt.pop %v810
  %v812 = vmul.f32 %v85, %v811
  %v813 = vmul.f32 %v812, %v812
  %v814 = vmul.f32 %v813, %v812
  %v815 = vmul.f32 %v189, %v814
  %v816 = vmul.f32 %v815, %v764
  %v817 = vsel %vm88, %v816, 0.0
  %v818 = vrot.slane %v817, 4
  %v819 = vadd.f32 %v817, %v818
  %v820 = vrot.slane %v819, 2
  %v821 = vadd.f32 %v819, %v820
  %v822 = vrot.slane %v821, 1
  %v823 = vadd.f32 %v821, %v822
  %v824 = vmul.f32 %v815, %v806
  %v825 = vsel %vm88, %v824, 0.0
  %v826 = vrot.slane %v825, 4
  %v827 = vadd.f32 %v825, %v826
  %v828 = vrot.slane %v827, 2
  %v829 = vadd.f32 %v827, %v828
  %v830 = vrot.slane %v829, 1
  %v831 = vadd.f32 %v829, %v830
  %v832 = vmul.f32 %v74, %v812
  %v833 = vsel %vm88, %v832, 0.0
  %834 = vadd.xlane.f32.xlu0 %v833
  %v835 = vpop.xlane.xlu0 %834
  %v836 = vrot.slane %v835, 4
  %v837 = vadd.f32 %v835, %v836
  %v838 = vrot.slane %v837, 2
  %v839 = vadd.f32 %v837, %v838
  %v840 = vrot.slane %v839, 1
  %v841 = vadd.f32 %v839, %v840
  %s842 = vtos %v841
  %v843 = vstv %s842
  %v844 = vmul.f32 %v716, %v716
  %v845 = vmul.f32 %v718, %v718
  %v846 = vadd.f32 %v844, %v845
  %v847 = vmul.f32 %v27, %v846
  %v848 = vsel %vm224, %v847, 0.0
  %849 = vadd.xlane.f32.xlu0 %v848
  %v850 = vpop.xlane.xlu0 %849
  %v851 = vrot.slane %v850, 4
  %v852 = vadd.f32 %v850, %v851
  %v853 = vrot.slane %v852, 2
  %v854 = vadd.f32 %v852, %v853
  %v855 = vrot.slane %v854, 1
  %v856 = vadd.f32 %v854, %v855
  %s857 = vtos %v856
  %v858 = vstv %s857
  %v859 = vmul.f32 %v858, 0.5
  %v860 = vadd.f32 %v859, %v843
  %861 = vst.msk [vmem:[#allocation3 + $0x4] sm:$0x1] %vm224, %v720
  %862 = vst.msk [vmem:[%s239 + $0x4] sm:$0x1] %vm224, %v722
  %863 = vst.msk [vmem:[%s241 + $0x4] sm:$0x1] %vm224, %v716
  %864 = vst.msk [vmem:[%s243 + $0x4] sm:$0x1] %vm224, %v718
  %865 = vst.msk [vmem:[%s245 + $0x4] sm:$0x1] %vm224, %v823
  %866 = vst.msk [vmem:[%s247 + $0x4] sm:$0x1] %vm224, %v831
  %867 = vst.msk [vmem:[%s249 + $0x4] sm:$0x1] %vm224, %v860
  %868 = vst.msk [vmem:[%s251 + $0x4] sm:$0x1] %vm224, %v843
  %v869 = vmul.f32 %v823, 0.02
  %v870 = vadd.f32 %v716, %v869
  %v871 = vmul.f32 %v831, 0.02
  %v872 = vadd.f32 %v718, %v871
  %v873 = vmul.f32 %v870, 0.02
  %v874 = vadd.f32 %v720, %v873
  %v875 = vmul.f32 %v872, 0.02
  %v876 = vadd.f32 %v722, %v875
  %877 = vxpose.xlu0.b32.start [1/16] %v874, 128
  %878 = vxpose.xlu0.b32.cont [2/16] 0.0, 128
  %879 = vxpose.xlu0.b32.cont [3/16] 0.0, 128
  %880 = vxpose.xlu0.b32.cont [4/16] 0.0, 128
  %881 = vxpose.xlu0.b32.cont [5/16] 0.0, 128
  %882 = vxpose.xlu0.b32.cont [6/16] 0.0, 128
  %883 = vxpose.xlu0.b32.cont [7/16] 0.0, 128
  %884 = vxpose.xlu0.b32.cont [8/16] 0.0, 128
  %885 = vxpose.xlu0.b32.cont [9/16] 0.0, 128
  %886 = vxpose.xlu0.b32.cont [10/16] 0.0, 128
  %887 = vxpose.xlu0.b32.cont [11/16] 0.0, 128
  %888 = vxpose.xlu0.b32.cont [12/16] 0.0, 128
  %889 = vxpose.xlu0.b32.cont [13/16] 0.0, 128
  %890 = vxpose.xlu0.b32.cont [14/16] 0.0, 128
  %891 = vxpose.xlu0.b32.cont [15/16] 0.0, 128
  %892 = vxpose.xlu0.b32.end [16/16] 0.0, 128
  %v893 = vpop.trf.xlu0
  %v894 = vpop.trf.xlu0
  %v895 = vpop.trf.xlu0
  %v896 = vpop.trf.xlu0
  %v897 = vpop.trf.xlu0
  %v898 = vpop.trf.xlu0
  %v899 = vpop.trf.xlu0
  %v900 = vpop.trf.xlu0
  %v901 = vpop.trf.xlu0
  %v902 = vpop.trf.xlu0
  %v903 = vpop.trf.xlu0
  %v904 = vpop.trf.xlu0
  %v905 = vpop.trf.xlu0
  %v906 = vpop.trf.xlu0
  %v907 = vpop.trf.xlu0
  %v908 = vpop.trf.xlu0
  %910 = vset.pattern.permute.xlu0 0
  %911 = vperm.xlu0 %910, %v893
  %v912 = vpop.permute.xlu0 %911
  %v914 = vlaneseq
  %v915 = vshrl.u32 %v914, 7
  %v916 = vsub.s32 0, %v915
  %v917 = vrot.slane %v874, %v916
  %v918 = vsub.f32 %v912, %v917
  %919 = vxpose.xlu0.b32.start [1/16] %v876, 128
  %920 = vxpose.xlu0.b32.cont [2/16] 0.0, 128
  %921 = vxpose.xlu0.b32.cont [3/16] 0.0, 128
  %922 = vxpose.xlu0.b32.cont [4/16] 0.0, 128
  %923 = vxpose.xlu0.b32.cont [5/16] 0.0, 128
  %924 = vxpose.xlu0.b32.cont [6/16] 0.0, 128
  %925 = vxpose.xlu0.b32.cont [7/16] 0.0, 128
  %926 = vxpose.xlu0.b32.cont [8/16] 0.0, 128
  %927 = vxpose.xlu0.b32.cont [9/16] 0.0, 128
  %928 = vxpose.xlu0.b32.cont [10/16] 0.0, 128
  %929 = vxpose.xlu0.b32.cont [11/16] 0.0, 128
  %930 = vxpose.xlu0.b32.cont [12/16] 0.0, 128
  %931 = vxpose.xlu0.b32.cont [13/16] 0.0, 128
  %932 = vxpose.xlu0.b32.cont [14/16] 0.0, 128
  %933 = vxpose.xlu0.b32.cont [15/16] 0.0, 128
  %934 = vxpose.xlu0.b32.end [16/16] 0.0, 128
  %v935 = vpop.trf.xlu0
  %v936 = vpop.trf.xlu0
  %v937 = vpop.trf.xlu0
  %v938 = vpop.trf.xlu0
  %v939 = vpop.trf.xlu0
  %v940 = vpop.trf.xlu0
  %v941 = vpop.trf.xlu0
  %v942 = vpop.trf.xlu0
  %v943 = vpop.trf.xlu0
  %v944 = vpop.trf.xlu0
  %v945 = vpop.trf.xlu0
  %v946 = vpop.trf.xlu0
  %v947 = vpop.trf.xlu0
  %v948 = vpop.trf.xlu0
  %v949 = vpop.trf.xlu0
  %v950 = vpop.trf.xlu0
  %952 = vset.pattern.permute.xlu0 0
  %953 = vperm.xlu0 %952, %v935
  %v954 = vpop.permute.xlu0 %953
  %v956 = vlaneseq
  %v957 = vshrl.u32 %v956, 7
  %v958 = vsub.s32 0, %v957
  %v959 = vrot.slane %v876, %v958
  %v960 = vsub.f32 %v954, %v959
  %v961 = vmul.f32 %v918, %v918
  %v962 = vmul.f32 %v960, %v960
  %v963 = vadd.f32 %v961, %v962
  %v964 = vadd.f32 %v963, %v86
  %v965 = vrsqrt.pop %v964
  %v966 = vmul.f32 %v85, %v965
  %v967 = vmul.f32 %v966, %v966
  %v968 = vmul.f32 %v967, %v966
  %v969 = vmul.f32 %v189, %v968
  %v970 = vmul.f32 %v969, %v918
  %v971 = vsel %vm88, %v970, 0.0
  %v972 = vrot.slane %v971, 4
  %v973 = vadd.f32 %v971, %v972
  %v974 = vrot.slane %v973, 2
  %v975 = vadd.f32 %v973, %v974
  %v976 = vrot.slane %v975, 1
  %v977 = vadd.f32 %v975, %v976
  %v978 = vmul.f32 %v969, %v960
  %v979 = vsel %vm88, %v978, 0.0
  %v980 = vrot.slane %v979, 4
  %v981 = vadd.f32 %v979, %v980
  %v982 = vrot.slane %v981, 2
  %v983 = vadd.f32 %v981, %v982
  %v984 = vrot.slane %v983, 1
  %v985 = vadd.f32 %v983, %v984
  %v986 = vmul.f32 %v74, %v966
  %v987 = vsel %vm88, %v986, 0.0
  %988 = vadd.xlane.f32.xlu0 %v987
  %v989 = vpop.xlane.xlu0 %988
  %v990 = vrot.slane %v989, 4
  %v991 = vadd.f32 %v989, %v990
  %v992 = vrot.slane %v991, 2
  %v993 = vadd.f32 %v991, %v992
  %v994 = vrot.slane %v993, 1
  %v995 = vadd.f32 %v993, %v994
  %s996 = vtos %v995
  %v997 = vstv %s996
  %v998 = vmul.f32 %v870, %v870
  %v999 = vmul.f32 %v872, %v872
  %v1000 = vadd.f32 %v998, %v999
  %v1001 = vmul.f32 %v27, %v1000
  %v1002 = vsel %vm224, %v1001, 0.0
  %1003 = vadd.xlane.f32.xlu0 %v1002
  %v1004 = vpop.xlane.xlu0 %1003
  %v1005 = vrot.slane %v1004, 4
  %v1006 = vadd.f32 %v1004, %v1005
  %v1007 = vrot.slane %v1006, 2
  %v1008 = vadd.f32 %v1006, %v1007
  %v1009 = vrot.slane %v1008, 1
  %v1010 = vadd.f32 %v1008, %v1009
  %s1011 = vtos %v1010
  %v1012 = vstv %s1011
  %v1013 = vmul.f32 %v1012, 0.5
  %v1014 = vadd.f32 %v1013, %v997
  %1015 = vst.msk [vmem:[#allocation3 + $0x5] sm:$0x1] %vm224, %v874
  %1016 = vst.msk [vmem:[%s239 + $0x5] sm:$0x1] %vm224, %v876
  %1017 = vst.msk [vmem:[%s241 + $0x5] sm:$0x1] %vm224, %v870
  %1018 = vst.msk [vmem:[%s243 + $0x5] sm:$0x1] %vm224, %v872
  %1019 = vst.msk [vmem:[%s245 + $0x5] sm:$0x1] %vm224, %v977
  %1020 = vst.msk [vmem:[%s247 + $0x5] sm:$0x1] %vm224, %v985
  %1021 = vst.msk [vmem:[%s249 + $0x5] sm:$0x1] %vm224, %v1014
  %1022 = vst.msk [vmem:[%s251 + $0x5] sm:$0x1] %vm224, %v997
  %v1023 = vmul.f32 %v977, 0.02
  %v1024 = vadd.f32 %v870, %v1023
  %v1025 = vmul.f32 %v985, 0.02
  %v1026 = vadd.f32 %v872, %v1025
  %v1027 = vmul.f32 %v1024, 0.02
  %v1028 = vadd.f32 %v874, %v1027
  %v1029 = vmul.f32 %v1026, 0.02
  %v1030 = vadd.f32 %v876, %v1029
  %1031 = vxpose.xlu0.b32.start [1/16] %v1028, 128
  %1032 = vxpose.xlu0.b32.cont [2/16] 0.0, 128
  %1033 = vxpose.xlu0.b32.cont [3/16] 0.0, 128
  %1034 = vxpose.xlu0.b32.cont [4/16] 0.0, 128
  %1035 = vxpose.xlu0.b32.cont [5/16] 0.0, 128
  %1036 = vxpose.xlu0.b32.cont [6/16] 0.0, 128
  %1037 = vxpose.xlu0.b32.cont [7/16] 0.0, 128
  %1038 = vxpose.xlu0.b32.cont [8/16] 0.0, 128
  %1039 = vxpose.xlu0.b32.cont [9/16] 0.0, 128
  %1040 = vxpose.xlu0.b32.cont [10/16] 0.0, 128
  %1041 = vxpose.xlu0.b32.cont [11/16] 0.0, 128
  %1042 = vxpose.xlu0.b32.cont [12/16] 0.0, 128
  %1043 = vxpose.xlu0.b32.cont [13/16] 0.0, 128
  %1044 = vxpose.xlu0.b32.cont [14/16] 0.0, 128
  %1045 = vxpose.xlu0.b32.cont [15/16] 0.0, 128
  %1046 = vxpose.xlu0.b32.end [16/16] 0.0, 128
  %v1047 = vpop.trf.xlu0
  %v1048 = vpop.trf.xlu0
  %v1049 = vpop.trf.xlu0
  %v1050 = vpop.trf.xlu0
  %v1051 = vpop.trf.xlu0
  %v1052 = vpop.trf.xlu0
  %v1053 = vpop.trf.xlu0
  %v1054 = vpop.trf.xlu0
  %v1055 = vpop.trf.xlu0
  %v1056 = vpop.trf.xlu0
  %v1057 = vpop.trf.xlu0
  %v1058 = vpop.trf.xlu0
  %v1059 = vpop.trf.xlu0
  %v1060 = vpop.trf.xlu0
  %v1061 = vpop.trf.xlu0
  %v1062 = vpop.trf.xlu0
  %1064 = vset.pattern.permute.xlu0 0
  %1065 = vperm.xlu0 %1064, %v1047
  %v1066 = vpop.permute.xlu0 %1065
  %v1068 = vlaneseq
  %v1069 = vshrl.u32 %v1068, 7
  %v1070 = vsub.s32 0, %v1069
  %v1071 = vrot.slane %v1028, %v1070
  %v1072 = vsub.f32 %v1066, %v1071
  %1073 = vxpose.xlu0.b32.start [1/16] %v1030, 128
  %1074 = vxpose.xlu0.b32.cont [2/16] 0.0, 128
  %1075 = vxpose.xlu0.b32.cont [3/16] 0.0, 128
  %1076 = vxpose.xlu0.b32.cont [4/16] 0.0, 128
  %1077 = vxpose.xlu0.b32.cont [5/16] 0.0, 128
  %1078 = vxpose.xlu0.b32.cont [6/16] 0.0, 128
  %1079 = vxpose.xlu0.b32.cont [7/16] 0.0, 128
  %1080 = vxpose.xlu0.b32.cont [8/16] 0.0, 128
  %1081 = vxpose.xlu0.b32.cont [9/16] 0.0, 128
  %1082 = vxpose.xlu0.b32.cont [10/16] 0.0, 128
  %1083 = vxpose.xlu0.b32.cont [11/16] 0.0, 128
  %1084 = vxpose.xlu0.b32.cont [12/16] 0.0, 128
  %1085 = vxpose.xlu0.b32.cont [13/16] 0.0, 128
  %1086 = vxpose.xlu0.b32.cont [14/16] 0.0, 128
  %1087 = vxpose.xlu0.b32.cont [15/16] 0.0, 128
  %1088 = vxpose.xlu0.b32.end [16/16] 0.0, 128
  %v1089 = vpop.trf.xlu0
  %v1090 = vpop.trf.xlu0
  %v1091 = vpop.trf.xlu0
  %v1092 = vpop.trf.xlu0
  %v1093 = vpop.trf.xlu0
  %v1094 = vpop.trf.xlu0
  %v1095 = vpop.trf.xlu0
  %v1096 = vpop.trf.xlu0
  %v1097 = vpop.trf.xlu0
  %v1098 = vpop.trf.xlu0
  %v1099 = vpop.trf.xlu0
  %v1100 = vpop.trf.xlu0
  %v1101 = vpop.trf.xlu0
  %v1102 = vpop.trf.xlu0
  %v1103 = vpop.trf.xlu0
  %v1104 = vpop.trf.xlu0
  %1106 = vset.pattern.permute.xlu0 0
  %1107 = vperm.xlu0 %1106, %v1089
  %v1108 = vpop.permute.xlu0 %1107
  %v1110 = vlaneseq
  %v1111 = vshrl.u32 %v1110, 7
  %v1112 = vsub.s32 0, %v1111
  %v1113 = vrot.slane %v1030, %v1112
  %v1114 = vsub.f32 %v1108, %v1113
  %v1115 = vmul.f32 %v1072, %v1072
  %v1116 = vmul.f32 %v1114, %v1114
  %v1117 = vadd.f32 %v1115, %v1116
  %v1118 = vadd.f32 %v1117, %v86
  %v1119 = vrsqrt.pop %v1118
  %v1120 = vmul.f32 %v85, %v1119
  %v1121 = vmul.f32 %v1120, %v1120
  %v1122 = vmul.f32 %v1121, %v1120
  %v1123 = vmul.f32 %v189, %v1122
  %v1124 = vmul.f32 %v1123, %v1072
  %v1125 = vsel %vm88, %v1124, 0.0
  %v1126 = vrot.slane %v1125, 4
  %v1127 = vadd.f32 %v1125, %v1126
  %v1128 = vrot.slane %v1127, 2
  %v1129 = vadd.f32 %v1127, %v1128
  %v1130 = vrot.slane %v1129, 1
  %v1131 = vadd.f32 %v1129, %v1130
  %v1132 = vmul.f32 %v1123, %v1114
  %v1133 = vsel %vm88, %v1132, 0.0
  %v1134 = vrot.slane %v1133, 4
  %v1135 = vadd.f32 %v1133, %v1134
  %v1136 = vrot.slane %v1135, 2
  %v1137 = vadd.f32 %v1135, %v1136
  %v1138 = vrot.slane %v1137, 1
  %v1139 = vadd.f32 %v1137, %v1138
  %v1140 = vmul.f32 %v74, %v1120
  %v1141 = vsel %vm88, %v1140, 0.0
  %1142 = vadd.xlane.f32.xlu0 %v1141
  %v1143 = vpop.xlane.xlu0 %1142
  %v1144 = vrot.slane %v1143, 4
  %v1145 = vadd.f32 %v1143, %v1144
  %v1146 = vrot.slane %v1145, 2
  %v1147 = vadd.f32 %v1145, %v1146
  %v1148 = vrot.slane %v1147, 1
  %v1149 = vadd.f32 %v1147, %v1148
  %s1150 = vtos %v1149
  %v1151 = vstv %s1150
  %v1152 = vmul.f32 %v1024, %v1024
  %v1153 = vmul.f32 %v1026, %v1026
  %v1154 = vadd.f32 %v1152, %v1153
  %v1155 = vmul.f32 %v27, %v1154
  %v1156 = vsel %vm224, %v1155, 0.0
  %1157 = vadd.xlane.f32.xlu0 %v1156
  %v1158 = vpop.xlane.xlu0 %1157
  %v1159 = vrot.slane %v1158, 4
  %v1160 = vadd.f32 %v1158, %v1159
  %v1161 = vrot.slane %v1160, 2
  %v1162 = vadd.f32 %v1160, %v1161
  %v1163 = vrot.slane %v1162, 1
  %v1164 = vadd.f32 %v1162, %v1163
  %s1165 = vtos %v1164
  %v1166 = vstv %s1165
  %v1167 = vmul.f32 %v1166, 0.5
  %v1168 = vadd.f32 %v1167, %v1151
  %1169 = vst.msk [vmem:[#allocation3 + $0x6] sm:$0x1] %vm224, %v1028
  %1170 = vst.msk [vmem:[%s239 + $0x6] sm:$0x1] %vm224, %v1030
  %1171 = vst.msk [vmem:[%s241 + $0x6] sm:$0x1] %vm224, %v1024
  %1172 = vst.msk [vmem:[%s243 + $0x6] sm:$0x1] %vm224, %v1026
  %1173 = vst.msk [vmem:[%s245 + $0x6] sm:$0x1] %vm224, %v1131
  %1174 = vst.msk [vmem:[%s247 + $0x6] sm:$0x1] %vm224, %v1139
  %1175 = vst.msk [vmem:[%s249 + $0x6] sm:$0x1] %vm224, %v1168
  %1176 = vst.msk [vmem:[%s251 + $0x6] sm:$0x1] %vm224, %v1151
  %v1177 = vmul.f32 %v1131, 0.02
  %v1178 = vadd.f32 %v1024, %v1177
  %v1179 = vmul.f32 %v1139, 0.02
  %v1180 = vadd.f32 %v1026, %v1179
  %v1181 = vmul.f32 %v1178, 0.02
  %v1182 = vadd.f32 %v1028, %v1181
  %v1183 = vmul.f32 %v1180, 0.02
  %v1184 = vadd.f32 %v1030, %v1183
  %1185 = vxpose.xlu0.b32.start [1/16] %v1182, 128
  %1186 = vxpose.xlu0.b32.cont [2/16] 0.0, 128
  %1187 = vxpose.xlu0.b32.cont [3/16] 0.0, 128
  %1188 = vxpose.xlu0.b32.cont [4/16] 0.0, 128
  %1189 = vxpose.xlu0.b32.cont [5/16] 0.0, 128
  %1190 = vxpose.xlu0.b32.cont [6/16] 0.0, 128
  %1191 = vxpose.xlu0.b32.cont [7/16] 0.0, 128
  %1192 = vxpose.xlu0.b32.cont [8/16] 0.0, 128
  %1193 = vxpose.xlu0.b32.cont [9/16] 0.0, 128
  %1194 = vxpose.xlu0.b32.cont [10/16] 0.0, 128
  %1195 = vxpose.xlu0.b32.cont [11/16] 0.0, 128
  %1196 = vxpose.xlu0.b32.cont [12/16] 0.0, 128
  %1197 = vxpose.xlu0.b32.cont [13/16] 0.0, 128
  %1198 = vxpose.xlu0.b32.cont [14/16] 0.0, 128
  %1199 = vxpose.xlu0.b32.cont [15/16] 0.0, 128
  %1200 = vxpose.xlu0.b32.end [16/16] 0.0, 128
  %v1201 = vpop.trf.xlu0
  %v1202 = vpop.trf.xlu0
  %v1203 = vpop.trf.xlu0
  %v1204 = vpop.trf.xlu0
  %v1205 = vpop.trf.xlu0
  %v1206 = vpop.trf.xlu0
  %v1207 = vpop.trf.xlu0
  %v1208 = vpop.trf.xlu0
  %v1209 = vpop.trf.xlu0
  %v1210 = vpop.trf.xlu0
  %v1211 = vpop.trf.xlu0
  %v1212 = vpop.trf.xlu0
  %v1213 = vpop.trf.xlu0
  %v1214 = vpop.trf.xlu0
  %v1215 = vpop.trf.xlu0
  %v1216 = vpop.trf.xlu0
  %1218 = vset.pattern.permute.xlu0 0
  %1219 = vperm.xlu0 %1218, %v1201
  %v1220 = vpop.permute.xlu0 %1219
  %v1222 = vlaneseq
  %v1223 = vshrl.u32 %v1222, 7
  %v1224 = vsub.s32 0, %v1223
  %v1225 = vrot.slane %v1182, %v1224
  %v1226 = vsub.f32 %v1220, %v1225
  %1227 = vxpose.xlu0.b32.start [1/16] %v1184, 128
  %1228 = vxpose.xlu0.b32.cont [2/16] 0.0, 128
  %1229 = vxpose.xlu0.b32.cont [3/16] 0.0, 128
  %1230 = vxpose.xlu0.b32.cont [4/16] 0.0, 128
  %1231 = vxpose.xlu0.b32.cont [5/16] 0.0, 128
  %1232 = vxpose.xlu0.b32.cont [6/16] 0.0, 128
  %1233 = vxpose.xlu0.b32.cont [7/16] 0.0, 128
  %1234 = vxpose.xlu0.b32.cont [8/16] 0.0, 128
  %1235 = vxpose.xlu0.b32.cont [9/16] 0.0, 128
  %1236 = vxpose.xlu0.b32.cont [10/16] 0.0, 128
  %1237 = vxpose.xlu0.b32.cont [11/16] 0.0, 128
  %1238 = vxpose.xlu0.b32.cont [12/16] 0.0, 128
  %1239 = vxpose.xlu0.b32.cont [13/16] 0.0, 128
  %1240 = vxpose.xlu0.b32.cont [14/16] 0.0, 128
  %1241 = vxpose.xlu0.b32.cont [15/16] 0.0, 128
  %1242 = vxpose.xlu0.b32.end [16/16] 0.0, 128
  %v1243 = vpop.trf.xlu0
  %v1244 = vpop.trf.xlu0
  %v1245 = vpop.trf.xlu0
  %v1246 = vpop.trf.xlu0
  %v1247 = vpop.trf.xlu0
  %v1248 = vpop.trf.xlu0
  %v1249 = vpop.trf.xlu0
  %v1250 = vpop.trf.xlu0
  %v1251 = vpop.trf.xlu0
  %v1252 = vpop.trf.xlu0
  %v1253 = vpop.trf.xlu0
  %v1254 = vpop.trf.xlu0
  %v1255 = vpop.trf.xlu0
  %v1256 = vpop.trf.xlu0
  %v1257 = vpop.trf.xlu0
  %v1258 = vpop.trf.xlu0
  %1260 = vset.pattern.permute.xlu0 0
  %1261 = vperm.xlu0 %1260, %v1243
  %v1262 = vpop.permute.xlu0 %1261
  %v1264 = vlaneseq
  %v1265 = vshrl.u32 %v1264, 7
  %v1266 = vsub.s32 0, %v1265
  %v1267 = vrot.slane %v1184, %v1266
  %v1268 = vsub.f32 %v1262, %v1267
  %v1269 = vmul.f32 %v1226, %v1226
  %v1270 = vmul.f32 %v1268, %v1268
  %v1271 = vadd.f32 %v1269, %v1270
  %v1272 = vadd.f32 %v1271, %v86
  %v1273 = vrsqrt.pop %v1272
  %v1274 = vmul.f32 %v85, %v1273
  %v1275 = vmul.f32 %v1274, %v1274
  %v1276 = vmul.f32 %v1275, %v1274
  %v1277 = vmul.f32 %v189, %v1276
  %v1278 = vmul.f32 %v1277, %v1226
  %v1279 = vsel %vm88, %v1278, 0.0
  %v1280 = vrot.slane %v1279, 4
  %v1281 = vadd.f32 %v1279, %v1280
  %v1282 = vrot.slane %v1281, 2
  %v1283 = vadd.f32 %v1281, %v1282
  %v1284 = vrot.slane %v1283, 1
  %v1285 = vadd.f32 %v1283, %v1284
  %v1286 = vmul.f32 %v1277, %v1268
  %v1287 = vsel %vm88, %v1286, 0.0
  %v1288 = vrot.slane %v1287, 4
  %v1289 = vadd.f32 %v1287, %v1288
  %v1290 = vrot.slane %v1289, 2
  %v1291 = vadd.f32 %v1289, %v1290
  %v1292 = vrot.slane %v1291, 1
  %v1293 = vadd.f32 %v1291, %v1292
  %v1294 = vmul.f32 %v74, %v1274
  %v1295 = vsel %vm88, %v1294, 0.0
  %1296 = vadd.xlane.f32.xlu0 %v1295
  %v1297 = vpop.xlane.xlu0 %1296
  %v1298 = vrot.slane %v1297, 4
  %v1299 = vadd.f32 %v1297, %v1298
  %v1300 = vrot.slane %v1299, 2
  %v1301 = vadd.f32 %v1299, %v1300
  %v1302 = vrot.slane %v1301, 1
  %v1303 = vadd.f32 %v1301, %v1302
  %s1304 = vtos %v1303
  %v1305 = vstv %s1304
  %v1306 = vmul.f32 %v1178, %v1178
  %v1307 = vmul.f32 %v1180, %v1180
  %v1308 = vadd.f32 %v1306, %v1307
  %v1309 = vmul.f32 %v27, %v1308
  %v1310 = vsel %vm224, %v1309, 0.0
  %1311 = vadd.xlane.f32.xlu0 %v1310
  %v1312 = vpop.xlane.xlu0 %1311
  %v1313 = vrot.slane %v1312, 4
  %v1314 = vadd.f32 %v1312, %v1313
  %v1315 = vrot.slane %v1314, 2
  %v1316 = vadd.f32 %v1314, %v1315
  %v1317 = vrot.slane %v1316, 1
  %v1318 = vadd.f32 %v1316, %v1317
  %s1319 = vtos %v1318
  %v1320 = vstv %s1319
  %v1321 = vmul.f32 %v1320, 0.5
  %v1322 = vadd.f32 %v1321, %v1305
  %1323 = vst.msk [vmem:[#allocation3 + $0x7] sm:$0x1] %vm224, %v1182
  %1324 = vst.msk [vmem:[%s239 + $0x7] sm:$0x1] %vm224, %v1184
  %1325 = vst.msk [vmem:[%s241 + $0x7] sm:$0x1] %vm224, %v1178
  %1326 = vst.msk [vmem:[%s243 + $0x7] sm:$0x1] %vm224, %v1180
  %1327 = vst.msk [vmem:[%s245 + $0x7] sm:$0x1] %vm224, %v1285
  %1328 = vst.msk [vmem:[%s247 + $0x7] sm:$0x1] %vm224, %v1293
  %1329 = vst.msk [vmem:[%s249 + $0x7] sm:$0x1] %vm224, %v1322
  %1330 = vst.msk [vmem:[%s251 + $0x7] sm:$0x1] %vm224, %v1305
  %v1331 = vmul.f32 %v1285, 0.02
  %v1332 = vadd.f32 %v1178, %v1331
  %v1333 = vmul.f32 %v1293, 0.02
  %v1334 = vadd.f32 %v1180, %v1333
  %v1335 = vmul.f32 %v1332, 0.02
  %v1336 = vadd.f32 %v1182, %v1335
  %v1337 = vmul.f32 %v1334, 0.02
  %v1338 = vadd.f32 %v1184, %v1337
  %1339 = vst.msk [vmem:[#allocation2] sm:$0x1] %vm224, %v1336
  %1340 = vst.msk [vmem:[#allocation2 + $0x1] sm:$0x1] %vm224, %v1338
  %1341 = vst.msk [vmem:[#allocation2 + $0x2] sm:$0x1] %vm224, %v1332
  %1342 = vst.msk [vmem:[#allocation2 + $0x3] sm:$0x1] %vm224, %v1334
  %v1343 = vld [vmem:[#allocation3] sm:$0xff]
  %1344 = vxpose.xlu0.b32.start [1/16] %v1343, 128
  %1345 = vxpose.xlu0.b32.cont [2/16] 0.0, 128
  %1346 = vxpose.xlu0.b32.cont [3/16] 0.0, 128
  %1347 = vxpose.xlu0.b32.cont [4/16] 0.0, 128
  %1348 = vxpose.xlu0.b32.cont [5/16] 0.0, 128
  %1349 = vxpose.xlu0.b32.cont [6/16] 0.0, 128
  %1350 = vxpose.xlu0.b32.cont [7/16] 0.0, 128
  %1351 = vxpose.xlu0.b32.cont [8/16] 0.0, 128
  %1352 = vxpose.xlu0.b32.cont [9/16] 0.0, 128
  %1353 = vxpose.xlu0.b32.cont [10/16] 0.0, 128
  %1354 = vxpose.xlu0.b32.cont [11/16] 0.0, 128
  %1355 = vxpose.xlu0.b32.cont [12/16] 0.0, 128
  %1356 = vxpose.xlu0.b32.cont [13/16] 0.0, 128
  %1357 = vxpose.xlu0.b32.cont [14/16] 0.0, 128
  %1358 = vxpose.xlu0.b32.cont [15/16] 0.0, 128
  %1359 = vxpose.xlu0.b32.end [16/16] 0.0, 128
  %v1360 = vpop.trf.xlu0
  %v1361 = vpop.trf.xlu0
  %v1362 = vpop.trf.xlu0
  %v1363 = vpop.trf.xlu0
  %v1364 = vpop.trf.xlu0
  %v1365 = vpop.trf.xlu0
  %v1366 = vpop.trf.xlu0
  %v1367 = vpop.trf.xlu0
  %v1368 = vpop.trf.xlu0
  %v1369 = vpop.trf.xlu0
  %v1370 = vpop.trf.xlu0
  %v1371 = vpop.trf.xlu0
  %v1372 = vpop.trf.xlu0
  %v1373 = vpop.trf.xlu0
  %v1374 = vpop.trf.xlu0
  %v1375 = vpop.trf.xlu0
  %1376 = vst.msk [vmem:[%s2] sm:$0xff] %vm88, %v1360
  %v1377 = vld [vmem:[%s239] sm:$0xff]
  %1378 = vxpose.xlu0.b32.start [1/16] %v1377, 128
  %1379 = vxpose.xlu0.b32.cont [2/16] 0.0, 128
  %1380 = vxpose.xlu0.b32.cont [3/16] 0.0, 128
  %1381 = vxpose.xlu0.b32.cont [4/16] 0.0, 128
  %1382 = vxpose.xlu0.b32.cont [5/16] 0.0, 128
  %1383 = vxpose.xlu0.b32.cont [6/16] 0.0, 128
  %1384 = vxpose.xlu0.b32.cont [7/16] 0.0, 128
  %1385 = vxpose.xlu0.b32.cont [8/16] 0.0, 128
  %1386 = vxpose.xlu0.b32.cont [9/16] 0.0, 128
  %1387 = vxpose.xlu0.b32.cont [10/16] 0.0, 128
  %1388 = vxpose.xlu0.b32.cont [11/16] 0.0, 128
  %1389 = vxpose.xlu0.b32.cont [12/16] 0.0, 128
  %1390 = vxpose.xlu0.b32.cont [13/16] 0.0, 128
  %1391 = vxpose.xlu0.b32.cont [14/16] 0.0, 128
  %1392 = vxpose.xlu0.b32.cont [15/16] 0.0, 128
  %1393 = vxpose.xlu0.b32.end [16/16] 0.0, 128
  %v1394 = vpop.trf.xlu0
  %v1395 = vpop.trf.xlu0
  %v1396 = vpop.trf.xlu0
  %v1397 = vpop.trf.xlu0
  %v1398 = vpop.trf.xlu0
  %v1399 = vpop.trf.xlu0
  %v1400 = vpop.trf.xlu0
  %v1401 = vpop.trf.xlu0
  %v1402 = vpop.trf.xlu0
  %v1403 = vpop.trf.xlu0
  %v1404 = vpop.trf.xlu0
  %v1405 = vpop.trf.xlu0
  %v1406 = vpop.trf.xlu0
  %v1407 = vpop.trf.xlu0
  %v1408 = vpop.trf.xlu0
  %v1409 = vpop.trf.xlu0
  %s1410 = scalar_lea.vmem %s2, 8
  %1411 = vst.msk [vmem:[%s1410] sm:$0xff] %vm88, %v1394
  %v1412 = vld [vmem:[%s241] sm:$0xff]
  %1413 = vxpose.xlu0.b32.start [1/16] %v1412, 128
  %1414 = vxpose.xlu0.b32.cont [2/16] 0.0, 128
  %1415 = vxpose.xlu0.b32.cont [3/16] 0.0, 128
  %1416 = vxpose.xlu0.b32.cont [4/16] 0.0, 128
  %1417 = vxpose.xlu0.b32.cont [5/16] 0.0, 128
  %1418 = vxpose.xlu0.b32.cont [6/16] 0.0, 128
  %1419 = vxpose.xlu0.b32.cont [7/16] 0.0, 128
  %1420 = vxpose.xlu0.b32.cont [8/16] 0.0, 128
  %1421 = vxpose.xlu0.b32.cont [9/16] 0.0, 128
  %1422 = vxpose.xlu0.b32.cont [10/16] 0.0, 128
  %1423 = vxpose.xlu0.b32.cont [11/16] 0.0, 128
  %1424 = vxpose.xlu0.b32.cont [12/16] 0.0, 128
  %1425 = vxpose.xlu0.b32.cont [13/16] 0.0, 128
  %1426 = vxpose.xlu0.b32.cont [14/16] 0.0, 128
  %1427 = vxpose.xlu0.b32.cont [15/16] 0.0, 128
  %1428 = vxpose.xlu0.b32.end [16/16] 0.0, 128
  %v1429 = vpop.trf.xlu0
  %v1430 = vpop.trf.xlu0
  %v1431 = vpop.trf.xlu0
  %v1432 = vpop.trf.xlu0
  %v1433 = vpop.trf.xlu0
  %v1434 = vpop.trf.xlu0
  %v1435 = vpop.trf.xlu0
  %v1436 = vpop.trf.xlu0
  %v1437 = vpop.trf.xlu0
  %v1438 = vpop.trf.xlu0
  %v1439 = vpop.trf.xlu0
  %v1440 = vpop.trf.xlu0
  %v1441 = vpop.trf.xlu0
  %v1442 = vpop.trf.xlu0
  %v1443 = vpop.trf.xlu0
  %v1444 = vpop.trf.xlu0
  %s1445 = scalar_lea.vmem %s2, 16
  %1446 = vst.msk [vmem:[%s1445] sm:$0xff] %vm88, %v1429
  %v1447 = vld [vmem:[%s243] sm:$0xff]
  %1448 = vxpose.xlu0.b32.start [1/16] %v1447, 128
  %1449 = vxpose.xlu0.b32.cont [2/16] 0.0, 128
  %1450 = vxpose.xlu0.b32.cont [3/16] 0.0, 128
  %1451 = vxpose.xlu0.b32.cont [4/16] 0.0, 128
  %1452 = vxpose.xlu0.b32.cont [5/16] 0.0, 128
  %1453 = vxpose.xlu0.b32.cont [6/16] 0.0, 128
  %1454 = vxpose.xlu0.b32.cont [7/16] 0.0, 128
  %1455 = vxpose.xlu0.b32.cont [8/16] 0.0, 128
  %1456 = vxpose.xlu0.b32.cont [9/16] 0.0, 128
  %1457 = vxpose.xlu0.b32.cont [10/16] 0.0, 128
  %1458 = vxpose.xlu0.b32.cont [11/16] 0.0, 128
  %1459 = vxpose.xlu0.b32.cont [12/16] 0.0, 128
  %1460 = vxpose.xlu0.b32.cont [13/16] 0.0, 128
  %1461 = vxpose.xlu0.b32.cont [14/16] 0.0, 128
  %1462 = vxpose.xlu0.b32.cont [15/16] 0.0, 128
  %1463 = vxpose.xlu0.b32.end [16/16] 0.0, 128
  %v1464 = vpop.trf.xlu0
  %v1465 = vpop.trf.xlu0
  %v1466 = vpop.trf.xlu0
  %v1467 = vpop.trf.xlu0
  %v1468 = vpop.trf.xlu0
  %v1469 = vpop.trf.xlu0
  %v1470 = vpop.trf.xlu0
  %v1471 = vpop.trf.xlu0
  %v1472 = vpop.trf.xlu0
  %v1473 = vpop.trf.xlu0
  %v1474 = vpop.trf.xlu0
  %v1475 = vpop.trf.xlu0
  %v1476 = vpop.trf.xlu0
  %v1477 = vpop.trf.xlu0
  %v1478 = vpop.trf.xlu0
  %v1479 = vpop.trf.xlu0
  %s1480 = scalar_lea.vmem %s2, 24
  %1481 = vst.msk [vmem:[%s1480] sm:$0xff] %vm88, %v1464
  %v1482 = vld [vmem:[%s245] sm:$0xff]
  %1483 = vxpose.xlu0.b32.start [1/16] %v1482, 128
  %1484 = vxpose.xlu0.b32.cont [2/16] 0.0, 128
  %1485 = vxpose.xlu0.b32.cont [3/16] 0.0, 128
  %1486 = vxpose.xlu0.b32.cont [4/16] 0.0, 128
  %1487 = vxpose.xlu0.b32.cont [5/16] 0.0, 128
  %1488 = vxpose.xlu0.b32.cont [6/16] 0.0, 128
  %1489 = vxpose.xlu0.b32.cont [7/16] 0.0, 128
  %1490 = vxpose.xlu0.b32.cont [8/16] 0.0, 128
  %1491 = vxpose.xlu0.b32.cont [9/16] 0.0, 128
  %1492 = vxpose.xlu0.b32.cont [10/16] 0.0, 128
  %1493 = vxpose.xlu0.b32.cont [11/16] 0.0, 128
  %1494 = vxpose.xlu0.b32.cont [12/16] 0.0, 128
  %1495 = vxpose.xlu0.b32.cont [13/16] 0.0, 128
  %1496 = vxpose.xlu0.b32.cont [14/16] 0.0, 128
  %1497 = vxpose.xlu0.b32.cont [15/16] 0.0, 128
  %1498 = vxpose.xlu0.b32.end [16/16] 0.0, 128
  %v1499 = vpop.trf.xlu0
  %v1500 = vpop.trf.xlu0
  %v1501 = vpop.trf.xlu0
  %v1502 = vpop.trf.xlu0
  %v1503 = vpop.trf.xlu0
  %v1504 = vpop.trf.xlu0
  %v1505 = vpop.trf.xlu0
  %v1506 = vpop.trf.xlu0
  %v1507 = vpop.trf.xlu0
  %v1508 = vpop.trf.xlu0
  %v1509 = vpop.trf.xlu0
  %v1510 = vpop.trf.xlu0
  %v1511 = vpop.trf.xlu0
  %v1512 = vpop.trf.xlu0
  %v1513 = vpop.trf.xlu0
  %v1514 = vpop.trf.xlu0
  %s1515 = scalar_lea.vmem %s2, 32
  %1516 = vst.msk [vmem:[%s1515] sm:$0xff] %vm88, %v1499
  %v1517 = vld [vmem:[%s247] sm:$0xff]
  %1518 = vxpose.xlu0.b32.start [1/16] %v1517, 128
  %1519 = vxpose.xlu0.b32.cont [2/16] 0.0, 128
  %1520 = vxpose.xlu0.b32.cont [3/16] 0.0, 128
  %1521 = vxpose.xlu0.b32.cont [4/16] 0.0, 128
  %1522 = vxpose.xlu0.b32.cont [5/16] 0.0, 128
  %1523 = vxpose.xlu0.b32.cont [6/16] 0.0, 128
  %1524 = vxpose.xlu0.b32.cont [7/16] 0.0, 128
  %1525 = vxpose.xlu0.b32.cont [8/16] 0.0, 128
  %1526 = vxpose.xlu0.b32.cont [9/16] 0.0, 128
  %1527 = vxpose.xlu0.b32.cont [10/16] 0.0, 128
  %1528 = vxpose.xlu0.b32.cont [11/16] 0.0, 128
  %1529 = vxpose.xlu0.b32.cont [12/16] 0.0, 128
  %1530 = vxpose.xlu0.b32.cont [13/16] 0.0, 128
  %1531 = vxpose.xlu0.b32.cont [14/16] 0.0, 128
  %1532 = vxpose.xlu0.b32.cont [15/16] 0.0, 128
  %1533 = vxpose.xlu0.b32.end [16/16] 0.0, 128
  %v1534 = vpop.trf.xlu0
  %v1535 = vpop.trf.xlu0
  %v1536 = vpop.trf.xlu0
  %v1537 = vpop.trf.xlu0
  %v1538 = vpop.trf.xlu0
  %v1539 = vpop.trf.xlu0
  %v1540 = vpop.trf.xlu0
  %v1541 = vpop.trf.xlu0
  %v1542 = vpop.trf.xlu0
  %v1543 = vpop.trf.xlu0
  %v1544 = vpop.trf.xlu0
  %v1545 = vpop.trf.xlu0
  %v1546 = vpop.trf.xlu0
  %v1547 = vpop.trf.xlu0
  %v1548 = vpop.trf.xlu0
  %v1549 = vpop.trf.xlu0
  %s1550 = scalar_lea.vmem %s2, 40
  %1551 = vst.msk [vmem:[%s1550] sm:$0xff] %vm88, %v1534
  %v1552 = vld [vmem:[%s249] sm:$0xff]
  %1553 = vxpose.xlu0.b32.start [1/16] %v1552, 128
  %1554 = vxpose.xlu0.b32.cont [2/16] 0.0, 128
  %1555 = vxpose.xlu0.b32.cont [3/16] 0.0, 128
  %1556 = vxpose.xlu0.b32.cont [4/16] 0.0, 128
  %1557 = vxpose.xlu0.b32.cont [5/16] 0.0, 128
  %1558 = vxpose.xlu0.b32.cont [6/16] 0.0, 128
  %1559 = vxpose.xlu0.b32.cont [7/16] 0.0, 128
  %1560 = vxpose.xlu0.b32.cont [8/16] 0.0, 128
  %1561 = vxpose.xlu0.b32.cont [9/16] 0.0, 128
  %1562 = vxpose.xlu0.b32.cont [10/16] 0.0, 128
  %1563 = vxpose.xlu0.b32.cont [11/16] 0.0, 128
  %1564 = vxpose.xlu0.b32.cont [12/16] 0.0, 128
  %1565 = vxpose.xlu0.b32.cont [13/16] 0.0, 128
  %1566 = vxpose.xlu0.b32.cont [14/16] 0.0, 128
  %1567 = vxpose.xlu0.b32.cont [15/16] 0.0, 128
  %1568 = vxpose.xlu0.b32.end [16/16] 0.0, 128
  %v1569 = vpop.trf.xlu0
  %v1570 = vpop.trf.xlu0
  %v1571 = vpop.trf.xlu0
  %v1572 = vpop.trf.xlu0
  %v1573 = vpop.trf.xlu0
  %v1574 = vpop.trf.xlu0
  %v1575 = vpop.trf.xlu0
  %v1576 = vpop.trf.xlu0
  %v1577 = vpop.trf.xlu0
  %v1578 = vpop.trf.xlu0
  %v1579 = vpop.trf.xlu0
  %v1580 = vpop.trf.xlu0
  %v1581 = vpop.trf.xlu0
  %v1582 = vpop.trf.xlu0
  %v1583 = vpop.trf.xlu0
  %v1584 = vpop.trf.xlu0
  %s1585 = scalar_lea.vmem %s2, 56
  %1586 = vst.msk [vmem:[%s1585] sm:$0xff] %vm88, %v1569
  %v1587 = vld [vmem:[%s251] sm:$0xff]
  %1588 = vxpose.xlu0.b32.start [1/16] %v1587, 128
  %1589 = vxpose.xlu0.b32.cont [2/16] 0.0, 128
  %1590 = vxpose.xlu0.b32.cont [3/16] 0.0, 128
  %1591 = vxpose.xlu0.b32.cont [4/16] 0.0, 128
  %1592 = vxpose.xlu0.b32.cont [5/16] 0.0, 128
  %1593 = vxpose.xlu0.b32.cont [6/16] 0.0, 128
  %1594 = vxpose.xlu0.b32.cont [7/16] 0.0, 128
  %1595 = vxpose.xlu0.b32.cont [8/16] 0.0, 128
  %1596 = vxpose.xlu0.b32.cont [9/16] 0.0, 128
  %1597 = vxpose.xlu0.b32.cont [10/16] 0.0, 128
  %1598 = vxpose.xlu0.b32.cont [11/16] 0.0, 128
  %1599 = vxpose.xlu0.b32.cont [12/16] 0.0, 128
  %1600 = vxpose.xlu0.b32.cont [13/16] 0.0, 128
  %1601 = vxpose.xlu0.b32.cont [14/16] 0.0, 128
  %1602 = vxpose.xlu0.b32.cont [15/16] 0.0, 128
  %1603 = vxpose.xlu0.b32.end [16/16] 0.0, 128
  %v1604 = vpop.trf.xlu0
  %v1605 = vpop.trf.xlu0
  %v1606 = vpop.trf.xlu0
  %v1607 = vpop.trf.xlu0
  %v1608 = vpop.trf.xlu0
  %v1609 = vpop.trf.xlu0
  %v1610 = vpop.trf.xlu0
  %v1611 = vpop.trf.xlu0
  %v1612 = vpop.trf.xlu0
  %v1613 = vpop.trf.xlu0
  %v1614 = vpop.trf.xlu0
  %v1615 = vpop.trf.xlu0
  %v1616 = vpop.trf.xlu0
  %v1617 = vpop.trf.xlu0
  %v1618 = vpop.trf.xlu0
  %v1619 = vpop.trf.xlu0
  %s1620 = scalar_lea.vmem %s2, 64
  %1621 = vst.msk [vmem:[%s1620] sm:$0xff] %vm88, %v1604
  // Predicated region
  $region10: #{tpu_custom_call.1} parent=0 // pred_check
    _
  $region11: #{tpu_custom_call.1} parent=0 // pred_check_branch
    %1623 = sbr.rel (0) target = $region13
  $region12: #{tpu_custom_call.1} parent=0 // pred_region
    _
  $region13: #{tpu_custom_call.1} parent=0 // pred_fallthru
    _
  // Predicated region
  $region14: #{tpu_custom_call.1} parent=0 // pred_check
    _
  $region15: #{tpu_custom_call.1} parent=0 // pred_check_branch
    %1625 = sbr.rel (0) target = $region17
  $region16: #{tpu_custom_call.1} parent=0 // pred_region
    _
  $region17: #{tpu_custom_call.1} parent=0 // pred_fallthru
    _
  %1626 = vsyncmov [#allocation4]
  %s1627 = vpop.sfrf %1626
  %p1628 = scmp.eq.s32.totalorder %s1627, 0
  %p1629 = pneg %p1628
  %1631 = shalt.err (%p1629)

</llo_original>
